<compile_context>
chip_gen: v6e
topology: v6e:2x2x1
jax: 0.10.0
libtpu: 0.0.40
codegen_flags: <defaults>
</compile_context>

<pallas_src>
import math
from functools import partial

import jax
import jax.numpy as jnp
from jax import lax
from jax.experimental import pallas as pl
from jax.experimental.pallas import tpu as pltpu

EPS = 1e-5
LANE = 128


def _round_up(x, m):
    return (x + m - 1) // m * m


def _conv_groups(x_ref, w_ref, *, Mext, Wp2):
    """Conv outputs for the four 2x2-pool parities, row-stacked: (4*Mext, Cout_p) f32.

    x_ref : (1, 2, 2, Rrow, Cin_p) bf16  space-to-depth input for one image
            (parity ph, pw; flattened coarse grid rows; padded channels)
    w_ref : (9*Cin_p, Cout_p)      bf16  conv weight, taps (dy,dx,cin) flattened on K
    """
    lhs_groups = []
    for a in range(2):            # output-row parity (pool position in h)
        for b in range(2):        # output-col parity (pool position in w)
            taps = []
            for dy in range(3):
                for dx in range(3):
                    ph, oy = (a + dy) % 2, (a + dy) // 2
                    pw, ox = (b + dx) % 2, (b + dx) // 2
                    off = oy * Wp2 + ox
                    taps.append(x_ref[0, ph, pw, pl.ds(off, Mext), :])
            # im2col rows built in VMEM (no HBM duplication): (Mext, 9*Cin_p)
            lhs_groups.append(jnp.concatenate(taps, axis=-1))
    lhs = jnp.concatenate(lhs_groups, axis=0)                    # (4*Mext, 9*Cin_p)
    # single fused MXU matmul per image per pass
    return jnp.dot(lhs, w_ref[...], preferred_element_type=jnp.float32)


def _stats_kernel(x_ref, w_ref, stat_ref, *, Mext, Wp2, Wo):
    """Pass 1: per-channel sum and sum-of-squares of the conv output (batch stats)."""
    acc = _conv_groups(x_ref, w_ref, Mext=Mext, Wp2=Wp2)         # (4*Mext, Cout_p) f32
    r = lax.broadcasted_iota(jnp.int32, (4 * Mext, 1), 0)
    valid = (r % Wp2) < Wo                                       # mask the halo coarse column
    accv = jnp.where(valid, acc, 0.0)
    s = jnp.sum(accv, axis=0, keepdims=True)                     # (1, Cout_p)
    sq = jnp.sum(accv * accv, axis=0, keepdims=True)             # (1, Cout_p)
    upd = jnp.concatenate([s, sq], axis=0)                       # (2, Cout_p)

    @pl.when(pl.program_id(0) == 0)
    def _():
        stat_ref[...] = jnp.zeros_like(stat_ref)

    stat_ref[...] += upd


def _apply_kernel(x_ref, w_ref, ss_ref, o_ref, *, Mext, Wp2):
    """Pass 2: conv + folded BN affine + ReLU + 2x2 max pool (4-way parity max)."""
    acc = _conv_groups(x_ref, w_ref, Mext=Mext, Wp2=Wp2)         # (4*Mext, Cout_p) f32
    scale = ss_ref[0:1, :]                                       # (1, Cout_p)
    shift = ss_ref[1:2, :]
    z = jnp.maximum(acc * scale + shift, 0.0)                    # BN affine + ReLU
    p = jnp.maximum(jnp.maximum(z[0 * Mext:1 * Mext], z[1 * Mext:2 * Mext]),
                    jnp.maximum(z[2 * Mext:3 * Mext], z[3 * Mext:4 * Mext]))
    o_ref[0] = p                                                 # (Mext, Cout_p), lane-dense


def conv_block_cbrp(x_nchw, w_hwio, bias, gamma, beta):
    """Forward pass of ConvBlock_CBRP.

    The conv bias is exactly cancelled by train-mode BatchNorm's mean subtraction,
    so it is not used by the kernels.
    """
    del bias
    N, Cin, H, W = x_nchw.shape
    KH, KW, _, Cout = w_hwio.shape
    assert (KH, KW) == (3, 3) and H % 2 == 0 and W % 2 == 0
    Ho, Wo = H // 2, W // 2
    Hp2, Wp2 = Ho + 1, Wo + 1            # coarse (stride-2) grid of the padded image
    Mext = Ho * Wp2                      # extended rows per pool parity (1 halo col each row)
    Cin_p = _round_up(Cin, LANE)
    Cout_p = _round_up(Cout, LANE)
    Rrow = _round_up(Hp2 * Wp2 + 1, 8)   # flattened coarse rows (+1 halo row), sublane aligned

    # ---- wrapper-side layout (one pass of pure data movement over x, ~1x volume) ----
    x = jnp.transpose(x_nchw, (0, 2, 3, 1)).astype(jnp.float32)              # NHWC
    x = jnp.pad(x, ((0, 0), (1, 1), (1, 1), (0, Cin_p - Cin)))               # pad=1 + lane pad
    xs = x.reshape(N, Hp2, 2, Wp2, 2, Cin_p).transpose(0, 2, 4, 1, 3, 5)     # pixel-unshuffle
    xs = xs.reshape(N, 2, 2, Hp2 * Wp2, Cin_p)
    xs = jnp.pad(xs, ((0, 0), (0, 0), (0, 0), (0, Rrow - Hp2 * Wp2), (0, 0)))
    xs = xs.astype(jnp.bfloat16)

    wf = jnp.pad(w_hwio.astype(jnp.float32),
                 ((0, 0), (0, 0), (0, Cin_p - Cin), (0, Cout_p - Cout)))
    wf = wf.reshape(9 * Cin_p, Cout_p).astype(jnp.bfloat16)

    x_spec = pl.BlockSpec((1, 2, 2, Rrow, Cin_p), lambda n: (n, 0, 0, 0, 0))
    w_spec = pl.BlockSpec((9 * Cin_p, Cout_p), lambda n: (0, 0))

    # ---- pass 1: batch statistics (sum / sumsq), accumulated across the N grid axis ----
    stats = pl.pallas_call(
        partial(_stats_kernel, Mext=Mext, Wp2=Wp2, Wo=Wo),
        out_shape=jax.ShapeDtypeStruct((2, Cout_p), jnp.float32),
        grid=(N,),
        in_specs=[x_spec, w_spec],
        out_specs=pl.BlockSpec((2, Cout_p), lambda n: (0, 0)),
        compiler_params=pltpu.CompilerParams(
            dimension_semantics=("arbitrary",),
            vmem_limit_bytes=48 * 1024 * 1024),
    )(xs, wf)

    # ---- tiny per-channel BN folding in XLA: scale = gamma*rsqrt(var+eps), shift = beta - mean*scale
    count = float(N * H * W)
    mean = stats[0] / count
    var = jnp.maximum(stats[1] / count - mean * mean, 0.0)       # biased variance (BN train mode)
    inv = lax.rsqrt(var + EPS)
    gamma_p = jnp.pad(gamma.astype(jnp.float32), (0, Cout_p - Cout))
    beta_p = jnp.pad(beta.astype(jnp.float32), (0, Cout_p - Cout))
    scale = gamma_p * inv
    shift = beta_p - mean * scale
    ss = jnp.stack([scale, shift], axis=0)                       # (2, Cout_p) f32

    # ---- pass 2: conv (recomputed) + BN affine + ReLU + max pool, parallel over images ----
    out_ext = pl.pallas_call(
        partial(_apply_kernel, Mext=Mext, Wp2=Wp2),
        out_shape=jax.ShapeDtypeStruct((N, Mext, Cout_p), jnp.float32),
        grid=(N,),
        in_specs=[x_spec, w_spec, pl.BlockSpec((2, Cout_p), lambda n: (0, 0))],
        out_specs=pl.BlockSpec((1, Mext, Cout_p), lambda n: (n, 0, 0)),
        compiler_params=pltpu.CompilerParams(
            dimension_semantics=("parallel",),
            vmem_limit_bytes=48 * 1024 * 1024),
    )(xs, wf, ss)

    # strip halo column and padded channels, back to NCHW
    out = out_ext.reshape(N, Ho, Wp2, Cout_p)[:, :, :Wo, :Cout]
    return jnp.transpose(out, (0, 3, 1, 2))


def ref_forward(x_nchw, w_hwio, bias, gamma, beta):
    """Pure-JAX reference mirroring the PyTorch module (BN in training mode)."""
    w_oihw = jnp.transpose(w_hwio, (3, 2, 0, 1))
    y = lax.conv_general_dilated(
        x_nchw.astype(jnp.float32), w_oihw.astype(jnp.float32),
        window_strides=(1, 1), padding=((1, 1), (1, 1)),
        dimension_numbers=("NCHW", "OIHW", "NCHW"),
    ) + bias[None, :, None, None]
    mean = y.mean(axis=(0, 2, 3), keepdims=True)
    var = y.var(axis=(0, 2, 3), keepdims=True)
    y = (y - mean) / jnp.sqrt(var + EPS) * gamma[None, :, None, None] + beta[None, :, None, None]
    y = jnp.maximum(y, 0.0)
    N, C, H, W = y.shape
    return y.reshape(N, C, H // 2, 2, W // 2, 2).max(axis=(3, 5))


if __name__ == "__main__":
    in_dim, hid_dim = 4, 8
    N, H, W = 2, 16, 16

    key = jax.random.PRNGKey(0)
    kx, kw, kb = jax.random.split(key, 3)

    x = jax.random.normal(kx, (N, in_dim, H, W), dtype=jnp.float32)

    # layerInitializer: conv weight ~ N(0, sqrt(2/(k*k*out_ch))); BN gamma=1, beta=0.
    n = 3 * 3 * hid_dim
    w_hwio = jax.random.normal(kw, (3, 3, in_dim, hid_dim), dtype=jnp.float32) * math.sqrt(2.0 / n)
    fan_in = in_dim * 9
    bias = jax.random.uniform(kb, (hid_dim,), dtype=jnp.float32,
                              minval=-1.0 / math.sqrt(fan_in), maxval=1.0 / math.sqrt(fan_in))
    gamma = jnp.ones((hid_dim,), jnp.float32)
    beta = jnp.zeros((hid_dim,), jnp.float32)

    out = jax.block_until_ready(conv_block_cbrp(x, w_hwio, bias, gamma, beta))
    ref = ref_forward(x, w_hwio, bias, gamma, beta)

    assert out.shape == (N, hid_dim, H // 2, W // 2), out.shape
    max_err = float(jnp.max(jnp.abs(out - ref)))
    # bf16 matmul operands (f32 accumulation) -> loosened tolerance vs pure-f32 reference
    assert jnp.allclose(out, ref, atol=5e-2, rtol=5e-2), max_err

    print("KERNEL_OK")
</pallas_src>

<mosaic_0001>
module attributes {stable_mosaic.version = 11 : i64} {
  func.func @_stats_kernel(%arg0: i32, %arg1: memref<1x2x2x88x128xbf16, #tpu.memory_space<vmem>>, %arg2: memref<1152x128xbf16, #tpu.memory_space<vmem>>, %arg3: memref<2x128xf32, #tpu.memory_space<vmem>>) attributes {dimension_semantics = [#tpu.dimension_semantics<arbitrary>], iteration_bounds = array<i64: 2>, scalar_prefetch = 0 : i64, scratch_operands = 0 : i64, tpu.core_type = #tpu.core_type<tc>, window_params = [{transform_indices = @transform_0, window_bounds = array<i64: 1, 2, 2, 88, 128>}, {pipeline_mode = #tpu.pipeline_mode<synchronous>, transform_indices = @transform_1, window_bounds = array<i64: 1152, 128>}, {pipeline_mode = #tpu.pipeline_mode<synchronous>, transform_indices = @transform_2, window_bounds = array<i64: 2, 128>}]} {
    %c0 = arith.constant 0 : index
    %c0_0 = arith.constant 0 : index
    %c0_1 = arith.constant 0 : index
    %c0_2 = arith.constant 0 : index
    %c0_3 = arith.constant 0 : index
    %0 = vector.load %arg1[%c0, %c0_0, %c0_1, %c0_2, %c0_3] : memref<1x2x2x88x128xbf16, #tpu.memory_space<vmem>>, vector<1x1x1x72x128xbf16>
    %1 = vector.shape_cast %0 : vector<1x1x1x72x128xbf16> to vector<72x128xbf16>
    %c0_4 = arith.constant 0 : index
    %c0_5 = arith.constant 0 : index
    %c1 = arith.constant 1 : index
    %c0_6 = arith.constant 0 : index
    %c0_7 = arith.constant 0 : index
    %2 = vector.load %arg1[%c0_4, %c0_5, %c1, %c0_6, %c0_7] : memref<1x2x2x88x128xbf16, #tpu.memory_space<vmem>>, vector<1x1x1x72x128xbf16>
    %3 = vector.shape_cast %2 : vector<1x1x1x72x128xbf16> to vector<72x128xbf16>
    %c0_8 = arith.constant 0 : index
    %c0_9 = arith.constant 0 : index
    %c0_10 = arith.constant 0 : index
    %c1_11 = arith.constant 1 : index
    %c0_12 = arith.constant 0 : index
    %4 = vector.load %arg1[%c0_8, %c0_9, %c0_10, %c1_11, %c0_12] : memref<1x2x2x88x128xbf16, #tpu.memory_space<vmem>>, vector<1x1x1x72x128xbf16>
    %5 = vector.shape_cast %4 : vector<1x1x1x72x128xbf16> to vector<72x128xbf16>
    %c0_13 = arith.constant 0 : index
    %c1_14 = arith.constant 1 : index
    %c0_15 = arith.constant 0 : index
    %c0_16 = arith.constant 0 : index
    %c0_17 = arith.constant 0 : index
    %6 = vector.load %arg1[%c0_13, %c1_14, %c0_15, %c0_16, %c0_17] : memref<1x2x2x88x128xbf16, #tpu.memory_space<vmem>>, vector<1x1x1x72x128xbf16>
    %7 = vector.shape_cast %6 : vector<1x1x1x72x128xbf16> to vector<72x128xbf16>
    %c0_18 = arith.constant 0 : index
    %c1_19 = arith.constant 1 : index
    %c1_20 = arith.constant 1 : index
    %c0_21 = arith.constant 0 : index
    %c0_22 = arith.constant 0 : index
    %8 = vector.load %arg1[%c0_18, %c1_19, %c1_20, %c0_21, %c0_22] : memref<1x2x2x88x128xbf16, #tpu.memory_space<vmem>>, vector<1x1x1x72x128xbf16>
    %9 = vector.shape_cast %8 : vector<1x1x1x72x128xbf16> to vector<72x128xbf16>
    %c0_23 = arith.constant 0 : index
    %c1_24 = arith.constant 1 : index
    %c0_25 = arith.constant 0 : index
    %c1_26 = arith.constant 1 : index
    %c0_27 = arith.constant 0 : index
    %10 = vector.load %arg1[%c0_23, %c1_24, %c0_25, %c1_26, %c0_27] : memref<1x2x2x88x128xbf16, #tpu.memory_space<vmem>>, vector<1x1x1x72x128xbf16>
    %11 = vector.shape_cast %10 : vector<1x1x1x72x128xbf16> to vector<72x128xbf16>
    %c0_28 = arith.constant 0 : index
    %c0_29 = arith.constant 0 : index
    %c0_30 = arith.constant 0 : index
    %c9 = arith.constant 9 : index
    %c0_31 = arith.constant 0 : index
    %12 = vector.load %arg1[%c0_28, %c0_29, %c0_30, %c9, %c0_31] : memref<1x2x2x88x128xbf16, #tpu.memory_space<vmem>>, vector<1x1x1x72x128xbf16>
    %13 = vector.shape_cast %12 : vector<1x1x1x72x128xbf16> to vector<72x128xbf16>
    %c0_32 = arith.constant 0 : index
    %c0_33 = arith.constant 0 : index
    %c1_34 = arith.constant 1 : index
    %c9_35 = arith.constant 9 : index
    %c0_36 = arith.constant 0 : index
    %14 = vector.load %arg1[%c0_32, %c0_33, %c1_34, %c9_35, %c0_36] : memref<1x2x2x88x128xbf16, #tpu.memory_space<vmem>>, vector<1x1x1x72x128xbf16>
    %15 = vector.shape_cast %14 : vector<1x1x1x72x128xbf16> to vector<72x128xbf16>
    %c0_37 = arith.constant 0 : index
    %c0_38 = arith.constant 0 : index
    %c0_39 = arith.constant 0 : index
    %c10 = arith.constant 10 : index
    %c0_40 = arith.constant 0 : index
    %16 = vector.load %arg1[%c0_37, %c0_38, %c0_39, %c10, %c0_40] : memref<1x2x2x88x128xbf16, #tpu.memory_space<vmem>>, vector<1x1x1x72x128xbf16>
    %17 = vector.shape_cast %16 : vector<1x1x1x72x128xbf16> to vector<72x128xbf16>
    %18 = tpu.concatenate %1, %3, %5, %7, %9, %11, %13, %15, %17 in 1 : vector<72x128xbf16>, vector<72x128xbf16>, vector<72x128xbf16>, vector<72x128xbf16>, vector<72x128xbf16>, vector<72x128xbf16>, vector<72x128xbf16>, vector<72x128xbf16>, vector<72x128xbf16> -> vector<72x1152xbf16>
    %c0_41 = arith.constant 0 : index
    %c0_42 = arith.constant 0 : index
    %c1_43 = arith.constant 1 : index
    %c0_44 = arith.constant 0 : index
    %c0_45 = arith.constant 0 : index
    %19 = vector.load %arg1[%c0_41, %c0_42, %c1_43, %c0_44, %c0_45] : memref<1x2x2x88x128xbf16, #tpu.memory_space<vmem>>, vector<1x1x1x72x128xbf16>
    %20 = vector.shape_cast %19 : vector<1x1x1x72x128xbf16> to vector<72x128xbf16>
    %c0_46 = arith.constant 0 : index
    %c0_47 = arith.constant 0 : index
    %c0_48 = arith.constant 0 : index
    %c1_49 = arith.constant 1 : index
    %c0_50 = arith.constant 0 : index
    %21 = vector.load %arg1[%c0_46, %c0_47, %c0_48, %c1_49, %c0_50] : memref<1x2x2x88x128xbf16, #tpu.memory_space<vmem>>, vector<1x1x1x72x128xbf16>
    %22 = vector.shape_cast %21 : vector<1x1x1x72x128xbf16> to vector<72x128xbf16>
    %c0_51 = arith.constant 0 : index
    %c0_52 = arith.constant 0 : index
    %c1_53 = arith.constant 1 : index
    %c1_54 = arith.constant 1 : index
    %c0_55 = arith.constant 0 : index
    %23 = vector.load %arg1[%c0_51, %c0_52, %c1_53, %c1_54, %c0_55] : memref<1x2x2x88x128xbf16, #tpu.memory_space<vmem>>, vector<1x1x1x72x128xbf16>
    %24 = vector.shape_cast %23 : vector<1x1x1x72x128xbf16> to vector<72x128xbf16>
    %c0_56 = arith.constant 0 : index
    %c1_57 = arith.constant 1 : index
    %c1_58 = arith.constant 1 : index
    %c0_59 = arith.constant 0 : index
    %c0_60 = arith.constant 0 : index
    %25 = vector.load %arg1[%c0_56, %c1_57, %c1_58, %c0_59, %c0_60] : memref<1x2x2x88x128xbf16, #tpu.memory_space<vmem>>, vector<1x1x1x72x128xbf16>
    %26 = vector.shape_cast %25 : vector<1x1x1x72x128xbf16> to vector<72x128xbf16>
    %c0_61 = arith.constant 0 : index
    %c1_62 = arith.constant 1 : index
    %c0_63 = arith.constant 0 : index
    %c1_64 = arith.constant 1 : index
    %c0_65 = arith.constant 0 : index
    %27 = vector.load %arg1[%c0_61, %c1_62, %c0_63, %c1_64, %c0_65] : memref<1x2x2x88x128xbf16, #tpu.memory_space<vmem>>, vector<1x1x1x72x128xbf16>
    %28 = vector.shape_cast %27 : vector<1x1x1x72x128xbf16> to vector<72x128xbf16>
    %c0_66 = arith.constant 0 : index
    %c1_67 = arith.constant 1 : index
    %c1_68 = arith.constant 1 : index
    %c1_69 = arith.constant 1 : index
    %c0_70 = arith.constant 0 : index
    %29 = vector.load %arg1[%c0_66, %c1_67, %c1_68, %c1_69, %c0_70] : memref<1x2x2x88x128xbf16, #tpu.memory_space<vmem>>, vector<1x1x1x72x128xbf16>
    %30 = vector.shape_cast %29 : vector<1x1x1x72x128xbf16> to vector<72x128xbf16>
    %c0_71 = arith.constant 0 : index
    %c0_72 = arith.constant 0 : index
    %c1_73 = arith.constant 1 : index
    %c9_74 = arith.constant 9 : index
    %c0_75 = arith.constant 0 : index
    %31 = vector.load %arg1[%c0_71, %c0_72, %c1_73, %c9_74, %c0_75] : memref<1x2x2x88x128xbf16, #tpu.memory_space<vmem>>, vector<1x1x1x72x128xbf16>
    %32 = vector.shape_cast %31 : vector<1x1x1x72x128xbf16> to vector<72x128xbf16>
    %c0_76 = arith.constant 0 : index
    %c0_77 = arith.constant 0 : index
    %c0_78 = arith.constant 0 : index
    %c10_79 = arith.constant 10 : index
    %c0_80 = arith.constant 0 : index
    %33 = vector.load %arg1[%c0_76, %c0_77, %c0_78, %c10_79, %c0_80] : memref<1x2x2x88x128xbf16, #tpu.memory_space<vmem>>, vector<1x1x1x72x128xbf16>
    %34 = vector.shape_cast %33 : vector<1x1x1x72x128xbf16> to vector<72x128xbf16>
    %c0_81 = arith.constant 0 : index
    %c0_82 = arith.constant 0 : index
    %c1_83 = arith.constant 1 : index
    %c10_84 = arith.constant 10 : index
    %c0_85 = arith.constant 0 : index
    %35 = vector.load %arg1[%c0_81, %c0_82, %c1_83, %c10_84, %c0_85] : memref<1x2x2x88x128xbf16, #tpu.memory_space<vmem>>, vector<1x1x1x72x128xbf16>
    %36 = vector.shape_cast %35 : vector<1x1x1x72x128xbf16> to vector<72x128xbf16>
    %37 = tpu.concatenate %20, %22, %24, %26, %28, %30, %32, %34, %36 in 1 : vector<72x128xbf16>, vector<72x128xbf16>, vector<72x128xbf16>, vector<72x128xbf16>, vector<72x128xbf16>, vector<72x128xbf16>, vector<72x128xbf16>, vector<72x128xbf16>, vector<72x128xbf16> -> vector<72x1152xbf16>
    %c0_86 = arith.constant 0 : index
    %c1_87 = arith.constant 1 : index
    %c0_88 = arith.constant 0 : index
    %c0_89 = arith.constant 0 : index
    %c0_90 = arith.constant 0 : index
    %38 = vector.load %arg1[%c0_86, %c1_87, %c0_88, %c0_89, %c0_90] : memref<1x2x2x88x128xbf16, #tpu.memory_space<vmem>>, vector<1x1x1x72x128xbf16>
    %39 = vector.shape_cast %38 : vector<1x1x1x72x128xbf16> to vector<72x128xbf16>
    %c0_91 = arith.constant 0 : index
    %c1_92 = arith.constant 1 : index
    %c1_93 = arith.constant 1 : index
    %c0_94 = arith.constant 0 : index
    %c0_95 = arith.constant 0 : index
    %40 = vector.load %arg1[%c0_91, %c1_92, %c1_93, %c0_94, %c0_95] : memref<1x2x2x88x128xbf16, #tpu.memory_space<vmem>>, vector<1x1x1x72x128xbf16>
    %41 = vector.shape_cast %40 : vector<1x1x1x72x128xbf16> to vector<72x128xbf16>
    %c0_96 = arith.constant 0 : index
    %c1_97 = arith.constant 1 : index
    %c0_98 = arith.constant 0 : index
    %c1_99 = arith.constant 1 : index
    %c0_100 = arith.constant 0 : index
    %42 = vector.load %arg1[%c0_96, %c1_97, %c0_98, %c1_99, %c0_100] : memref<1x2x2x88x128xbf16, #tpu.memory_space<vmem>>, vector<1x1x1x72x128xbf16>
    %43 = vector.shape_cast %42 : vector<1x1x1x72x128xbf16> to vector<72x128xbf16>
    %c0_101 = arith.constant 0 : index
    %c0_102 = arith.constant 0 : index
    %c0_103 = arith.constant 0 : index
    %c9_104 = arith.constant 9 : index
    %c0_105 = arith.constant 0 : index
    %44 = vector.load %arg1[%c0_101, %c0_102, %c0_103, %c9_104, %c0_105] : memref<1x2x2x88x128xbf16, #tpu.memory_space<vmem>>, vector<1x1x1x72x128xbf16>
    %45 = vector.shape_cast %44 : vector<1x1x1x72x128xbf16> to vector<72x128xbf16>
    %c0_106 = arith.constant 0 : index
    %c0_107 = arith.constant 0 : index
    %c1_108 = arith.constant 1 : index
    %c9_109 = arith.constant 9 : index
    %c0_110 = arith.constant 0 : index
    %46 = vector.load %arg1[%c0_106, %c0_107, %c1_108, %c9_109, %c0_110] : memref<1x2x2x88x128xbf16, #tpu.memory_space<vmem>>, vector<1x1x1x72x128xbf16>
    %47 = vector.shape_cast %46 : vector<1x1x1x72x128xbf16> to vector<72x128xbf16>
    %c0_111 = arith.constant 0 : index
    %c0_112 = arith.constant 0 : index
    %c0_113 = arith.constant 0 : index
    %c10_114 = arith.constant 10 : index
    %c0_115 = arith.constant 0 : index
    %48 = vector.load %arg1[%c0_111, %c0_112, %c0_113, %c10_114, %c0_115] : memref<1x2x2x88x128xbf16, #tpu.memory_space<vmem>>, vector<1x1x1x72x128xbf16>
    %49 = vector.shape_cast %48 : vector<1x1x1x72x128xbf16> to vector<72x128xbf16>
    %c0_116 = arith.constant 0 : index
    %c1_117 = arith.constant 1 : index
    %c0_118 = arith.constant 0 : index
    %c9_119 = arith.constant 9 : index
    %c0_120 = arith.constant 0 : index
    %50 = vector.load %arg1[%c0_116, %c1_117, %c0_118, %c9_119, %c0_120] : memref<1x2x2x88x128xbf16, #tpu.memory_space<vmem>>, vector<1x1x1x72x128xbf16>
    %51 = vector.shape_cast %50 : vector<1x1x1x72x128xbf16> to vector<72x128xbf16>
    %c0_121 = arith.constant 0 : index
    %c1_122 = arith.constant 1 : index
    %c1_123 = arith.constant 1 : index
    %c9_124 = arith.constant 9 : index
    %c0_125 = arith.constant 0 : index
    %52 = vector.load %arg1[%c0_121, %c1_122, %c1_123, %c9_124, %c0_125] : memref<1x2x2x88x128xbf16, #tpu.memory_space<vmem>>, vector<1x1x1x72x128xbf16>
    %53 = vector.shape_cast %52 : vector<1x1x1x72x128xbf16> to vector<72x128xbf16>
    %c0_126 = arith.constant 0 : index
    %c1_127 = arith.constant 1 : index
    %c0_128 = arith.constant 0 : index
    %c10_129 = arith.constant 10 : index
    %c0_130 = arith.constant 0 : index
    %54 = vector.load %arg1[%c0_126, %c1_127, %c0_128, %c10_129, %c0_130] : memref<1x2x2x88x128xbf16, #tpu.memory_space<vmem>>, vector<1x1x1x72x128xbf16>
    %55 = vector.shape_cast %54 : vector<1x1x1x72x128xbf16> to vector<72x128xbf16>
    %56 = tpu.concatenate %39, %41, %43, %45, %47, %49, %51, %53, %55 in 1 : vector<72x128xbf16>, vector<72x128xbf16>, vector<72x128xbf16>, vector<72x128xbf16>, vector<72x128xbf16>, vector<72x128xbf16>, vector<72x128xbf16>, vector<72x128xbf16>, vector<72x128xbf16> -> vector<72x1152xbf16>
    %c0_131 = arith.constant 0 : index
    %c1_132 = arith.constant 1 : index
    %c1_133 = arith.constant 1 : index
    %c0_134 = arith.constant 0 : index
    %c0_135 = arith.constant 0 : index
    %57 = vector.load %arg1[%c0_131, %c1_132, %c1_133, %c0_134, %c0_135] : memref<1x2x2x88x128xbf16, #tpu.memory_space<vmem>>, vector<1x1x1x72x128xbf16>
    %58 = vector.shape_cast %57 : vector<1x1x1x72x128xbf16> to vector<72x128xbf16>
    %c0_136 = arith.constant 0 : index
    %c1_137 = arith.constant 1 : index
    %c0_138 = arith.constant 0 : index
    %c1_139 = arith.constant 1 : index
    %c0_140 = arith.constant 0 : index
    %59 = vector.load %arg1[%c0_136, %c1_137, %c0_138, %c1_139, %c0_140] : memref<1x2x2x88x128xbf16, #tpu.memory_space<vmem>>, vector<1x1x1x72x128xbf16>
    %60 = vector.shape_cast %59 : vector<1x1x1x72x128xbf16> to vector<72x128xbf16>
    %c0_141 = arith.constant 0 : index
    %c1_142 = arith.constant 1 : index
    %c1_143 = arith.constant 1 : index
    %c1_144 = arith.constant 1 : index
    %c0_145 = arith.constant 0 : index
    %61 = vector.load %arg1[%c0_141, %c1_142, %c1_143, %c1_144, %c0_145] : memref<1x2x2x88x128xbf16, #tpu.memory_space<vmem>>, vector<1x1x1x72x128xbf16>
    %62 = vector.shape_cast %61 : vector<1x1x1x72x128xbf16> to vector<72x128xbf16>
    %c0_146 = arith.constant 0 : index
    %c0_147 = arith.constant 0 : index
    %c1_148 = arith.constant 1 : index
    %c9_149 = arith.constant 9 : index
    %c0_150 = arith.constant 0 : index
    %63 = vector.load %arg1[%c0_146, %c0_147, %c1_148, %c9_149, %c0_150] : memref<1x2x2x88x128xbf16, #tpu.memory_space<vmem>>, vector<1x1x1x72x128xbf16>
    %64 = vector.shape_cast %63 : vector<1x1x1x72x128xbf16> to vector<72x128xbf16>
    %c0_151 = arith.constant 0 : index
    %c0_152 = arith.constant 0 : index
    %c0_153 = arith.constant 0 : index
    %c10_154 = arith.constant 10 : index
    %c0_155 = arith.constant 0 : index
    %65 = vector.load %arg1[%c0_151, %c0_152, %c0_153, %c10_154, %c0_155] : memref<1x2x2x88x128xbf16, #tpu.memory_space<vmem>>, vector<1x1x1x72x128xbf16>
    %66 = vector.shape_cast %65 : vector<1x1x1x72x128xbf16> to vector<72x128xbf16>
    %c0_156 = arith.constant 0 : index
    %c0_157 = arith.constant 0 : index
    %c1_158 = arith.constant 1 : index
    %c10_159 = arith.constant 10 : index
    %c0_160 = arith.constant 0 : index
    %67 = vector.load %arg1[%c0_156, %c0_157, %c1_158, %c10_159, %c0_160] : memref<1x2x2x88x128xbf16, #tpu.memory_space<vmem>>, vector<1x1x1x72x128xbf16>
    %68 = vector.shape_cast %67 : vector<1x1x1x72x128xbf16> to vector<72x128xbf16>
    %c0_161 = arith.constant 0 : index
    %c1_162 = arith.constant 1 : index
    %c1_163 = arith.constant 1 : index
    %c9_164 = arith.constant 9 : index
    %c0_165 = arith.constant 0 : index
    %69 = vector.load %arg1[%c0_161, %c1_162, %c1_163, %c9_164, %c0_165] : memref<1x2x2x88x128xbf16, #tpu.memory_space<vmem>>, vector<1x1x1x72x128xbf16>
    %70 = vector.shape_cast %69 : vector<1x1x1x72x128xbf16> to vector<72x128xbf16>
    %c0_166 = arith.constant 0 : index
    %c1_167 = arith.constant 1 : index
    %c0_168 = arith.constant 0 : index
    %c10_169 = arith.constant 10 : index
    %c0_170 = arith.constant 0 : index
    %71 = vector.load %arg1[%c0_166, %c1_167, %c0_168, %c10_169, %c0_170] : memref<1x2x2x88x128xbf16, #tpu.memory_space<vmem>>, vector<1x1x1x72x128xbf16>
    %72 = vector.shape_cast %71 : vector<1x1x1x72x128xbf16> to vector<72x128xbf16>
    %c0_171 = arith.constant 0 : index
    %c1_172 = arith.constant 1 : index
    %c1_173 = arith.constant 1 : index
    %c10_174 = arith.constant 10 : index
    %c0_175 = arith.constant 0 : index
    %73 = vector.load %arg1[%c0_171, %c1_172, %c1_173, %c10_174, %c0_175] : memref<1x2x2x88x128xbf16, #tpu.memory_space<vmem>>, vector<1x1x1x72x128xbf16>
    %74 = vector.shape_cast %73 : vector<1x1x1x72x128xbf16> to vector<72x128xbf16>
    %75 = tpu.concatenate %58, %60, %62, %64, %66, %68, %70, %72, %74 in 1 : vector<72x128xbf16>, vector<72x128xbf16>, vector<72x128xbf16>, vector<72x128xbf16>, vector<72x128xbf16>, vector<72x128xbf16>, vector<72x128xbf16>, vector<72x128xbf16>, vector<72x128xbf16> -> vector<72x1152xbf16>
    %76 = tpu.concatenate %18, %37, %56, %75 in 0 : vector<72x1152xbf16>, vector<72x1152xbf16>, vector<72x1152xbf16>, vector<72x1152xbf16> -> vector<288x1152xbf16>
    %c0_176 = arith.constant 0 : index
    %c0_177 = arith.constant 0 : index
    %77 = vector.load %arg2[%c0_176, %c0_177] : memref<1152x128xbf16, #tpu.memory_space<vmem>>, vector<1152x128xbf16>
    %cst = arith.constant dense<0.000000e+00> : vector<288x128xf32>
    %78 = tpu.matmul %76, %77, %cst {dimension_numbers = #tpu.dot_dimension_numbers<[1], [0], [0], [1], [0, 0, 1, 1], [], []>} : vector<288x1152xbf16>, vector<1152x128xbf16>, vector<288x128xf32> -> vector<288x128xf32>
    %79 = tpu.iota {dimensions = array<i32: 0>} : vector<288x1xi32>
    %c9_i32 = arith.constant 9 : i32
    %c0_i32 = arith.constant 0 : i32
    %80 = arith.cmpi eq, %c9_i32, %c0_i32 : i32
    %c1_i32 = arith.constant 1 : i32
    %81 = arith.select %80, %c1_i32, %c9_i32 : i32
    %82 = vector.broadcast %81 : i32 to vector<288x1xi32>
    %83 = arith.remsi %79, %82 : vector<288x1xi32>
    %c0_i32_178 = arith.constant 0 : i32
    %84 = vector.broadcast %c0_i32_178 : i32 to vector<288x1xi32>
    %85 = arith.cmpi ne, %83, %84 : vector<288x1xi32>
    %c0_i32_179 = arith.constant 0 : i32
    %86 = vector.broadcast %c0_i32_179 : i32 to vector<288x1xi32>
    %87 = arith.cmpi slt, %83, %86 : vector<288x1xi32>
    %c0_i32_180 = arith.constant 0 : i32
    %88 = arith.cmpi slt, %81, %c0_i32_180 : i32
    %89 = vector.broadcast %88 : i1 to vector<288x1xi1>
    %90 = vector.broadcast %89 : vector<288x1xi1> to vector<288x1xi1>
    %91 = arith.xori %87, %90 : vector<288x1xi1>
    %92 = arith.andi %91, %85 : vector<288x1xi1>
    %93 = vector.broadcast %81 : i32 to vector<288x1xi32>
    %94 = arith.addi %83, %93 : vector<288x1xi32>
    %95 = arith.select %92, %94, %83 : vector<288x1xi1>, vector<288x1xi32>
    %c8_i32 = arith.constant 8 : i32
    %96 = vector.broadcast %c8_i32 : i32 to vector<288x1xi32>
    %97 = arith.cmpi slt, %95, %96 : vector<288x1xi32>
    %cst_181 = arith.constant 0.000000e+00 : f32
    %98 = vector.shape_cast %97 : vector<288x1xi1> to vector<288x1xi1>
    %99 = vector.broadcast %98 : vector<288x1xi1> to vector<288x128xi1>
    %100 = vector.broadcast %cst_181 : f32 to vector<288x128xf32>
    %101 = arith.select %99, %78, %100 : vector<288x128xi1>, vector<288x128xf32>
    %cst_182 = arith.constant dense<0.000000e+00> : vector<128xf32>
    %102 = vector.multi_reduction <add>, %101, %cst_182 [0] : vector<288x128xf32> to vector<128xf32>
    %103 = vector.shape_cast %102 : vector<128xf32> to vector<1x128xf32>
    %104 = arith.mulf %101, %101 : vector<288x128xf32>
    %cst_183 = arith.constant dense<0.000000e+00> : vector<128xf32>
    %105 = vector.multi_reduction <add>, %104, %cst_183 [0] : vector<288x128xf32> to vector<128xf32>
    %106 = vector.shape_cast %105 : vector<128xf32> to vector<1x128xf32>
    %107 = tpu.concatenate %103, %106 in 0 : vector<1x128xf32>, vector<1x128xf32> -> vector<2x128xf32>
    %c0_i32_184 = arith.constant 0 : i32
    %108 = arith.cmpi eq, %arg0, %c0_i32_184 : i32
    %109 = arith.extui %108 : i1 to i32
    %c0_i32_185 = arith.constant 0 : i32
    %110 = arith.cmpi ne, %109, %c0_i32_185 : i32
    scf.if %110 {
      %cst_190 = arith.constant 0.000000e+00 : f32
      %114 = vector.broadcast %cst_190 : f32 to vector<2x128xf32>
      %c0_191 = arith.constant 0 : index
      %c0_192 = arith.constant 0 : index
      %115 = vector.load %arg3[%c0_191, %c0_192] : memref<2x128xf32, #tpu.memory_space<vmem>>, vector<2x128xf32>
      tpu.vector_store %arg3[%c0_191, %c0_192], %114 {strides = array<i32>} : memref<2x128xf32, #tpu.memory_space<vmem>>, vector<2x128xf32>,
    } else {
    }
    %c0_186 = arith.constant 0 : index
    %c0_187 = arith.constant 0 : index
    %111 = vector.load %arg3[%c0_186, %c0_187] : memref<2x128xf32, #tpu.memory_space<vmem>>, vector<2x128xf32>
    %112 = arith.addf %111, %107 : vector<2x128xf32>
    %c0_188 = arith.constant 0 : index
    %c0_189 = arith.constant 0 : index
    %113 = vector.load %arg3[%c0_188, %c0_189] : memref<2x128xf32, #tpu.memory_space<vmem>>, vector<2x128xf32>
    tpu.vector_store %arg3[%c0_188, %c0_189], %112 {strides = array<i32>} : memref<2x128xf32, #tpu.memory_space<vmem>>, vector<2x128xf32>,
    return
  }
  func.func @transform_0(%arg0: i32) -> (i32, i32, i32, i32, i32) {
    %c0_i32 = arith.constant 0 : i32
    %c0_i32_0 = arith.constant 0 : i32
    %c0_i32_1 = arith.constant 0 : i32
    %c0_i32_2 = arith.constant 0 : i32
    %c0_i32_3 = arith.constant 0 : i32
    return %arg0, %c0_i32, %c0_i32_0, %c0_i32_1, %c0_i32_2 : i32, i32, i32, i32, i32
  }
  func.func @transform_1(%arg0: i32) -> (i32, i32) {
    %c0_i32 = arith.constant 0 : i32
    %c0_i32_0 = arith.constant 0 : i32
    %c0_i32_1 = arith.constant 0 : i32
    return %c0_i32, %c0_i32_0 : i32, i32
  }
  func.func @transform_2(%arg0: i32) -> (i32, i32) {
    %c0_i32 = arith.constant 0 : i32
    %c0_i32_0 = arith.constant 0 : i32
    %c0_i32_1 = arith.constant 0 : i32
    return %c0_i32, %c0_i32_0 : i32, i32
  }
}

</mosaic_0001>

<llo_original>
// kernel: tpu_custom_call.1
$region0: #{tpu_custom_call.1}
  #allocation0 [shape = 'u32[]', space=smem, size = 0x4, offset = 0x4, fixed_abs, tag = 'smem constant byte address 0x4 - core index']
  #allocation1 [shape = 'u32[144,128]{1,0:T(1,128)}', space=vmem, size = 0x12000, scoped, tag = 'internal scratch']
  %s0 = inlined_call_operand.hbm [shape: bf16[2,2,2,88,128], index: 0, kind: input, shape index: {}]
  %s1 = inlined_call_operand.hbm [shape: bf16[1152,128], index: 1, kind: input, shape index: {}]
  %s2 = inlined_call_operand.hbm [shape: f32[2,128], index: 2, kind: output, shape index: {}]
  %s3 = sld [smem:[#allocation0]]
  $region53: #{tpu_custom_call.1} parent=0
    _
  %s5 = ssub.s32 1, %s3
  %s6 = scalar_select 0, %s5, %s3
  $region1: #{tpu_custom_call.1} parent=0
    #allocation2 [shape = 'u8[180224]{0}', space=vmem, size = 0x2c000, scoped, tag = 'input window, operand 0']
    #allocation3 [shape = 's32[2]{0}', space=sflag, size = 0x8, scoped, tag = 'scoped memory for tpu_custom_call.1']
    #allocation4 [shape = 's32[2]{0}', space=sflag, size = 0x8, scoped, tag = 'scoped memory for tpu_custom_call.1']
    #allocation5 [shape = 'u8[294912]{0}', space=vmem, size = 0x48000, scoped, tag = 'input window, operand 1, single buffered']
    #allocation6 [shape = 's32[1]{0}', space=sflag, size = 0x4, scoped, tag = 'scoped memory for tpu_custom_call.1']
    #allocation7 [shape = 'u8[1024]{0}', space=vmem, size = 0x400, scoped, tag = 'output window, operand 0, single buffered']
    %7 = vsyncpa [#allocation3], 0
    %s8 = scalar_lea.sflag [#allocation3], 1
    %9 = vsyncpa %s8, 0
    %10 = vsyncpa [#allocation6], 0
    %11 = vsyncpa [#allocation4], 0
    loop: start=0, step=1, limit=4
    $region2: #{tpu_custom_call.1} parent=1 // loop_pre_header
      _
    $region3: #{tpu_custom_call.1} parent=1 // loop_header
      %s13 = sphi 0, %s17
      %p14 = scmp.ge.s32.totalorder %s13, 4
      %s23 = sphi 0, %s25
      %s26 = sphi 0, %s23
      %s27 = sphi 0, %s26
      %s43 = sphi 0, %s27
      %s47 = sphi 0, %s47
      %s49 = sphi 0, %s47
      %s50 = sphi 0, %s49
      %s64 = sphi 0, %s50
      %s68 = sphi 0, %s68
      %s70 = sphi 0, %s68
      %s71 = sphi 0, %s70
      %s85 = sphi 0, %s71
    $region4: #{tpu_custom_call.1} parent=1 // loop_header_branch
      %16 = sbr.rel (%p14) target = $region8
    $region5: #{tpu_custom_call.1} parent=1 // loop_body
      %s18 = ssub.s32 %s13, 1
      %s19 = ssub.s32 %s13, 2
      %s20 = sadd.s32 %s13, 1
      %s21 = ssub.s32 %s13, %s20
      %p22 = scmp.eq.s32.totalorder %s21, 0
      %s24 = sadd.s32 %s23, 1
      %s25 = scalar_select %p22, %s23, %s24
      %p28 = pneg %p22
      %p29 = scmp.eq.s32.totalorder %s13, 1
      %p30 = por %p28, %p29
      %p31 = scmp.ne.s32.totalorder %s23, %s26
      %p32 = scmp.eq.s32.totalorder %s13, 0
      %p33 = por %p31, %p32
      %p34 = scmp.ne.s32.totalorder %s23, %s26
      %p35 = scmp.eq.s32.totalorder %s18, 1
      %p36 = por %p34, %p35
      %p37 = scmp.ne.s32.totalorder %s26, %s27
      %p38 = scmp.eq.s32.totalorder %s18, 0
      %p39 = por %p37, %p38
      %p40 = scmp.ne.s32.totalorder %s26, %s27
      %p41 = scmp.eq.s32.totalorder %s19, 1
      %p42 = por %p40, %p41
      %p44 = scmp.ne.s32.totalorder %s27, %s43
      %p45 = scmp.eq.s32.totalorder %s19, 0
      %p46 = por %p44, %p45
      %s48 = sadd.s32 %s47, 1
      %p51 = scmp.eq.s32.totalorder %s13, 1
      %p52 = scmp.ne.s32.totalorder %s47, %s49
      %p53 = scmp.eq.s32.totalorder %s13, 0
      %p54 = por %p52, %p53
      %p55 = scmp.ne.s32.totalorder %s47, %s49
      %p56 = scmp.eq.s32.totalorder %s18, 1
      %p57 = por %p55, %p56
      %p58 = scmp.ne.s32.totalorder %s49, %s50
      %p59 = scmp.eq.s32.totalorder %s18, 0
      %p60 = por %p58, %p59
      %p61 = scmp.ne.s32.totalorder %s49, %s50
      %p62 = scmp.eq.s32.totalorder %s19, 1
      %p63 = por %p61, %p62
      %p65 = scmp.ne.s32.totalorder %s50, %s64
      %p66 = scmp.eq.s32.totalorder %s19, 0
      %p67 = por %p65, %p66
      %s69 = sadd.s32 %s68, 1
      %p72 = scmp.eq.s32.totalorder %s13, 1
      %p73 = scmp.ne.s32.totalorder %s68, %s70
      %p74 = scmp.eq.s32.totalorder %s13, 0
      %p75 = por %p73, %p74
      %p76 = scmp.ne.s32.totalorder %s68, %s70
      %p77 = scmp.eq.s32.totalorder %s18, 1
      %p78 = por %p76, %p77
      %p79 = scmp.ne.s32.totalorder %s70, %s71
      %p80 = scmp.eq.s32.totalorder %s18, 0
      %p81 = por %p79, %p80
      %p82 = scmp.ne.s32.totalorder %s70, %s71
      %p83 = scmp.eq.s32.totalorder %s19, 1
      %p84 = por %p82, %p83
      %p86 = scmp.ne.s32.totalorder %s71, %s85
      %p87 = scmp.eq.s32.totalorder %s19, 0
      %p88 = por %p86, %p87
      %p89 = scmp.le.s32.totalorder 1, %s13
      %p90 = scmp.lt.s32.totalorder %s13, 3
      %p91 = pnand %p89, %p90
      %p92 = pneg %p91
      // Predicated region
      $region9: #{tpu_custom_call.1} parent=5 // pred_check
        _
      $region10: #{tpu_custom_call.1} parent=5 // pred_check_branch
        %94 = sbr.rel (%p91) target = $region12
      $region11: #{tpu_custom_call.1} parent=5 // pred_region
        %s95 = ssub.s32 %s13, 1
        // Predicated region
        $region13: #{tpu_custom_call.1} parent=11 // pred_check
          %p96 = pneg %p60
        $region14: #{tpu_custom_call.1} parent=11 // pred_check_branch
          %98 = sbr.rel (%p96) target = $region16
        $region15: #{tpu_custom_call.1} parent=11 // pred_region
          %s100 = ssub.s32 9216, 9216
          %101 = vsyncadd [#allocation6], %s100
          %s102 = sshll.u32 [#allocation5], 4
          %s103 = int_to_ptr.vmem [resolvable:$true] %s102
          %108 = dma.hbm_to_vmem [thread:$0]  %s1, 9216, %s103, [#allocation6], 64, 64, 4
        $region16: #{tpu_custom_call.1} parent=11 // pred_fallthru
          _
      $region12: #{tpu_custom_call.1} parent=5 // pred_fallthru
        _
      %p109 = scmp.lt.s32.totalorder %s13, 2
      // Predicated region
      $region17: #{tpu_custom_call.1} parent=5 // pred_check
        %p110 = pneg %p109
      $region18: #{tpu_custom_call.1} parent=5 // pred_check_branch
        %112 = sbr.rel (%p110) target = $region20
      $region19: #{tpu_custom_call.1} parent=5 // pred_region
        // Predicated region
        $region21: #{tpu_custom_call.1} parent=19 // pred_check
          %p113 = pneg %p33
        $region22: #{tpu_custom_call.1} parent=19 // pred_check_branch
          %115 = sbr.rel (%p113) target = $region24
        $region23: #{tpu_custom_call.1} parent=19 // pred_region
          %s116 = sand.u32 %s23, 1
          %s117 = scalar_lea.sflag [#allocation3], %s116
          %s118 = sand.u32 %s23, 1
          %s119 = smul.addr %s118, 176
          %s120 = scalar_lea.vmem [#allocation2], %s119
          %s122 = ssub.s32 2816, 2816
          %123 = vsyncadd %s117, %s122
          %s124 = smul.addr %s13, 44
          %s125 = smul.addr %s124, 64
          %s126 = scalar_lea.hbm %s0, %s125
          %s127 = sshll.u32 %s120, 4
          %s128 = int_to_ptr.vmem [resolvable:$true] %s127
          %133 = dma.hbm_to_vmem [thread:$0]  %s126, 2816, %s128, %s117, 64, 64, 4
        $region24: #{tpu_custom_call.1} parent=19 // pred_fallthru
          _
      $region20: #{tpu_custom_call.1} parent=5 // pred_fallthru
        _
      %p134 = scmp.le.s32.totalorder 1, %s13
      %p135 = scmp.lt.s32.totalorder %s13, 3
      %p136 = pnand %p134, %p135
      %p137 = pneg %p136
      // Predicated region
      $region25: #{tpu_custom_call.1} parent=5 // pred_check
        _
      $region26: #{tpu_custom_call.1} parent=5 // pred_check_branch
        %139 = sbr.rel (%p136) target = $region28
      $region27: #{tpu_custom_call.1} parent=5 // pred_region
        %s140 = ssub.s32 %s13, 1
        %s141 = sand.u32 %s26, 1
        %s142 = scalar_lea.sflag [#allocation3], %s141
        %s143 = sand.u32 %s26, 1
        %s144 = smul.addr %s143, 176
        %s145 = scalar_lea.vmem [#allocation2], %s144
        // Predicated region
        $region29: #{tpu_custom_call.1} parent=27 // pred_check
          %p146 = pneg %p39
        $region30: #{tpu_custom_call.1} parent=27 // pred_check_branch
          %148 = sbr.rel (%p146) target = $region32
        $region31: #{tpu_custom_call.1} parent=27 // pred_region
          %149 = dma.done %s142, 2816
        $region32: #{tpu_custom_call.1} parent=27 // pred_fallthru
          _
        // Predicated region
        $region33: #{tpu_custom_call.1} parent=27 // pred_check
          %p150 = pneg %p60
        $region34: #{tpu_custom_call.1} parent=27 // pred_check_branch
          %152 = sbr.rel (%p150) target = $region36
        $region35: #{tpu_custom_call.1} parent=27 // pred_region
          %153 = dma.done [#allocation6], 9216
        $region36: #{tpu_custom_call.1} parent=27 // pred_fallthru
          _
        %s154 = sand.u32 %s26, 1
        %s155 = scalar_lea.sflag [#allocation3], %s154
        %s156 = sand.u32 %s26, 1
        %s157 = smul.addr %s156, 176
        %s158 = scalar_lea.vmem [#allocation2], %s157
        %p159 = pneg %p39
        %p160 = pneg %p36
        %p161 = pneg %p60
        %p162 = pneg %p57
        %p163 = pneg %p81
        %p164 = pneg %p78
        %v166 = vld [vmem:[%s145] sm:$0xf]
        %v167 = vld [vmem:[%s145 + $0x4] sm:$0xf]
        %v168 = vld [vmem:[%s145 + $0x8] sm:$0xf]
        %v169 = vld [vmem:[%s145 + $0xc] sm:$0xf]
        %v170 = vld [vmem:[%s145 + $0x10] sm:$0xf]
        %v171 = vld [vmem:[%s145 + $0x14] sm:$0xf]
        %v172 = vld [vmem:[%s145 + $0x18] sm:$0xf]
        %v173 = vld [vmem:[%s145 + $0x1c] sm:$0xf]
        %v174 = vld [vmem:[%s145 + $0x20] sm:$0xf]
        %s175 = scalar_lea.vmem %s145, 44 [#allocation2]
        %v176 = vld [vmem:[%s175] sm:$0xf]
        %v177 = vld [vmem:[%s175 + $0x4] sm:$0xf]
        %v178 = vld [vmem:[%s175 + $0x8] sm:$0xf]
        %v179 = vld [vmem:[%s175 + $0xc] sm:$0xf]
        %v180 = vld [vmem:[%s175 + $0x10] sm:$0xf]
        %v181 = vld [vmem:[%s175 + $0x14] sm:$0xf]
        %v182 = vld [vmem:[%s175 + $0x18] sm:$0xf]
        %v183 = vld [vmem:[%s175 + $0x1c] sm:$0xf]
        %v184 = vld [vmem:[%s175 + $0x20] sm:$0xf]
        %v185 = vld [vmem:[%s145 + $0x24] sm:$0x1]
        %s186 = scalar_lea.vmem %s145, 88 [#allocation2]
        %v187 = vld [vmem:[%s186] sm:$0xf]
        %v188 = vld [vmem:[%s186 + $0x4] sm:$0xf]
        %v189 = vld [vmem:[%s186 + $0x8] sm:$0xf]
        %v190 = vld [vmem:[%s186 + $0xc] sm:$0xf]
        %v191 = vld [vmem:[%s186 + $0x10] sm:$0xf]
        %v192 = vld [vmem:[%s186 + $0x14] sm:$0xf]
        %v193 = vld [vmem:[%s186 + $0x18] sm:$0xf]
        %v194 = vld [vmem:[%s186 + $0x1c] sm:$0xf]
        %v195 = vld [vmem:[%s186 + $0x20] sm:$0xf]
        %s196 = scalar_lea.vmem %s145, 132 [#allocation2]
        %v197 = vld [vmem:[%s196] sm:$0xf]
        %v198 = vld [vmem:[%s196 + $0x4] sm:$0xf]
        %v199 = vld [vmem:[%s196 + $0x8] sm:$0xf]
        %v200 = vld [vmem:[%s196 + $0xc] sm:$0xf]
        %v201 = vld [vmem:[%s196 + $0x10] sm:$0xf]
        %v202 = vld [vmem:[%s196 + $0x14] sm:$0xf]
        %v203 = vld [vmem:[%s196 + $0x18] sm:$0xf]
        %v204 = vld [vmem:[%s196 + $0x1c] sm:$0xf]
        %v205 = vld [vmem:[%s196 + $0x20] sm:$0xf]
        %v206 = vld [vmem:[%s186 + $0x24] sm:$0x1]
        %v207 = vld [vmem:[%s145 + $0x24] sm:$0xf]
        %v208 = vld [vmem:[%s145 + $0x28] sm:$0x1]
        %v209 = vld [vmem:[%s175 + $0x24] sm:$0xf]
        %v210 = vld [vmem:[%s175 + $0x28] sm:$0x1]
        %v211 = vld [vmem:[%s145 + $0x4] sm:$0xe]
        %v221 = vunpack.c.l.b16 %v166
        %v222 = vunpack.c.l.b16 %v167
        %v223 = vunpack.c.l.b16 %v168
        %v224 = vunpack.c.l.b16 %v169
        %v225 = vunpack.c.l.b16 %v170
        %v226 = vunpack.c.l.b16 %v171
        %v227 = vunpack.c.l.b16 %v172
        %v228 = vunpack.c.l.b16 %v173
        %v229 = vunpack.c.l.b16 %v174
        %v230 = vpack.c.b16 %v222, %v221
        %v231 = vpack.c.b16 %v224, %v223
        %v232 = vpack.c.b16 %v226, %v225
        %v233 = vpack.c.b16 %v228, %v227
        %v234 = vpack.c.b16 %v229, %v229
        %v248 = vunpack.c.l.b16 %v176
        %v249 = vunpack.c.l.b16 %v177
        %v250 = vunpack.c.l.b16 %v178
        %v251 = vunpack.c.l.b16 %v179
        %v252 = vunpack.c.l.b16 %v180
        %v253 = vunpack.c.l.b16 %v181
        %v254 = vunpack.c.l.b16 %v182
        %v255 = vunpack.c.l.b16 %v183
        %v256 = vunpack.c.l.b16 %v184
        %v257 = vpack.c.b16 %v249, %v248
        %v258 = vpack.c.b16 %v251, %v250
        %v259 = vpack.c.b16 %v253, %v252
        %v260 = vpack.c.b16 %v255, %v254
        %v261 = vpack.c.b16 %v256, %v256
        %v267 = vunpack.c.l.b16 %v185
        %v268 = vpack.c.b16 %v267, %v229
        %vm269 = vsmask.f32 7424
        %v271 = vshrl.u32 %v230, 16
        %v273 = vshll.u32 %v230, 16
        %v275 = vrot.slane %v273, 1
        %v276 = vor.u32 %v271, %v275
        %v278 = vshll.u32 %v231, 16
        %v280 = vrot.slane %v278, 1
        %v281 = vsel %vm269, %v276, %v280
        %v282 = vshrl.u32 %v231, 16
        %v284 = vor.u32 %v282, %v280
        %v286 = vshll.u32 %v232, 16
        %v288 = vrot.slane %v286, 1
        %v289 = vsel %vm269, %v284, %v288
        %v290 = vshrl.u32 %v232, 16
        %v292 = vor.u32 %v290, %v288
        %v294 = vshll.u32 %v233, 16
        %v296 = vrot.slane %v294, 1
        %v297 = vsel %vm269, %v292, %v296
        %v298 = vshrl.u32 %v233, 16
        %v300 = vor.u32 %v298, %v296
        %v302 = vshll.u32 %v268, 16
        %v304 = vrot.slane %v302, 1
        %v305 = vsel %vm269, %v300, %v304
        %v306 = vshrl.u32 %v268, 16
        %v308 = vor.u32 %v306, %v304
        %v322 = vunpack.c.l.b16 %v187
        %v323 = vunpack.c.l.b16 %v188
        %v324 = vunpack.c.l.b16 %v189
        %v325 = vunpack.c.l.b16 %v190
        %v326 = vunpack.c.l.b16 %v191
        %v327 = vunpack.c.l.b16 %v192
        %v328 = vunpack.c.l.b16 %v193
        %v329 = vunpack.c.l.b16 %v194
        %v330 = vunpack.c.l.b16 %v195
        %v331 = vpack.c.b16 %v323, %v322
        %v332 = vpack.c.b16 %v325, %v324
        %v333 = vpack.c.b16 %v327, %v326
        %v334 = vpack.c.b16 %v329, %v328
        %v335 = vpack.c.b16 %v330, %v330
        %v349 = vunpack.c.l.b16 %v197
        %v350 = vunpack.c.l.b16 %v198
        %v351 = vunpack.c.l.b16 %v199
        %v352 = vunpack.c.l.b16 %v200
        %v353 = vunpack.c.l.b16 %v201
        %v354 = vunpack.c.l.b16 %v202
        %v355 = vunpack.c.l.b16 %v203
        %v356 = vunpack.c.l.b16 %v204
        %v357 = vunpack.c.l.b16 %v205
        %v358 = vpack.c.b16 %v350, %v349
        %v359 = vpack.c.b16 %v352, %v351
        %v360 = vpack.c.b16 %v354, %v353
        %v361 = vpack.c.b16 %v356, %v355
        %v362 = vpack.c.b16 %v357, %v357
        %v368 = vunpack.c.l.b16 %v206
        %v369 = vpack.c.b16 %v368, %v330
        %v371 = vshrl.u32 %v331, 16
        %v373 = vshll.u32 %v331, 16
        %v375 = vrot.slane %v373, 1
        %v376 = vor.u32 %v371, %v375
        %v378 = vshll.u32 %v332, 16
        %v380 = vrot.slane %v378, 1
        %v381 = vsel %vm269, %v376, %v380
        %v382 = vshrl.u32 %v332, 16
        %v384 = vor.u32 %v382, %v380
        %v386 = vshll.u32 %v333, 16
        %v388 = vrot.slane %v386, 1
        %v389 = vsel %vm269, %v384, %v388
        %v390 = vshrl.u32 %v333, 16
        %v392 = vor.u32 %v390, %v388
        %v394 = vshll.u32 %v334, 16
        %v396 = vrot.slane %v394, 1
        %v397 = vsel %vm269, %v392, %v396
        %v398 = vshrl.u32 %v334, 16
        %v400 = vor.u32 %v398, %v396
        %v402 = vshll.u32 %v369, 16
        %v404 = vrot.slane %v402, 1
        %v405 = vsel %vm269, %v400, %v404
        %v406 = vshrl.u32 %v369, 16
        %v408 = vor.u32 %v406, %v404
        %v415 = vunpack.c.l.b16 %v207
        %v416 = vunpack.c.l.b16 %v208
        %v417 = vpack.c.b16 %v223, %v222
        %v418 = vpack.c.b16 %v225, %v224
        %v419 = vpack.c.b16 %v227, %v226
        %v420 = vpack.c.b16 %v229, %v228
        %v421 = vpack.c.b16 %v416, %v415
        %v423 = vshrl.u32 %v417, 16
        %v425 = vshll.u32 %v417, 16
        %v427 = vrot.slane %v425, 1
        %v428 = vor.u32 %v423, %v427
        %v430 = vshll.u32 %v418, 16
        %v432 = vrot.slane %v430, 1
        %v433 = vsel %vm269, %v428, %v432
        %v434 = vshrl.u32 %v418, 16
        %v436 = vor.u32 %v434, %v432
        %v438 = vshll.u32 %v419, 16
        %v440 = vrot.slane %v438, 1
        %v441 = vsel %vm269, %v436, %v440
        %v442 = vshrl.u32 %v419, 16
        %v444 = vor.u32 %v442, %v440
        %v446 = vshll.u32 %v420, 16
        %v448 = vrot.slane %v446, 1
        %v449 = vsel %vm269, %v444, %v448
        %v450 = vshrl.u32 %v420, 16
        %v452 = vor.u32 %v450, %v448
        %v454 = vshll.u32 %v421, 16
        %v456 = vrot.slane %v454, 1
        %v457 = vsel %vm269, %v452, %v456
        %v458 = vshrl.u32 %v421, 16
        %v460 = vor.u32 %v458, %v456
        %v467 = vunpack.c.l.b16 %v209
        %v468 = vunpack.c.l.b16 %v210
        %v469 = vpack.c.b16 %v250, %v249
        %v470 = vpack.c.b16 %v252, %v251
        %v471 = vpack.c.b16 %v254, %v253
        %v472 = vpack.c.b16 %v256, %v255
        %v473 = vpack.c.b16 %v468, %v467
        %v475 = vshrl.u32 %v469, 16
        %v477 = vshll.u32 %v469, 16
        %v479 = vrot.slane %v477, 1
        %v480 = vor.u32 %v475, %v479
        %v482 = vshll.u32 %v470, 16
        %v484 = vrot.slane %v482, 1
        %v485 = vsel %vm269, %v480, %v484
        %v486 = vshrl.u32 %v470, 16
        %v488 = vor.u32 %v486, %v484
        %v490 = vshll.u32 %v471, 16
        %v492 = vrot.slane %v490, 1
        %v493 = vsel %vm269, %v488, %v492
        %v494 = vshrl.u32 %v471, 16
        %v496 = vor.u32 %v494, %v492
        %v498 = vshll.u32 %v472, 16
        %v500 = vrot.slane %v498, 1
        %v501 = vsel %vm269, %v496, %v500
        %v502 = vshrl.u32 %v472, 16
        %v504 = vor.u32 %v502, %v500
        %v506 = vshll.u32 %v473, 16
        %v508 = vrot.slane %v506, 1
        %v509 = vsel %vm269, %v504, %v508
        %v510 = vshrl.u32 %v473, 16
        %v512 = vor.u32 %v510, %v508
        %v518 = vunpack.c.l.b16 %v211
        %v519 = vpack.c.b16 %v223, %v518
        %vm520 = vcmask 1046528
        %v521 = vrot.slane %v519, 1
        %v522 = vrot.slane %v418, 1
        %v523 = vsel %vm520, %v521, %v522
        %v524 = vrot.slane %v419, 1
        %v525 = vsel %vm520, %v522, %v524
        %v526 = vrot.slane %v420, 1
        %v527 = vsel %vm520, %v524, %v526
        %v528 = vrot.slane %v421, 1
        %v529 = vsel %vm520, %v526, %v528
        %v534 = vld [vmem:[%s175 + $0x24] sm:$0x1]
        %v535 = vld [vmem:[%s196 + $0x24] sm:$0x1]
        %v536 = vld [vmem:[%s175 + $0x4] sm:$0xe]
        %v538 = vunpack.c.l.b16 %v534
        %v539 = vpack.c.b16 %v538, %v256
        %v541 = vshrl.u32 %v257, 16
        %v543 = vshll.u32 %v257, 16
        %v545 = vrot.slane %v543, 1
        %v546 = vor.u32 %v541, %v545
        %v548 = vshll.u32 %v258, 16
        %v550 = vrot.slane %v548, 1
        %v551 = vsel %vm269, %v546, %v550
        %v552 = vshrl.u32 %v258, 16
        %v554 = vor.u32 %v552, %v550
        %v556 = vshll.u32 %v259, 16
        %v558 = vrot.slane %v556, 1
        %v559 = vsel %vm269, %v554, %v558
        %v560 = vshrl.u32 %v259, 16
        %v562 = vor.u32 %v560, %v558
        %v564 = vshll.u32 %v260, 16
        %v566 = vrot.slane %v564, 1
        %v567 = vsel %vm269, %v562, %v566
        %v568 = vshrl.u32 %v260, 16
        %v570 = vor.u32 %v568, %v566
        %v572 = vshll.u32 %v539, 16
        %v574 = vrot.slane %v572, 1
        %v575 = vsel %vm269, %v570, %v574
        %v576 = vshrl.u32 %v539, 16
        %v578 = vor.u32 %v576, %v574
        %v580 = vunpack.c.l.b16 %v535
        %v581 = vpack.c.b16 %v580, %v357
        %v583 = vshrl.u32 %v358, 16
        %v585 = vshll.u32 %v358, 16
        %v587 = vrot.slane %v585, 1
        %v588 = vor.u32 %v583, %v587
        %v590 = vshll.u32 %v359, 16
        %v592 = vrot.slane %v590, 1
        %v593 = vsel %vm269, %v588, %v592
        %v594 = vshrl.u32 %v359, 16
        %v596 = vor.u32 %v594, %v592
        %v598 = vshll.u32 %v360, 16
        %v600 = vrot.slane %v598, 1
        %v601 = vsel %vm269, %v596, %v600
        %v602 = vshrl.u32 %v360, 16
        %v604 = vor.u32 %v602, %v600
        %v606 = vshll.u32 %v361, 16
        %v608 = vrot.slane %v606, 1
        %v609 = vsel %vm269, %v604, %v608
        %v610 = vshrl.u32 %v361, 16
        %v612 = vor.u32 %v610, %v608
        %v614 = vshll.u32 %v581, 16
        %v616 = vrot.slane %v614, 1
        %v617 = vsel %vm269, %v612, %v616
        %v618 = vshrl.u32 %v581, 16
        %v620 = vor.u32 %v618, %v616
        %v622 = vunpack.c.l.b16 %v536
        %v623 = vpack.c.b16 %v250, %v622
        %v624 = vrot.slane %v623, 1
        %v625 = vrot.slane %v470, 1
        %v626 = vsel %vm520, %v624, %v625
        %v627 = vrot.slane %v471, 1
        %v628 = vsel %vm520, %v625, %v627
        %v629 = vrot.slane %v472, 1
        %v630 = vsel %vm520, %v627, %v629
        %v631 = vrot.slane %v473, 1
        %v632 = vsel %vm520, %v629, %v631
        %v633 = vld [vmem:[%s186 + $0x24] sm:$0xf]
        %v634 = vld [vmem:[%s186 + $0x28] sm:$0x1]
        %v635 = vld [vmem:[%s196 + $0x24] sm:$0xf]
        %v636 = vld [vmem:[%s196 + $0x28] sm:$0x1]
        %v637 = vld [vmem:[%s186 + $0x4] sm:$0xe]
        %v640 = vunpack.c.l.b16 %v633
        %v641 = vunpack.c.l.b16 %v634
        %v642 = vpack.c.b16 %v324, %v323
        %v643 = vpack.c.b16 %v326, %v325
        %v644 = vpack.c.b16 %v328, %v327
        %v645 = vpack.c.b16 %v330, %v329
        %v646 = vpack.c.b16 %v641, %v640
        %v648 = vshrl.u32 %v642, 16
        %v650 = vshll.u32 %v642, 16
        %v652 = vrot.slane %v650, 1
        %v653 = vor.u32 %v648, %v652
        %v655 = vshll.u32 %v643, 16
        %v657 = vrot.slane %v655, 1
        %v658 = vsel %vm269, %v653, %v657
        %v659 = vshrl.u32 %v643, 16
        %v661 = vor.u32 %v659, %v657
        %v663 = vshll.u32 %v644, 16
        %v665 = vrot.slane %v663, 1
        %v666 = vsel %vm269, %v661, %v665
        %v667 = vshrl.u32 %v644, 16
        %v669 = vor.u32 %v667, %v665
        %v671 = vshll.u32 %v645, 16
        %v673 = vrot.slane %v671, 1
        %v674 = vsel %vm269, %v669, %v673
        %v675 = vshrl.u32 %v645, 16
        %v677 = vor.u32 %v675, %v673
        %v679 = vshll.u32 %v646, 16
        %v681 = vrot.slane %v679, 1
        %v682 = vsel %vm269, %v677, %v681
        %v683 = vshrl.u32 %v646, 16
        %v685 = vor.u32 %v683, %v681
        %v692 = vunpack.c.l.b16 %v635
        %v693 = vunpack.c.l.b16 %v636
        %v694 = vpack.c.b16 %v351, %v350
        %v695 = vpack.c.b16 %v353, %v352
        %v696 = vpack.c.b16 %v355, %v354
        %v697 = vpack.c.b16 %v357, %v356
        %v698 = vpack.c.b16 %v693, %v692
        %v700 = vshrl.u32 %v694, 16
        %v702 = vshll.u32 %v694, 16
        %v704 = vrot.slane %v702, 1
        %v705 = vor.u32 %v700, %v704
        %v707 = vshll.u32 %v695, 16
        %v709 = vrot.slane %v707, 1
        %v710 = vsel %vm269, %v705, %v709
        %v711 = vshrl.u32 %v695, 16
        %v713 = vor.u32 %v711, %v709
        %v715 = vshll.u32 %v696, 16
        %v717 = vrot.slane %v715, 1
        %v718 = vsel %vm269, %v713, %v717
        %v719 = vshrl.u32 %v696, 16
        %v721 = vor.u32 %v719, %v717
        %v723 = vshll.u32 %v697, 16
        %v725 = vrot.slane %v723, 1
        %v726 = vsel %vm269, %v721, %v725
        %v727 = vshrl.u32 %v697, 16
        %v729 = vor.u32 %v727, %v725
        %v731 = vshll.u32 %v698, 16
        %v733 = vrot.slane %v731, 1
        %v734 = vsel %vm269, %v729, %v733
        %v735 = vshrl.u32 %v698, 16
        %v737 = vor.u32 %v735, %v733
        %v743 = vunpack.c.l.b16 %v637
        %v744 = vpack.c.b16 %v324, %v743
        %v745 = vrot.slane %v744, 1
        %v746 = vrot.slane %v643, 1
        %v747 = vsel %vm520, %v745, %v746
        %v748 = vrot.slane %v644, 1
        %v749 = vsel %vm520, %v746, %v748
        %v750 = vrot.slane %v645, 1
        %v751 = vsel %vm520, %v748, %v750
        %v752 = vrot.slane %v646, 1
        %v753 = vsel %vm520, %v750, %v752
        %v758 = vld [vmem:[%s196 + $0x4] sm:$0xe]
        %v760 = vunpack.c.l.b16 %v758
        %v761 = vpack.c.b16 %v351, %v760
        %v762 = vrot.slane %v761, 1
        %v763 = vrot.slane %v695, 1
        %v764 = vsel %vm520, %v762, %v763
        %v765 = vrot.slane %v696, 1
        %v766 = vsel %vm520, %v763, %v765
        %v767 = vrot.slane %v697, 1
        %v768 = vsel %vm520, %v765, %v767
        %v769 = vrot.slane %v698, 1
        %v770 = vsel %vm520, %v767, %v769
        %vm771 = vcmask 1043456
        %v772 = vrot.slane %v257, 4
        %v773 = vrot.slane %v281, 4
        %v774 = vrot.slane %v551, 4
        %v775 = vrot.slane %v358, 4
        %v776 = vrot.slane %v381, 4
        %v777 = vrot.slane %v593, 4
        %v778 = vrot.slane %v485, 4
        %v779 = vrot.slane %v523, 4
        %v780 = vrot.slane %v626, 4
        %v781 = vrot.slane %v258, 4
        %v782 = vsel %vm771, %v772, %v781
        %v783 = vrot.slane %v289, 4
        %v784 = vsel %vm771, %v773, %v783
        %v785 = vrot.slane %v559, 4
        %v786 = vsel %vm771, %v774, %v785
        %v787 = vrot.slane %v359, 4
        %v788 = vsel %vm771, %v775, %v787
        %v789 = vrot.slane %v389, 4
        %v790 = vsel %vm771, %v776, %v789
        %v791 = vrot.slane %v601, 4
        %v792 = vsel %vm771, %v777, %v791
        %v793 = vrot.slane %v493, 4
        %v794 = vsel %vm771, %v778, %v793
        %v795 = vrot.slane %v525, 4
        %v796 = vsel %vm771, %v779, %v795
        %v797 = vrot.slane %v628, 4
        %v798 = vsel %vm771, %v780, %v797
        %v799 = vrot.slane %v259, 4
        %v800 = vsel %vm771, %v781, %v799
        %v801 = vrot.slane %v297, 4
        %v802 = vsel %vm771, %v783, %v801
        %v803 = vrot.slane %v567, 4
        %v804 = vsel %vm771, %v785, %v803
        %v805 = vrot.slane %v360, 4
        %v806 = vsel %vm771, %v787, %v805
        %v807 = vrot.slane %v397, 4
        %v808 = vsel %vm771, %v789, %v807
        %v809 = vrot.slane %v609, 4
        %v810 = vsel %vm771, %v791, %v809
        %v811 = vrot.slane %v501, 4
        %v812 = vsel %vm771, %v793, %v811
        %v813 = vrot.slane %v527, 4
        %v814 = vsel %vm771, %v795, %v813
        %v815 = vrot.slane %v630, 4
        %v816 = vsel %vm771, %v797, %v815
        %v817 = vrot.slane %v260, 4
        %v818 = vsel %vm771, %v799, %v817
        %v819 = vrot.slane %v305, 4
        %v820 = vsel %vm771, %v801, %v819
        %v821 = vrot.slane %v575, 4
        %v822 = vsel %vm771, %v803, %v821
        %v823 = vrot.slane %v361, 4
        %v824 = vsel %vm771, %v805, %v823
        %v825 = vrot.slane %v405, 4
        %v826 = vsel %vm771, %v807, %v825
        %v827 = vrot.slane %v617, 4
        %v828 = vsel %vm771, %v809, %v827
        %v829 = vrot.slane %v509, 4
        %v830 = vsel %vm771, %v811, %v829
        %v831 = vrot.slane %v529, 4
        %v832 = vsel %vm771, %v813, %v831
        %v833 = vrot.slane %v632, 4
        %v834 = vsel %vm771, %v815, %v833
        %v835 = vrot.slane %v261, 4
        %v836 = vsel %vm771, %v817, %v835
        %v837 = vrot.slane %v308, 4
        %v838 = vsel %vm771, %v819, %v837
        %v839 = vrot.slane %v578, 4
        %v840 = vsel %vm771, %v821, %v839
        %v841 = vrot.slane %v362, 4
        %v842 = vsel %vm771, %v823, %v841
        %v843 = vrot.slane %v408, 4
        %v844 = vsel %vm771, %v825, %v843
        %v845 = vrot.slane %v620, 4
        %v846 = vsel %vm771, %v827, %v845
        %v847 = vrot.slane %v512, 4
        %v848 = vsel %vm771, %v829, %v847
        %v849 = vrot.slane %v528, 4
        %v850 = vsel %vm771, %v831, %v849
        %v851 = vrot.slane %v631, 4
        %v852 = vsel %vm771, %v833, %v851
        %v889 = vrot.slane %v710, 4
        %v890 = vrot.slane %v747, 4
        %v891 = vrot.slane %v764, 4
        %v892 = vrot.slane %v718, 4
        %v893 = vsel %vm771, %v889, %v892
        %v894 = vrot.slane %v749, 4
        %v895 = vsel %vm771, %v890, %v894
        %v896 = vrot.slane %v766, 4
        %v897 = vsel %vm771, %v891, %v896
        %v898 = vrot.slane %v726, 4
        %v899 = vsel %vm771, %v892, %v898
        %v900 = vrot.slane %v751, 4
        %v901 = vsel %vm771, %v894, %v900
        %v902 = vrot.slane %v768, 4
        %v903 = vsel %vm771, %v896, %v902
        %v904 = vrot.slane %v734, 4
        %v905 = vsel %vm771, %v898, %v904
        %v906 = vrot.slane %v753, 4
        %v907 = vsel %vm771, %v900, %v906
        %v908 = vrot.slane %v770, 4
        %v909 = vsel %vm771, %v902, %v908
        %v910 = vrot.slane %v737, 4
        %v911 = vsel %vm771, %v904, %v910
        %v912 = vrot.slane %v752, 4
        %v913 = vsel %vm771, %v906, %v912
        %v914 = vrot.slane %v769, 4
        %v915 = vsel %vm771, %v908, %v914
        %vm928 = vcmask 1043456
        %v931 = vsel %vm928, %v234, %v772
        %v935 = vsel %vm928, %v261, %v773
        %v939 = vsel %vm928, %v308, %v774
        %v943 = vsel %vm928, %v335, %v775
        %v947 = vsel %vm928, %v362, %v776
        %v951 = vsel %vm928, %v408, %v777
        %v955 = vsel %vm928, %v460, %v778
        %v959 = vsel %vm928, %v512, %v779
        %v963 = vsel %vm928, %v528, %v780
        %v967 = vsel %vm928, %v685, %v889
        %v971 = vsel %vm928, %v737, %v890
        %v975 = vsel %vm928, %v752, %v891
        %v977 = vld [vmem:[#allocation5] sm:$0xf]
        %v978 = vld [vmem:[#allocation5 + $0x4] sm:$0xf]
        %v979 = vld [vmem:[#allocation5 + $0x8] sm:$0xf]
        %v980 = vld [vmem:[#allocation5 + $0xc] sm:$0xf]
        %v981 = vld [vmem:[#allocation5 + $0x10] sm:$0xf]
        %v982 = vld [vmem:[#allocation5 + $0x14] sm:$0xf]
        %v983 = vld [vmem:[#allocation5 + $0x18] sm:$0xf]
        %v984 = vld [vmem:[#allocation5 + $0x1c] sm:$0xf]
        %v985 = vld [vmem:[#allocation5 + $0x20] sm:$0xf]
        %v986 = vld [vmem:[#allocation5 + $0x24] sm:$0xf]
        %v987 = vld [vmem:[#allocation5 + $0x28] sm:$0xf]
        %v988 = vld [vmem:[#allocation5 + $0x2c] sm:$0xf]
        %v989 = vld [vmem:[#allocation5 + $0x30] sm:$0xf]
        %v990 = vld [vmem:[#allocation5 + $0x34] sm:$0xf]
        %v991 = vld [vmem:[#allocation5 + $0x38] sm:$0xf]
        %v992 = vld [vmem:[#allocation5 + $0x3c] sm:$0xf]
        %v993 = vld [vmem:[#allocation5 + $0x40] sm:$0xf]
        %v994 = vld [vmem:[#allocation5 + $0x44] sm:$0xf]
        %v995 = vld [vmem:[#allocation5 + $0x48] sm:$0xf]
        %v996 = vld [vmem:[#allocation5 + $0x4c] sm:$0xf]
        %v997 = vld [vmem:[#allocation5 + $0x50] sm:$0xf]
        %v998 = vld [vmem:[#allocation5 + $0x54] sm:$0xf]
        %v999 = vld [vmem:[#allocation5 + $0x58] sm:$0xf]
        %v1000 = vld [vmem:[#allocation5 + $0x5c] sm:$0xf]
        %v1001 = vld [vmem:[#allocation5 + $0x60] sm:$0xf]
        %v1002 = vld [vmem:[#allocation5 + $0x64] sm:$0xf]
        %v1003 = vld [vmem:[#allocation5 + $0x68] sm:$0xf]
        %v1004 = vld [vmem:[#allocation5 + $0x6c] sm:$0xf]
        %v1005 = vld [vmem:[#allocation5 + $0x70] sm:$0xf]
        %v1006 = vld [vmem:[#allocation5 + $0x74] sm:$0xf]
        %v1007 = vld [vmem:[#allocation5 + $0x78] sm:$0xf]
        %v1008 = vld [vmem:[#allocation5 + $0x7c] sm:$0xf]
        %v1009 = vld [vmem:[#allocation5 + $0x80] sm:$0xf]
        %v1010 = vld [vmem:[#allocation5 + $0x84] sm:$0xf]
        %v1011 = vld [vmem:[#allocation5 + $0x88] sm:$0xf]
        %v1012 = vld [vmem:[#allocation5 + $0x8c] sm:$0xf]
        %v1013 = vld [vmem:[#allocation5 + $0x90] sm:$0xf]
        %v1014 = vld [vmem:[#allocation5 + $0x94] sm:$0xf]
        %v1015 = vld [vmem:[#allocation5 + $0x98] sm:$0xf]
        %v1016 = vld [vmem:[#allocation5 + $0x9c] sm:$0xf]
        %v1017 = vld [vmem:[#allocation5 + $0xa0] sm:$0xf]
        %v1018 = vld [vmem:[#allocation5 + $0xa4] sm:$0xf]
        %v1019 = vld [vmem:[#allocation5 + $0xa8] sm:$0xf]
        %v1020 = vld [vmem:[#allocation5 + $0xac] sm:$0xf]
        %v1021 = vld [vmem:[#allocation5 + $0xb0] sm:$0xf]
        %v1022 = vld [vmem:[#allocation5 + $0xb4] sm:$0xf]
        %v1023 = vld [vmem:[#allocation5 + $0xb8] sm:$0xf]
        %v1024 = vld [vmem:[#allocation5 + $0xbc] sm:$0xf]
        %v1025 = vld [vmem:[#allocation5 + $0xc0] sm:$0xf]
        %v1026 = vld [vmem:[#allocation5 + $0xc4] sm:$0xf]
        %v1027 = vld [vmem:[#allocation5 + $0xc8] sm:$0xf]
        %v1028 = vld [vmem:[#allocation5 + $0xcc] sm:$0xf]
        %v1029 = vld [vmem:[#allocation5 + $0xd0] sm:$0xf]
        %v1030 = vld [vmem:[#allocation5 + $0xd4] sm:$0xf]
        %v1031 = vld [vmem:[#allocation5 + $0xd8] sm:$0xf]
        %v1032 = vld [vmem:[#allocation5 + $0xdc] sm:$0xf]
        %v1033 = vld [vmem:[#allocation5 + $0xe0] sm:$0xf]
        %v1034 = vld [vmem:[#allocation5 + $0xe4] sm:$0xf]
        %v1035 = vld [vmem:[#allocation5 + $0xe8] sm:$0xf]
        %v1036 = vld [vmem:[#allocation5 + $0xec] sm:$0xf]
        %v1037 = vld [vmem:[#allocation5 + $0xf0] sm:$0xf]
        %v1038 = vld [vmem:[#allocation5 + $0xf4] sm:$0xf]
        %v1039 = vld [vmem:[#allocation5 + $0xf8] sm:$0xf]
        %v1040 = vld [vmem:[#allocation5 + $0xfc] sm:$0xf]
        %v1041 = vld [vmem:[#allocation5 + $0x100] sm:$0xf]
        %v1042 = vld [vmem:[#allocation5 + $0x104] sm:$0xf]
        %v1043 = vld [vmem:[#allocation5 + $0x108] sm:$0xf]
        %v1044 = vld [vmem:[#allocation5 + $0x10c] sm:$0xf]
        %v1045 = vld [vmem:[#allocation5 + $0x110] sm:$0xf]
        %v1046 = vld [vmem:[#allocation5 + $0x114] sm:$0xf]
        %v1047 = vld [vmem:[#allocation5 + $0x118] sm:$0xf]
        %v1048 = vld [vmem:[#allocation5 + $0x11c] sm:$0xf]
        %v1049 = vld [vmem:[#allocation5 + $0x120] sm:$0xf]
        %v1050 = vld [vmem:[#allocation5 + $0x124] sm:$0xf]
        %v1051 = vld [vmem:[#allocation5 + $0x128] sm:$0xf]
        %v1052 = vld [vmem:[#allocation5 + $0x12c] sm:$0xf]
        %v1053 = vld [vmem:[#allocation5 + $0x130] sm:$0xf]
        %v1054 = vld [vmem:[#allocation5 + $0x134] sm:$0xf]
        %v1055 = vld [vmem:[#allocation5 + $0x138] sm:$0xf]
        %v1056 = vld [vmem:[#allocation5 + $0x13c] sm:$0xf]
        %v1057 = vld [vmem:[#allocation5 + $0x140] sm:$0xf]
        %v1058 = vld [vmem:[#allocation5 + $0x144] sm:$0xf]
        %v1059 = vld [vmem:[#allocation5 + $0x148] sm:$0xf]
        %v1060 = vld [vmem:[#allocation5 + $0x14c] sm:$0xf]
        %v1061 = vld [vmem:[#allocation5 + $0x150] sm:$0xf]
        %v1062 = vld [vmem:[#allocation5 + $0x154] sm:$0xf]
        %v1063 = vld [vmem:[#allocation5 + $0x158] sm:$0xf]
        %v1064 = vld [vmem:[#allocation5 + $0x15c] sm:$0xf]
        %v1065 = vld [vmem:[#allocation5 + $0x160] sm:$0xf]
        %v1066 = vld [vmem:[#allocation5 + $0x164] sm:$0xf]
        %v1067 = vld [vmem:[#allocation5 + $0x168] sm:$0xf]
        %v1068 = vld [vmem:[#allocation5 + $0x16c] sm:$0xf]
        %v1069 = vld [vmem:[#allocation5 + $0x170] sm:$0xf]
        %v1070 = vld [vmem:[#allocation5 + $0x174] sm:$0xf]
        %v1071 = vld [vmem:[#allocation5 + $0x178] sm:$0xf]
        %v1072 = vld [vmem:[#allocation5 + $0x17c] sm:$0xf]
        %v1073 = vld [vmem:[#allocation5 + $0x180] sm:$0xf]
        %v1074 = vld [vmem:[#allocation5 + $0x184] sm:$0xf]
        %v1075 = vld [vmem:[#allocation5 + $0x188] sm:$0xf]
        %v1076 = vld [vmem:[#allocation5 + $0x18c] sm:$0xf]
        %v1077 = vld [vmem:[#allocation5 + $0x190] sm:$0xf]
        %v1078 = vld [vmem:[#allocation5 + $0x194] sm:$0xf]
        %v1079 = vld [vmem:[#allocation5 + $0x198] sm:$0xf]
        %v1080 = vld [vmem:[#allocation5 + $0x19c] sm:$0xf]
        %v1081 = vld [vmem:[#allocation5 + $0x1a0] sm:$0xf]
        %v1082 = vld [vmem:[#allocation5 + $0x1a4] sm:$0xf]
        %v1083 = vld [vmem:[#allocation5 + $0x1a8] sm:$0xf]
        %v1084 = vld [vmem:[#allocation5 + $0x1ac] sm:$0xf]
        %v1085 = vld [vmem:[#allocation5 + $0x1b0] sm:$0xf]
        %v1086 = vld [vmem:[#allocation5 + $0x1b4] sm:$0xf]
        %v1087 = vld [vmem:[#allocation5 + $0x1b8] sm:$0xf]
        %v1088 = vld [vmem:[#allocation5 + $0x1bc] sm:$0xf]
        %v1089 = vld [vmem:[#allocation5 + $0x1c0] sm:$0xf]
        %v1090 = vld [vmem:[#allocation5 + $0x1c4] sm:$0xf]
        %v1091 = vld [vmem:[#allocation5 + $0x1c8] sm:$0xf]
        %v1092 = vld [vmem:[#allocation5 + $0x1cc] sm:$0xf]
        %v1093 = vld [vmem:[#allocation5 + $0x1d0] sm:$0xf]
        %v1094 = vld [vmem:[#allocation5 + $0x1d4] sm:$0xf]
        %v1095 = vld [vmem:[#allocation5 + $0x1d8] sm:$0xf]
        %v1096 = vld [vmem:[#allocation5 + $0x1dc] sm:$0xf]
        %v1097 = vld [vmem:[#allocation5 + $0x1e0] sm:$0xf]
        %v1098 = vld [vmem:[#allocation5 + $0x1e4] sm:$0xf]
        %v1099 = vld [vmem:[#allocation5 + $0x1e8] sm:$0xf]
        %v1100 = vld [vmem:[#allocation5 + $0x1ec] sm:$0xf]
        %v1101 = vld [vmem:[#allocation5 + $0x1f0] sm:$0xf]
        %v1102 = vld [vmem:[#allocation5 + $0x1f4] sm:$0xf]
        %v1103 = vld [vmem:[#allocation5 + $0x1f8] sm:$0xf]
        %v1104 = vld [vmem:[#allocation5 + $0x1fc] sm:$0xf]
        %v1105 = vld [vmem:[#allocation5 + $0x200] sm:$0xf]
        %v1106 = vld [vmem:[#allocation5 + $0x204] sm:$0xf]
        %v1107 = vld [vmem:[#allocation5 + $0x208] sm:$0xf]
        %v1108 = vld [vmem:[#allocation5 + $0x20c] sm:$0xf]
        %v1109 = vld [vmem:[#allocation5 + $0x210] sm:$0xf]
        %v1110 = vld [vmem:[#allocation5 + $0x214] sm:$0xf]
        %v1111 = vld [vmem:[#allocation5 + $0x218] sm:$0xf]
        %v1112 = vld [vmem:[#allocation5 + $0x21c] sm:$0xf]
        %v1113 = vld [vmem:[#allocation5 + $0x220] sm:$0xf]
        %v1114 = vld [vmem:[#allocation5 + $0x224] sm:$0xf]
        %v1115 = vld [vmem:[#allocation5 + $0x228] sm:$0xf]
        %v1116 = vld [vmem:[#allocation5 + $0x22c] sm:$0xf]
        %v1117 = vld [vmem:[#allocation5 + $0x230] sm:$0xf]
        %v1118 = vld [vmem:[#allocation5 + $0x234] sm:$0xf]
        %v1119 = vld [vmem:[#allocation5 + $0x238] sm:$0xf]
        %v1120 = vld [vmem:[#allocation5 + $0x23c] sm:$0xf]
        %v1265 = vunpack.c.l.b16 %v977
        %v1266 = vunpack.c.l.b16 %v978
        %v1267 = vunpack.c.l.b16 %v979
        %v1268 = vunpack.c.l.b16 %v980
        %v1269 = vunpack.c.l.b16 %v981
        %v1270 = vunpack.c.l.b16 %v982
        %v1271 = vunpack.c.l.b16 %v983
        %v1272 = vunpack.c.l.b16 %v984
        %v1273 = vunpack.c.l.b16 %v985
        %v1274 = vunpack.c.l.b16 %v986
        %v1275 = vunpack.c.l.b16 %v987
        %v1276 = vunpack.c.l.b16 %v988
        %v1277 = vunpack.c.l.b16 %v989
        %v1278 = vunpack.c.l.b16 %v990
        %v1279 = vunpack.c.l.b16 %v991
        %v1280 = vunpack.c.l.b16 %v992
        %v1281 = vunpack.c.l.b16 %v993
        %v1282 = vunpack.c.l.b16 %v994
        %v1283 = vunpack.c.l.b16 %v995
        %v1284 = vunpack.c.l.b16 %v996
        %v1285 = vunpack.c.l.b16 %v997
        %v1286 = vunpack.c.l.b16 %v998
        %v1287 = vunpack.c.l.b16 %v999
        %v1288 = vunpack.c.l.b16 %v1000
        %v1289 = vunpack.c.l.b16 %v1001
        %v1290 = vunpack.c.l.b16 %v1002
        %v1291 = vunpack.c.l.b16 %v1003
        %v1292 = vunpack.c.l.b16 %v1004
        %v1293 = vunpack.c.l.b16 %v1005
        %v1294 = vunpack.c.l.b16 %v1006
        %v1295 = vunpack.c.l.b16 %v1007
        %v1296 = vunpack.c.l.b16 %v1008
        %v1297 = vunpack.c.l.b16 %v1009
        %v1298 = vunpack.c.l.b16 %v1010
        %v1299 = vunpack.c.l.b16 %v1011
        %v1300 = vunpack.c.l.b16 %v1012
        %v1301 = vunpack.c.l.b16 %v1013
        %v1302 = vunpack.c.l.b16 %v1014
        %v1303 = vunpack.c.l.b16 %v1015
        %v1304 = vunpack.c.l.b16 %v1016
        %v1305 = vunpack.c.l.b16 %v1017
        %v1306 = vunpack.c.l.b16 %v1018
        %v1307 = vunpack.c.l.b16 %v1019
        %v1308 = vunpack.c.l.b16 %v1020
        %v1309 = vunpack.c.l.b16 %v1021
        %v1310 = vunpack.c.l.b16 %v1022
        %v1311 = vunpack.c.l.b16 %v1023
        %v1312 = vunpack.c.l.b16 %v1024
        %v1313 = vunpack.c.l.b16 %v1025
        %v1314 = vunpack.c.l.b16 %v1026
        %v1315 = vunpack.c.l.b16 %v1027
        %v1316 = vunpack.c.l.b16 %v1028
        %v1317 = vunpack.c.l.b16 %v1029
        %v1318 = vunpack.c.l.b16 %v1030
        %v1319 = vunpack.c.l.b16 %v1031
        %v1320 = vunpack.c.l.b16 %v1032
        %v1321 = vunpack.c.l.b16 %v1033
        %v1322 = vunpack.c.l.b16 %v1034
        %v1323 = vunpack.c.l.b16 %v1035
        %v1324 = vunpack.c.l.b16 %v1036
        %v1325 = vunpack.c.l.b16 %v1037
        %v1326 = vunpack.c.l.b16 %v1038
        %v1327 = vunpack.c.l.b16 %v1039
        %v1328 = vunpack.c.l.b16 %v1040
        %v1329 = vunpack.c.l.b16 %v1041
        %v1330 = vunpack.c.l.b16 %v1042
        %v1331 = vunpack.c.l.b16 %v1043
        %v1332 = vunpack.c.l.b16 %v1044
        %v1333 = vunpack.c.l.b16 %v1045
        %v1334 = vunpack.c.l.b16 %v1046
        %v1335 = vunpack.c.l.b16 %v1047
        %v1336 = vunpack.c.l.b16 %v1048
        %v1337 = vunpack.c.l.b16 %v1049
        %v1338 = vunpack.c.l.b16 %v1050
        %v1339 = vunpack.c.l.b16 %v1051
        %v1340 = vunpack.c.l.b16 %v1052
        %v1341 = vunpack.c.l.b16 %v1053
        %v1342 = vunpack.c.l.b16 %v1054
        %v1343 = vunpack.c.l.b16 %v1055
        %v1344 = vunpack.c.l.b16 %v1056
        %v1345 = vunpack.c.l.b16 %v1057
        %v1346 = vunpack.c.l.b16 %v1058
        %v1347 = vunpack.c.l.b16 %v1059
        %v1348 = vunpack.c.l.b16 %v1060
        %v1349 = vunpack.c.l.b16 %v1061
        %v1350 = vunpack.c.l.b16 %v1062
        %v1351 = vunpack.c.l.b16 %v1063
        %v1352 = vunpack.c.l.b16 %v1064
        %v1353 = vunpack.c.l.b16 %v1065
        %v1354 = vunpack.c.l.b16 %v1066
        %v1355 = vunpack.c.l.b16 %v1067
        %v1356 = vunpack.c.l.b16 %v1068
        %v1357 = vunpack.c.l.b16 %v1069
        %v1358 = vunpack.c.l.b16 %v1070
        %v1359 = vunpack.c.l.b16 %v1071
        %v1360 = vunpack.c.l.b16 %v1072
        %v1361 = vunpack.c.l.b16 %v1073
        %v1362 = vunpack.c.l.b16 %v1074
        %v1363 = vunpack.c.l.b16 %v1075
        %v1364 = vunpack.c.l.b16 %v1076
        %v1365 = vunpack.c.l.b16 %v1077
        %v1366 = vunpack.c.l.b16 %v1078
        %v1367 = vunpack.c.l.b16 %v1079
        %v1368 = vunpack.c.l.b16 %v1080
        %v1369 = vunpack.c.l.b16 %v1081
        %v1370 = vunpack.c.l.b16 %v1082
        %v1371 = vunpack.c.l.b16 %v1083
        %v1372 = vunpack.c.l.b16 %v1084
        %v1373 = vunpack.c.l.b16 %v1085
        %v1374 = vunpack.c.l.b16 %v1086
        %v1375 = vunpack.c.l.b16 %v1087
        %v1376 = vunpack.c.l.b16 %v1088
        %v1377 = vunpack.c.l.b16 %v1089
        %v1378 = vunpack.c.l.b16 %v1090
        %v1379 = vunpack.c.l.b16 %v1091
        %v1380 = vunpack.c.l.b16 %v1092
        %v1381 = vunpack.c.l.b16 %v1093
        %v1382 = vunpack.c.l.b16 %v1094
        %v1383 = vunpack.c.l.b16 %v1095
        %v1384 = vunpack.c.l.b16 %v1096
        %v1385 = vunpack.c.l.b16 %v1097
        %v1386 = vunpack.c.l.b16 %v1098
        %v1387 = vunpack.c.l.b16 %v1099
        %v1388 = vunpack.c.l.b16 %v1100
        %v1389 = vunpack.c.l.b16 %v1101
        %v1390 = vunpack.c.l.b16 %v1102
        %v1391 = vunpack.c.l.b16 %v1103
        %v1392 = vunpack.c.l.b16 %v1104
        %v1393 = vunpack.c.l.b16 %v1105
        %v1394 = vunpack.c.l.b16 %v1106
        %v1395 = vunpack.c.l.b16 %v1107
        %v1396 = vunpack.c.l.b16 %v1108
        %v1397 = vunpack.c.l.b16 %v1109
        %v1398 = vunpack.c.l.b16 %v1110
        %v1399 = vunpack.c.l.b16 %v1111
        %v1400 = vunpack.c.l.b16 %v1112
        %v1401 = vunpack.c.l.b16 %v1113
        %v1402 = vunpack.c.l.b16 %v1114
        %v1403 = vunpack.c.l.b16 %v1115
        %v1404 = vunpack.c.l.b16 %v1116
        %v1405 = vunpack.c.l.b16 %v1117
        %v1406 = vunpack.c.l.b16 %v1118
        %v1407 = vunpack.c.l.b16 %v1119
        %v1408 = vunpack.c.l.b16 %v1120
        %v1409 = vpack.c.b16 %v1266, %v1265
        %v1410 = vpack.c.b16 %v1268, %v1267
        %v1411 = vpack.c.b16 %v1270, %v1269
        %v1412 = vpack.c.b16 %v1272, %v1271
        %v1413 = vpack.c.b16 %v1274, %v1273
        %v1414 = vpack.c.b16 %v1276, %v1275
        %v1415 = vpack.c.b16 %v1278, %v1277
        %v1416 = vpack.c.b16 %v1280, %v1279
        %v1417 = vpack.c.b16 %v1282, %v1281
        %v1418 = vpack.c.b16 %v1284, %v1283
        %v1419 = vpack.c.b16 %v1286, %v1285
        %v1420 = vpack.c.b16 %v1288, %v1287
        %v1421 = vpack.c.b16 %v1290, %v1289
        %v1422 = vpack.c.b16 %v1292, %v1291
        %v1423 = vpack.c.b16 %v1294, %v1293
        %v1424 = vpack.c.b16 %v1296, %v1295
        %v1425 = vpack.c.b16 %v1298, %v1297
        %v1426 = vpack.c.b16 %v1300, %v1299
        %v1427 = vpack.c.b16 %v1302, %v1301
        %v1428 = vpack.c.b16 %v1304, %v1303
        %v1429 = vpack.c.b16 %v1306, %v1305
        %v1430 = vpack.c.b16 %v1308, %v1307
        %v1431 = vpack.c.b16 %v1310, %v1309
        %v1432 = vpack.c.b16 %v1312, %v1311
        %v1433 = vpack.c.b16 %v1314, %v1313
        %v1434 = vpack.c.b16 %v1316, %v1315
        %v1435 = vpack.c.b16 %v1318, %v1317
        %v1436 = vpack.c.b16 %v1320, %v1319
        %v1437 = vpack.c.b16 %v1322, %v1321
        %v1438 = vpack.c.b16 %v1324, %v1323
        %v1439 = vpack.c.b16 %v1326, %v1325
        %v1440 = vpack.c.b16 %v1328, %v1327
        %v1441 = vpack.c.b16 %v1330, %v1329
        %v1442 = vpack.c.b16 %v1332, %v1331
        %v1443 = vpack.c.b16 %v1334, %v1333
        %v1444 = vpack.c.b16 %v1336, %v1335
        %v1445 = vpack.c.b16 %v1338, %v1337
        %v1446 = vpack.c.b16 %v1340, %v1339
        %v1447 = vpack.c.b16 %v1342, %v1341
        %v1448 = vpack.c.b16 %v1344, %v1343
        %v1449 = vpack.c.b16 %v1346, %v1345
        %v1450 = vpack.c.b16 %v1348, %v1347
        %v1451 = vpack.c.b16 %v1350, %v1349
        %v1452 = vpack.c.b16 %v1352, %v1351
        %v1453 = vpack.c.b16 %v1354, %v1353
        %v1454 = vpack.c.b16 %v1356, %v1355
        %v1455 = vpack.c.b16 %v1358, %v1357
        %v1456 = vpack.c.b16 %v1360, %v1359
        %v1457 = vpack.c.b16 %v1362, %v1361
        %v1458 = vpack.c.b16 %v1364, %v1363
        %v1459 = vpack.c.b16 %v1366, %v1365
        %v1460 = vpack.c.b16 %v1368, %v1367
        %v1461 = vpack.c.b16 %v1370, %v1369
        %v1462 = vpack.c.b16 %v1372, %v1371
        %v1463 = vpack.c.b16 %v1374, %v1373
        %v1464 = vpack.c.b16 %v1376, %v1375
        %v1465 = vpack.c.b16 %v1378, %v1377
        %v1466 = vpack.c.b16 %v1380, %v1379
        %v1467 = vpack.c.b16 %v1382, %v1381
        %v1468 = vpack.c.b16 %v1384, %v1383
        %v1469 = vpack.c.b16 %v1386, %v1385
        %v1470 = vpack.c.b16 %v1388, %v1387
        %v1471 = vpack.c.b16 %v1390, %v1389
        %v1472 = vpack.c.b16 %v1392, %v1391
        %v1473 = vpack.c.b16 %v1394, %v1393
        %v1474 = vpack.c.b16 %v1396, %v1395
        %v1475 = vpack.c.b16 %v1398, %v1397
        %v1476 = vpack.c.b16 %v1400, %v1399
        %v1477 = vpack.c.b16 %v1402, %v1401
        %v1478 = vpack.c.b16 %v1404, %v1403
        %v1479 = vpack.c.b16 %v1406, %v1405
        %v1480 = vpack.c.b16 %v1408, %v1407
        %1553 = vmatprep.subr.bf16.mxu0 0
        %1554 = vmatpush1.bf16.msra.mxu0 %v1416
        %1555 = vmatprep.subr.bf16.mxu0 0
        %1556 = vmatpush1.bf16.msra.mxu0 %v1415
        %1557 = vmatprep.subr.bf16.mxu0 0
        %1558 = vmatpush1.bf16.msra.mxu0 %v1414
        %1559 = vmatprep.subr.bf16.mxu0 0
        %1560 = vmatpush1.bf16.msra.mxu0 %v1413
        %1561 = vmatprep.subr.bf16.mxu0 0
        %1562 = vmatpush1.bf16.msra.mxu0 %v1412
        %1563 = vmatprep.subr.bf16.mxu0 0
        %1564 = vmatpush1.bf16.msra.mxu0 %v1411
        %1565 = vmatprep.subr.bf16.mxu0 0
        %1566 = vmatpush1.bf16.msra.mxu0 %v1410
        %1567 = vmatprep.subr.bf16.mxu0 0
        %1568 = vmatpush1.bf16.msra.mxu0 %v1409
        %1569 = vmatprep.subr.bf16.mxu0 0
        %1570 = vmatpush2.bf16.msra.mxu0 %v1424
        %1571 = vmatprep.subr.bf16.mxu0 0
        %1572 = vmatpush2.bf16.msra.mxu0 %v1423
        %1573 = vmatprep.subr.bf16.mxu0 0
        %1574 = vmatpush2.bf16.msra.mxu0 %v1422
        %1575 = vmatprep.subr.bf16.mxu0 0
        %1576 = vmatpush2.bf16.msra.mxu0 %v1421
        %1577 = vmatprep.subr.bf16.mxu0 0
        %1578 = vmatpush2.bf16.msra.mxu0 %v1420
        %1579 = vmatprep.subr.bf16.mxu0 0
        %1580 = vmatpush2.bf16.msra.mxu0 %v1419
        %1581 = vmatprep.subr.bf16.mxu0 0
        %1582 = vmatpush2.bf16.msra.mxu0 %v1418
        %1583 = vmatprep.subr.bf16.mxu0 0
        %1584 = vmatpush2.bf16.msra.mxu0 %v1417
        %1585 = vmatprep.mubr.bf16.mxu0 %v257
        %1586 = vmatmul.mubr.bf16.gmra.mxu0 %v230
        %v1587 = vpop.f32.mrf.mxu0
        %v1588 = vadd.f32 0.0, %v1587
        %v1589 = vpop.f32.mrf.mxu0
        %v1590 = vpop.f32.mrf.mxu0
        %v1591 = vadd.f32 0.0, %v1590
        %v1592 = vpop.f32.mrf.mxu0
        %1593 = vmatprep.mubr.bf16.mxu0 %v258
        %1594 = vmatmul.mubr.bf16.gmra.mxu0 %v231
        %v1595 = vpop.f32.mrf.mxu0
        %v1596 = vadd.f32 0.0, %v1595
        %v1597 = vpop.f32.mrf.mxu0
        %v1598 = vpop.f32.mrf.mxu0
        %v1599 = vadd.f32 0.0, %v1598
        %v1600 = vpop.f32.mrf.mxu0
        %1601 = vmatprep.mubr.bf16.mxu0 %v259
        %1602 = vmatmul.mubr.bf16.gmra.mxu0 %v232
        %v1603 = vpop.f32.mrf.mxu0
        %v1604 = vadd.f32 0.0, %v1603
        %v1605 = vpop.f32.mrf.mxu0
        %v1606 = vpop.f32.mrf.mxu0
        %v1607 = vadd.f32 0.0, %v1606
        %v1608 = vpop.f32.mrf.mxu0
        %1609 = vmatprep.mubr.bf16.mxu0 %v260
        %1610 = vmatmul.mubr.bf16.gmra.mxu0 %v233
        %v1611 = vpop.f32.mrf.mxu0
        %v1612 = vadd.f32 0.0, %v1611
        %v1613 = vpop.f32.mrf.mxu0
        %v1614 = vpop.f32.mrf.mxu0
        %v1615 = vadd.f32 0.0, %v1614
        %v1616 = vpop.f32.mrf.mxu0
        %1617 = vmatprep.mubr.bf16.mxu0 %v935
        %1618 = vmatmul.mubr.bf16.gmra.mxu0 %v931
        %v1619 = vpop.f32.mrf.mxu0
        %v1620 = vadd.f32 0.0, %v1619
        %v1621 = vpop.f32.mrf.mxu0
        %v1622 = vpop.f32.mrf.mxu0
        %v1623 = vadd.f32 0.0, %v1622
        %v1624 = vpop.f32.mrf.mxu0
        %1625 = vmatprep.mubr.bf16.mxu0 %v784
        %1626 = vmatmul.mubr.bf16.gmra.mxu0 %v782
        %v1627 = vpop.f32.mrf.mxu0
        %v1628 = vadd.f32 0.0, %v1627
        %v1629 = vpop.f32.mrf.mxu0
        %v1630 = vpop.f32.mrf.mxu0
        %v1631 = vadd.f32 0.0, %v1630
        %v1632 = vpop.f32.mrf.mxu0
        %1633 = vmatprep.mubr.bf16.mxu0 %v802
        %1634 = vmatmul.mubr.bf16.gmra.mxu0 %v800
        %v1635 = vpop.f32.mrf.mxu0
        %v1636 = vadd.f32 0.0, %v1635
        %v1637 = vpop.f32.mrf.mxu0
        %v1638 = vpop.f32.mrf.mxu0
        %v1639 = vadd.f32 0.0, %v1638
        %v1640 = vpop.f32.mrf.mxu0
        %1641 = vmatprep.mubr.bf16.mxu0 %v820
        %1642 = vmatmul.mubr.bf16.gmra.mxu0 %v818
        %v1643 = vpop.f32.mrf.mxu0
        %v1644 = vadd.f32 0.0, %v1643
        %v1645 = vpop.f32.mrf.mxu0
        %v1646 = vpop.f32.mrf.mxu0
        %v1647 = vadd.f32 0.0, %v1646
        %v1648 = vpop.f32.mrf.mxu0
        %1649 = vmatprep.mubr.bf16.mxu0 %v838
        %1650 = vmatmul.mubr.bf16.gmra.mxu0 %v836
        %v1651 = vpop.f32.mrf.mxu0
        %v1652 = vadd.f32 0.0, %v1651
        %v1653 = vpop.f32.mrf.mxu0
        %v1654 = vpop.f32.mrf.mxu0
        %v1655 = vadd.f32 0.0, %v1654
        %v1656 = vpop.f32.mrf.mxu0
        %1657 = vmatprep.mubr.bf16.mxu0 %v358
        %1658 = vmatmul.mubr.bf16.gmra.mxu0 %v331
        %v1659 = vpop.f32.mrf.mxu0
        %v1660 = vadd.f32 0.0, %v1659
        %v1661 = vpop.f32.mrf.mxu0
        %v1662 = vpop.f32.mrf.mxu0
        %v1663 = vadd.f32 0.0, %v1662
        %v1664 = vpop.f32.mrf.mxu0
        %1665 = vmatprep.mubr.bf16.mxu0 %v359
        %1666 = vmatmul.mubr.bf16.gmra.mxu0 %v332
        %v1667 = vpop.f32.mrf.mxu0
        %v1668 = vadd.f32 0.0, %v1667
        %v1669 = vpop.f32.mrf.mxu0
        %v1670 = vpop.f32.mrf.mxu0
        %v1671 = vadd.f32 0.0, %v1670
        %v1672 = vpop.f32.mrf.mxu0
        %1673 = vmatprep.mubr.bf16.mxu0 %v360
        %1674 = vmatmul.mubr.bf16.gmra.mxu0 %v333
        %v1675 = vpop.f32.mrf.mxu0
        %v1676 = vadd.f32 0.0, %v1675
        %v1677 = vpop.f32.mrf.mxu0
        %v1678 = vpop.f32.mrf.mxu0
        %v1679 = vadd.f32 0.0, %v1678
        %v1680 = vpop.f32.mrf.mxu0
        %1681 = vmatprep.mubr.bf16.mxu0 %v361
        %1682 = vmatmul.mubr.bf16.gmra.mxu0 %v334
        %v1683 = vpop.f32.mrf.mxu0
        %v1684 = vadd.f32 0.0, %v1683
        %v1685 = vpop.f32.mrf.mxu0
        %v1686 = vpop.f32.mrf.mxu0
        %v1687 = vadd.f32 0.0, %v1686
        %v1688 = vpop.f32.mrf.mxu0
        %1689 = vmatprep.mubr.bf16.mxu0 %v947
        %1690 = vmatmul.mubr.bf16.gmra.mxu0 %v943
        %v1691 = vpop.f32.mrf.mxu0
        %v1692 = vadd.f32 0.0, %v1691
        %v1693 = vpop.f32.mrf.mxu0
        %v1694 = vpop.f32.mrf.mxu0
        %v1695 = vadd.f32 0.0, %v1694
        %v1696 = vpop.f32.mrf.mxu0
        %1697 = vmatprep.mubr.bf16.mxu0 %v790
        %1698 = vmatmul.mubr.bf16.gmra.mxu0 %v788
        %v1699 = vpop.f32.mrf.mxu0
        %v1700 = vadd.f32 0.0, %v1699
        %v1701 = vpop.f32.mrf.mxu0
        %v1702 = vpop.f32.mrf.mxu0
        %v1703 = vadd.f32 0.0, %v1702
        %v1704 = vpop.f32.mrf.mxu0
        %1705 = vmatprep.mubr.bf16.mxu0 %v808
        %1706 = vmatmul.mubr.bf16.gmra.mxu0 %v806
        %v1707 = vpop.f32.mrf.mxu0
        %v1708 = vadd.f32 0.0, %v1707
        %v1709 = vpop.f32.mrf.mxu0
        %v1710 = vpop.f32.mrf.mxu0
        %v1711 = vadd.f32 0.0, %v1710
        %v1712 = vpop.f32.mrf.mxu0
        %1713 = vmatprep.mubr.bf16.mxu0 %v826
        %1714 = vmatmul.mubr.bf16.gmra.mxu0 %v824
        %v1715 = vpop.f32.mrf.mxu0
        %v1716 = vadd.f32 0.0, %v1715
        %v1717 = vpop.f32.mrf.mxu0
        %v1718 = vpop.f32.mrf.mxu0
        %v1719 = vadd.f32 0.0, %v1718
        %v1720 = vpop.f32.mrf.mxu0
        %1721 = vmatprep.mubr.bf16.mxu0 %v844
        %1722 = vmatmul.mubr.bf16.gmra.mxu0 %v842
        %v1723 = vpop.f32.mrf.mxu0
        %v1724 = vadd.f32 0.0, %v1723
        %v1725 = vpop.f32.mrf.mxu0
        %v1726 = vpop.f32.mrf.mxu0
        %v1727 = vadd.f32 0.0, %v1726
        %v1728 = vpop.f32.mrf.mxu0
        %1729 = vdwg.mxu0
        %1730 = vmatprep.subr.bf16.mxu0 0
        %1731 = vmatpush1.bf16.msra.mxu0 %v1432
        %1732 = vmatprep.subr.bf16.mxu0 0
        %1733 = vmatpush1.bf16.msra.mxu0 %v1431
        %1734 = vmatprep.subr.bf16.mxu0 0
        %1735 = vmatpush1.bf16.msra.mxu0 %v1430
        %1736 = vmatprep.subr.bf16.mxu0 0
        %1737 = vmatpush1.bf16.msra.mxu0 %v1429
        %1738 = vmatprep.subr.bf16.mxu0 0
        %1739 = vmatpush1.bf16.msra.mxu0 %v1428
        %1740 = vmatprep.subr.bf16.mxu0 0
        %1741 = vmatpush1.bf16.msra.mxu0 %v1427
        %1742 = vmatprep.subr.bf16.mxu0 0
        %1743 = vmatpush1.bf16.msra.mxu0 %v1426
        %1744 = vmatprep.subr.bf16.mxu0 0
        %1745 = vmatpush1.bf16.msra.mxu0 %v1425
        %1746 = vmatprep.subr.bf16.mxu0 0
        %1747 = vmatpush2.bf16.msra.mxu0 %v1440
        %1748 = vmatprep.subr.bf16.mxu0 0
        %1749 = vmatpush2.bf16.msra.mxu0 %v1439
        %1750 = vmatprep.subr.bf16.mxu0 0
        %1751 = vmatpush2.bf16.msra.mxu0 %v1438
        %1752 = vmatprep.subr.bf16.mxu0 0
        %1753 = vmatpush2.bf16.msra.mxu0 %v1437
        %1754 = vmatprep.subr.bf16.mxu0 0
        %1755 = vmatpush2.bf16.msra.mxu0 %v1436
        %1756 = vmatprep.subr.bf16.mxu0 0
        %1757 = vmatpush2.bf16.msra.mxu0 %v1435
        %1758 = vmatprep.subr.bf16.mxu0 0
        %1759 = vmatpush2.bf16.msra.mxu0 %v1434
        %1760 = vmatprep.subr.bf16.mxu0 0
        %1761 = vmatpush2.bf16.msra.mxu0 %v1433
        %1762 = vmatprep.mubr.bf16.mxu0 %v331
        %1763 = vmatmul.mubr.bf16.gmra.mxu0 %v281
        %v1764 = vpop.f32.mrf.mxu0
        %v1765 = vadd.f32 %v1588, %v1764
        %v1766 = vpop.f32.mrf.mxu0
        %v1767 = vpop.f32.mrf.mxu0
        %v1768 = vadd.f32 %v1591, %v1767
        %v1769 = vpop.f32.mrf.mxu0
        %1770 = vmatprep.mubr.bf16.mxu0 %v332
        %1771 = vmatmul.mubr.bf16.gmra.mxu0 %v289
        %v1772 = vpop.f32.mrf.mxu0
        %v1773 = vadd.f32 %v1596, %v1772
        %v1774 = vpop.f32.mrf.mxu0
        %v1775 = vpop.f32.mrf.mxu0
        %v1776 = vadd.f32 %v1599, %v1775
        %v1777 = vpop.f32.mrf.mxu0
        %1778 = vmatprep.mubr.bf16.mxu0 %v333
        %1779 = vmatmul.mubr.bf16.gmra.mxu0 %v297
        %v1780 = vpop.f32.mrf.mxu0
        %v1781 = vadd.f32 %v1604, %v1780
        %v1782 = vpop.f32.mrf.mxu0
        %v1783 = vpop.f32.mrf.mxu0
        %v1784 = vadd.f32 %v1607, %v1783
        %v1785 = vpop.f32.mrf.mxu0
        %1786 = vmatprep.mubr.bf16.mxu0 %v334
        %1787 = vmatmul.mubr.bf16.gmra.mxu0 %v305
        %v1788 = vpop.f32.mrf.mxu0
        %v1789 = vadd.f32 %v1612, %v1788
        %v1790 = vpop.f32.mrf.mxu0
        %v1791 = vpop.f32.mrf.mxu0
        %v1792 = vadd.f32 %v1615, %v1791
        %v1793 = vpop.f32.mrf.mxu0
        %1794 = vmatprep.mubr.bf16.mxu0 %v943
        %1795 = vmatmul.mubr.bf16.gmra.mxu0 %v939
        %v1796 = vpop.f32.mrf.mxu0
        %v1797 = vadd.f32 %v1620, %v1796
        %v1798 = vpop.f32.mrf.mxu0
        %v1799 = vpop.f32.mrf.mxu0
        %v1800 = vadd.f32 %v1623, %v1799
        %v1801 = vpop.f32.mrf.mxu0
        %1802 = vmatprep.mubr.bf16.mxu0 %v788
        %1803 = vmatmul.mubr.bf16.gmra.mxu0 %v786
        %v1804 = vpop.f32.mrf.mxu0
        %v1805 = vadd.f32 %v1628, %v1804
        %v1806 = vpop.f32.mrf.mxu0
        %v1807 = vpop.f32.mrf.mxu0
        %v1808 = vadd.f32 %v1631, %v1807
        %v1809 = vpop.f32.mrf.mxu0
        %1810 = vmatprep.mubr.bf16.mxu0 %v806
        %1811 = vmatmul.mubr.bf16.gmra.mxu0 %v804
        %v1812 = vpop.f32.mrf.mxu0
        %v1813 = vadd.f32 %v1636, %v1812
        %v1814 = vpop.f32.mrf.mxu0
        %v1815 = vpop.f32.mrf.mxu0
        %v1816 = vadd.f32 %v1639, %v1815
        %v1817 = vpop.f32.mrf.mxu0
        %1818 = vmatprep.mubr.bf16.mxu0 %v824
        %1819 = vmatmul.mubr.bf16.gmra.mxu0 %v822
        %v1820 = vpop.f32.mrf.mxu0
        %v1821 = vadd.f32 %v1644, %v1820
        %v1822 = vpop.f32.mrf.mxu0
        %v1823 = vpop.f32.mrf.mxu0
        %v1824 = vadd.f32 %v1647, %v1823
        %v1825 = vpop.f32.mrf.mxu0
        %1826 = vmatprep.mubr.bf16.mxu0 %v842
        %1827 = vmatmul.mubr.bf16.gmra.mxu0 %v840
        %v1828 = vpop.f32.mrf.mxu0
        %v1829 = vadd.f32 %v1652, %v1828
        %v1830 = vpop.f32.mrf.mxu0
        %v1831 = vpop.f32.mrf.mxu0
        %v1832 = vadd.f32 %v1655, %v1831
        %v1833 = vpop.f32.mrf.mxu0
        %1834 = vmatprep.mubr.bf16.mxu0 %v433
        %1835 = vmatmul.mubr.bf16.gmra.mxu0 %v381
        %v1836 = vpop.f32.mrf.mxu0
        %v1837 = vadd.f32 %v1660, %v1836
        %v1838 = vpop.f32.mrf.mxu0
        %v1839 = vpop.f32.mrf.mxu0
        %v1840 = vadd.f32 %v1663, %v1839
        %v1841 = vpop.f32.mrf.mxu0
        %1842 = vmatprep.mubr.bf16.mxu0 %v441
        %1843 = vmatmul.mubr.bf16.gmra.mxu0 %v389
        %v1844 = vpop.f32.mrf.mxu0
        %v1845 = vadd.f32 %v1668, %v1844
        %v1846 = vpop.f32.mrf.mxu0
        %v1847 = vpop.f32.mrf.mxu0
        %v1848 = vadd.f32 %v1671, %v1847
        %v1849 = vpop.f32.mrf.mxu0
        %1850 = vmatprep.mubr.bf16.mxu0 %v449
        %1851 = vmatmul.mubr.bf16.gmra.mxu0 %v397
        %v1852 = vpop.f32.mrf.mxu0
        %v1853 = vadd.f32 %v1676, %v1852
        %v1854 = vpop.f32.mrf.mxu0
        %v1855 = vpop.f32.mrf.mxu0
        %v1856 = vadd.f32 %v1679, %v1855
        %v1857 = vpop.f32.mrf.mxu0
        %1858 = vmatprep.mubr.bf16.mxu0 %v457
        %1859 = vmatmul.mubr.bf16.gmra.mxu0 %v405
        %v1860 = vpop.f32.mrf.mxu0
        %v1861 = vadd.f32 %v1684, %v1860
        %v1862 = vpop.f32.mrf.mxu0
        %v1863 = vpop.f32.mrf.mxu0
        %v1864 = vadd.f32 %v1687, %v1863
        %v1865 = vpop.f32.mrf.mxu0
        %1866 = vmatprep.mubr.bf16.mxu0 %v955
        %1867 = vmatmul.mubr.bf16.gmra.mxu0 %v951
        %v1868 = vpop.f32.mrf.mxu0
        %v1869 = vadd.f32 %v1692, %v1868
        %v1870 = vpop.f32.mrf.mxu0
        %v1871 = vpop.f32.mrf.mxu0
        %v1872 = vadd.f32 %v1695, %v1871
        %v1873 = vpop.f32.mrf.mxu0
        %1874 = vmatprep.mubr.bf16.mxu0 %v794
        %1875 = vmatmul.mubr.bf16.gmra.mxu0 %v792
        %v1876 = vpop.f32.mrf.mxu0
        %v1877 = vadd.f32 %v1700, %v1876
        %v1878 = vpop.f32.mrf.mxu0
        %v1879 = vpop.f32.mrf.mxu0
        %v1880 = vadd.f32 %v1703, %v1879
        %v1881 = vpop.f32.mrf.mxu0
        %1882 = vmatprep.mubr.bf16.mxu0 %v812
        %1883 = vmatmul.mubr.bf16.gmra.mxu0 %v810
        %v1884 = vpop.f32.mrf.mxu0
        %v1885 = vadd.f32 %v1708, %v1884
        %v1886 = vpop.f32.mrf.mxu0
        %v1887 = vpop.f32.mrf.mxu0
        %v1888 = vadd.f32 %v1711, %v1887
        %v1889 = vpop.f32.mrf.mxu0
        %1890 = vmatprep.mubr.bf16.mxu0 %v830
        %1891 = vmatmul.mubr.bf16.gmra.mxu0 %v828
        %v1892 = vpop.f32.mrf.mxu0
        %v1893 = vadd.f32 %v1716, %v1892
        %v1894 = vpop.f32.mrf.mxu0
        %v1895 = vpop.f32.mrf.mxu0
        %v1896 = vadd.f32 %v1719, %v1895
        %v1897 = vpop.f32.mrf.mxu0
        %1898 = vmatprep.mubr.bf16.mxu0 %v848
        %1899 = vmatmul.mubr.bf16.gmra.mxu0 %v846
        %v1900 = vpop.f32.mrf.mxu0
        %v1901 = vadd.f32 %v1724, %v1900
        %v1902 = vpop.f32.mrf.mxu0
        %v1903 = vpop.f32.mrf.mxu0
        %v1904 = vadd.f32 %v1727, %v1903
        %v1905 = vpop.f32.mrf.mxu0
        %1906 = vdwg.mxu0
        %1907 = vmatprep.subr.bf16.mxu0 0
        %1908 = vmatpush1.bf16.msra.mxu0 %v1448
        %1909 = vmatprep.subr.bf16.mxu0 0
        %1910 = vmatpush1.bf16.msra.mxu0 %v1447
        %1911 = vmatprep.subr.bf16.mxu0 0
        %1912 = vmatpush1.bf16.msra.mxu0 %v1446
        %1913 = vmatprep.subr.bf16.mxu0 0
        %1914 = vmatpush1.bf16.msra.mxu0 %v1445
        %1915 = vmatprep.subr.bf16.mxu0 0
        %1916 = vmatpush1.bf16.msra.mxu0 %v1444
        %1917 = vmatprep.subr.bf16.mxu0 0
        %1918 = vmatpush1.bf16.msra.mxu0 %v1443
        %1919 = vmatprep.subr.bf16.mxu0 0
        %1920 = vmatpush1.bf16.msra.mxu0 %v1442
        %1921 = vmatprep.subr.bf16.mxu0 0
        %1922 = vmatpush1.bf16.msra.mxu0 %v1441
        %1923 = vmatprep.subr.bf16.mxu0 0
        %1924 = vmatpush2.bf16.msra.mxu0 %v1456
        %1925 = vmatprep.subr.bf16.mxu0 0
        %1926 = vmatpush2.bf16.msra.mxu0 %v1455
        %1927 = vmatprep.subr.bf16.mxu0 0
        %1928 = vmatpush2.bf16.msra.mxu0 %v1454
        %1929 = vmatprep.subr.bf16.mxu0 0
        %1930 = vmatpush2.bf16.msra.mxu0 %v1453
        %1931 = vmatprep.subr.bf16.mxu0 0
        %1932 = vmatpush2.bf16.msra.mxu0 %v1452
        %1933 = vmatprep.subr.bf16.mxu0 0
        %1934 = vmatpush2.bf16.msra.mxu0 %v1451
        %1935 = vmatprep.subr.bf16.mxu0 0
        %1936 = vmatpush2.bf16.msra.mxu0 %v1450
        %1937 = vmatprep.subr.bf16.mxu0 0
        %1938 = vmatpush2.bf16.msra.mxu0 %v1449
        %1939 = vmatprep.mubr.bf16.mxu0 %v381
        %1940 = vmatmul.mubr.bf16.gmra.mxu0 %v358
        %v1941 = vpop.f32.mrf.mxu0
        %v1942 = vadd.f32 %v1765, %v1941
        %v1943 = vpop.f32.mrf.mxu0
        %v1944 = vpop.f32.mrf.mxu0
        %v1945 = vadd.f32 %v1768, %v1944
        %v1946 = vpop.f32.mrf.mxu0
        %1947 = vmatprep.mubr.bf16.mxu0 %v389
        %1948 = vmatmul.mubr.bf16.gmra.mxu0 %v359
        %v1949 = vpop.f32.mrf.mxu0
        %v1950 = vadd.f32 %v1773, %v1949
        %v1951 = vpop.f32.mrf.mxu0
        %v1952 = vpop.f32.mrf.mxu0
        %v1953 = vadd.f32 %v1776, %v1952
        %v1954 = vpop.f32.mrf.mxu0
        %1955 = vmatprep.mubr.bf16.mxu0 %v397
        %1956 = vmatmul.mubr.bf16.gmra.mxu0 %v360
        %v1957 = vpop.f32.mrf.mxu0
        %v1958 = vadd.f32 %v1781, %v1957
        %v1959 = vpop.f32.mrf.mxu0
        %v1960 = vpop.f32.mrf.mxu0
        %v1961 = vadd.f32 %v1784, %v1960
        %v1962 = vpop.f32.mrf.mxu0
        %1963 = vmatprep.mubr.bf16.mxu0 %v405
        %1964 = vmatmul.mubr.bf16.gmra.mxu0 %v361
        %v1965 = vpop.f32.mrf.mxu0
        %v1966 = vadd.f32 %v1789, %v1965
        %v1967 = vpop.f32.mrf.mxu0
        %v1968 = vpop.f32.mrf.mxu0
        %v1969 = vadd.f32 %v1792, %v1968
        %v1970 = vpop.f32.mrf.mxu0
        %1971 = vmatprep.mubr.bf16.mxu0 %v951
        %1972 = vmatmul.mubr.bf16.gmra.mxu0 %v947
        %v1973 = vpop.f32.mrf.mxu0
        %v1974 = vadd.f32 %v1797, %v1973
        %v1975 = vpop.f32.mrf.mxu0
        %v1976 = vpop.f32.mrf.mxu0
        %v1977 = vadd.f32 %v1800, %v1976
        %v1978 = vpop.f32.mrf.mxu0
        %1979 = vmatprep.mubr.bf16.mxu0 %v792
        %1980 = vmatmul.mubr.bf16.gmra.mxu0 %v790
        %v1981 = vpop.f32.mrf.mxu0
        %v1982 = vadd.f32 %v1805, %v1981
        %v1983 = vpop.f32.mrf.mxu0
        %v1984 = vpop.f32.mrf.mxu0
        %v1985 = vadd.f32 %v1808, %v1984
        %v1986 = vpop.f32.mrf.mxu0
        %1987 = vmatprep.mubr.bf16.mxu0 %v810
        %1988 = vmatmul.mubr.bf16.gmra.mxu0 %v808
        %v1989 = vpop.f32.mrf.mxu0
        %v1990 = vadd.f32 %v1813, %v1989
        %v1991 = vpop.f32.mrf.mxu0
        %v1992 = vpop.f32.mrf.mxu0
        %v1993 = vadd.f32 %v1816, %v1992
        %v1994 = vpop.f32.mrf.mxu0
        %1995 = vmatprep.mubr.bf16.mxu0 %v828
        %1996 = vmatmul.mubr.bf16.gmra.mxu0 %v826
        %v1997 = vpop.f32.mrf.mxu0
        %v1998 = vadd.f32 %v1821, %v1997
        %v1999 = vpop.f32.mrf.mxu0
        %v2000 = vpop.f32.mrf.mxu0
        %v2001 = vadd.f32 %v1824, %v2000
        %v2002 = vpop.f32.mrf.mxu0
        %2003 = vmatprep.mubr.bf16.mxu0 %v846
        %2004 = vmatmul.mubr.bf16.gmra.mxu0 %v844
        %v2005 = vpop.f32.mrf.mxu0
        %v2006 = vadd.f32 %v1829, %v2005
        %v2007 = vpop.f32.mrf.mxu0
        %v2008 = vpop.f32.mrf.mxu0
        %v2009 = vadd.f32 %v1832, %v2008
        %v2010 = vpop.f32.mrf.mxu0
        %2011 = vmatprep.mubr.bf16.mxu0 %v523
        %2012 = vmatmul.mubr.bf16.gmra.mxu0 %v485
        %v2013 = vpop.f32.mrf.mxu0
        %v2014 = vadd.f32 %v1837, %v2013
        %v2015 = vpop.f32.mrf.mxu0
        %v2016 = vpop.f32.mrf.mxu0
        %v2017 = vadd.f32 %v1840, %v2016
        %v2018 = vpop.f32.mrf.mxu0
        %2019 = vmatprep.mubr.bf16.mxu0 %v525
        %2020 = vmatmul.mubr.bf16.gmra.mxu0 %v493
        %v2021 = vpop.f32.mrf.mxu0
        %v2022 = vadd.f32 %v1845, %v2021
        %v2023 = vpop.f32.mrf.mxu0
        %v2024 = vpop.f32.mrf.mxu0
        %v2025 = vadd.f32 %v1848, %v2024
        %v2026 = vpop.f32.mrf.mxu0
        %2027 = vmatprep.mubr.bf16.mxu0 %v527
        %2028 = vmatmul.mubr.bf16.gmra.mxu0 %v501
        %v2029 = vpop.f32.mrf.mxu0
        %v2030 = vadd.f32 %v1853, %v2029
        %v2031 = vpop.f32.mrf.mxu0
        %v2032 = vpop.f32.mrf.mxu0
        %v2033 = vadd.f32 %v1856, %v2032
        %v2034 = vpop.f32.mrf.mxu0
        %2035 = vmatprep.mubr.bf16.mxu0 %v529
        %2036 = vmatmul.mubr.bf16.gmra.mxu0 %v509
        %v2037 = vpop.f32.mrf.mxu0
        %v2038 = vadd.f32 %v1861, %v2037
        %v2039 = vpop.f32.mrf.mxu0
        %v2040 = vpop.f32.mrf.mxu0
        %v2041 = vadd.f32 %v1864, %v2040
        %v2042 = vpop.f32.mrf.mxu0
        %2043 = vmatprep.mubr.bf16.mxu0 %v963
        %2044 = vmatmul.mubr.bf16.gmra.mxu0 %v959
        %v2045 = vpop.f32.mrf.mxu0
        %v2046 = vadd.f32 %v1869, %v2045
        %v2047 = vpop.f32.mrf.mxu0
        %v2048 = vpop.f32.mrf.mxu0
        %v2049 = vadd.f32 %v1872, %v2048
        %v2050 = vpop.f32.mrf.mxu0
        %2051 = vmatprep.mubr.bf16.mxu0 %v798
        %2052 = vmatmul.mubr.bf16.gmra.mxu0 %v796
        %v2053 = vpop.f32.mrf.mxu0
        %v2054 = vadd.f32 %v1877, %v2053
        %v2055 = vpop.f32.mrf.mxu0
        %v2056 = vpop.f32.mrf.mxu0
        %v2057 = vadd.f32 %v1880, %v2056
        %v2058 = vpop.f32.mrf.mxu0
        %2059 = vmatprep.mubr.bf16.mxu0 %v816
        %2060 = vmatmul.mubr.bf16.gmra.mxu0 %v814
        %v2061 = vpop.f32.mrf.mxu0
        %v2062 = vadd.f32 %v1885, %v2061
        %v2063 = vpop.f32.mrf.mxu0
        %v2064 = vpop.f32.mrf.mxu0
        %v2065 = vadd.f32 %v1888, %v2064
        %v2066 = vpop.f32.mrf.mxu0
        %2067 = vmatprep.mubr.bf16.mxu0 %v834
        %2068 = vmatmul.mubr.bf16.gmra.mxu0 %v832
        %v2069 = vpop.f32.mrf.mxu0
        %v2070 = vadd.f32 %v1893, %v2069
        %v2071 = vpop.f32.mrf.mxu0
        %v2072 = vpop.f32.mrf.mxu0
        %v2073 = vadd.f32 %v1896, %v2072
        %v2074 = vpop.f32.mrf.mxu0
        %2075 = vmatprep.mubr.bf16.mxu0 %v852
        %2076 = vmatmul.mubr.bf16.gmra.mxu0 %v850
        %v2077 = vpop.f32.mrf.mxu0
        %v2078 = vadd.f32 %v1901, %v2077
        %v2079 = vpop.f32.mrf.mxu0
        %v2080 = vpop.f32.mrf.mxu0
        %v2081 = vadd.f32 %v1904, %v2080
        %v2082 = vpop.f32.mrf.mxu0
        %2083 = vdwg.mxu0
        %2084 = vmatprep.subr.bf16.mxu0 0
        %2085 = vmatpush1.bf16.msra.mxu0 %v1464
        %2086 = vmatprep.subr.bf16.mxu0 0
        %2087 = vmatpush1.bf16.msra.mxu0 %v1463
        %2088 = vmatprep.subr.bf16.mxu0 0
        %2089 = vmatpush1.bf16.msra.mxu0 %v1462
        %2090 = vmatprep.subr.bf16.mxu0 0
        %2091 = vmatpush1.bf16.msra.mxu0 %v1461
        %2092 = vmatprep.subr.bf16.mxu0 0
        %2093 = vmatpush1.bf16.msra.mxu0 %v1460
        %2094 = vmatprep.subr.bf16.mxu0 0
        %2095 = vmatpush1.bf16.msra.mxu0 %v1459
        %2096 = vmatprep.subr.bf16.mxu0 0
        %2097 = vmatpush1.bf16.msra.mxu0 %v1458
        %2098 = vmatprep.subr.bf16.mxu0 0
        %2099 = vmatpush1.bf16.msra.mxu0 %v1457
        %2100 = vmatprep.subr.bf16.mxu0 0
        %2101 = vmatpush2.bf16.msra.mxu0 %v1472
        %2102 = vmatprep.subr.bf16.mxu0 0
        %2103 = vmatpush2.bf16.msra.mxu0 %v1471
        %2104 = vmatprep.subr.bf16.mxu0 0
        %2105 = vmatpush2.bf16.msra.mxu0 %v1470
        %2106 = vmatprep.subr.bf16.mxu0 0
        %2107 = vmatpush2.bf16.msra.mxu0 %v1469
        %2108 = vmatprep.subr.bf16.mxu0 0
        %2109 = vmatpush2.bf16.msra.mxu0 %v1468
        %2110 = vmatprep.subr.bf16.mxu0 0
        %2111 = vmatpush2.bf16.msra.mxu0 %v1467
        %2112 = vmatprep.subr.bf16.mxu0 0
        %2113 = vmatpush2.bf16.msra.mxu0 %v1466
        %2114 = vmatprep.subr.bf16.mxu0 0
        %2115 = vmatpush2.bf16.msra.mxu0 %v1465
        %2116 = vmatprep.mubr.bf16.mxu0 %v485
        %2117 = vmatmul.mubr.bf16.gmra.mxu0 %v433
        %v2118 = vpop.f32.mrf.mxu0
        %v2119 = vadd.f32 %v1942, %v2118
        %v2120 = vpop.f32.mrf.mxu0
        %v2121 = vpop.f32.mrf.mxu0
        %v2122 = vadd.f32 %v1945, %v2121
        %v2123 = vpop.f32.mrf.mxu0
        %2124 = vmatprep.mubr.bf16.mxu0 %v493
        %2125 = vmatmul.mubr.bf16.gmra.mxu0 %v441
        %v2126 = vpop.f32.mrf.mxu0
        %v2127 = vadd.f32 %v1950, %v2126
        %v2128 = vpop.f32.mrf.mxu0
        %v2129 = vpop.f32.mrf.mxu0
        %v2130 = vadd.f32 %v1953, %v2129
        %v2131 = vpop.f32.mrf.mxu0
        %2132 = vmatprep.mubr.bf16.mxu0 %v501
        %2133 = vmatmul.mubr.bf16.gmra.mxu0 %v449
        %v2134 = vpop.f32.mrf.mxu0
        %v2135 = vadd.f32 %v1958, %v2134
        %v2136 = vpop.f32.mrf.mxu0
        %v2137 = vpop.f32.mrf.mxu0
        %v2138 = vadd.f32 %v1961, %v2137
        %v2139 = vpop.f32.mrf.mxu0
        %2140 = vmatprep.mubr.bf16.mxu0 %v509
        %2141 = vmatmul.mubr.bf16.gmra.mxu0 %v457
        %v2142 = vpop.f32.mrf.mxu0
        %v2143 = vadd.f32 %v1966, %v2142
        %v2144 = vpop.f32.mrf.mxu0
        %v2145 = vpop.f32.mrf.mxu0
        %v2146 = vadd.f32 %v1969, %v2145
        %v2147 = vpop.f32.mrf.mxu0
        %2148 = vmatprep.mubr.bf16.mxu0 %v959
        %2149 = vmatmul.mubr.bf16.gmra.mxu0 %v955
        %v2150 = vpop.f32.mrf.mxu0
        %v2151 = vadd.f32 %v1974, %v2150
        %v2152 = vpop.f32.mrf.mxu0
        %v2153 = vpop.f32.mrf.mxu0
        %v2154 = vadd.f32 %v1977, %v2153
        %v2155 = vpop.f32.mrf.mxu0
        %2156 = vmatprep.mubr.bf16.mxu0 %v796
        %2157 = vmatmul.mubr.bf16.gmra.mxu0 %v794
        %v2158 = vpop.f32.mrf.mxu0
        %v2159 = vadd.f32 %v1982, %v2158
        %v2160 = vpop.f32.mrf.mxu0
        %v2161 = vpop.f32.mrf.mxu0
        %v2162 = vadd.f32 %v1985, %v2161
        %v2163 = vpop.f32.mrf.mxu0
        %2164 = vmatprep.mubr.bf16.mxu0 %v814
        %2165 = vmatmul.mubr.bf16.gmra.mxu0 %v812
        %v2166 = vpop.f32.mrf.mxu0
        %v2167 = vadd.f32 %v1990, %v2166
        %v2168 = vpop.f32.mrf.mxu0
        %v2169 = vpop.f32.mrf.mxu0
        %v2170 = vadd.f32 %v1993, %v2169
        %v2171 = vpop.f32.mrf.mxu0
        %2172 = vmatprep.mubr.bf16.mxu0 %v832
        %2173 = vmatmul.mubr.bf16.gmra.mxu0 %v830
        %v2174 = vpop.f32.mrf.mxu0
        %v2175 = vadd.f32 %v1998, %v2174
        %v2176 = vpop.f32.mrf.mxu0
        %v2177 = vpop.f32.mrf.mxu0
        %v2178 = vadd.f32 %v2001, %v2177
        %v2179 = vpop.f32.mrf.mxu0
        %2180 = vmatprep.mubr.bf16.mxu0 %v850
        %2181 = vmatmul.mubr.bf16.gmra.mxu0 %v848
        %v2182 = vpop.f32.mrf.mxu0
        %v2183 = vadd.f32 %v2006, %v2182
        %v2184 = vpop.f32.mrf.mxu0
        %v2185 = vpop.f32.mrf.mxu0
        %v2186 = vadd.f32 %v2009, %v2185
        %v2187 = vpop.f32.mrf.mxu0
        %2188 = vmatprep.mubr.bf16.mxu0 %v710
        %2189 = vmatmul.mubr.bf16.gmra.mxu0 %v658
        %v2190 = vpop.f32.mrf.mxu0
        %v2191 = vadd.f32 %v2014, %v2190
        %v2192 = vpop.f32.mrf.mxu0
        %v2193 = vpop.f32.mrf.mxu0
        %v2194 = vadd.f32 %v2017, %v2193
        %v2195 = vpop.f32.mrf.mxu0
        %2196 = vmatprep.mubr.bf16.mxu0 %v718
        %2197 = vmatmul.mubr.bf16.gmra.mxu0 %v666
        %v2198 = vpop.f32.mrf.mxu0
        %v2199 = vadd.f32 %v2022, %v2198
        %v2200 = vpop.f32.mrf.mxu0
        %v2201 = vpop.f32.mrf.mxu0
        %v2202 = vadd.f32 %v2025, %v2201
        %v2203 = vpop.f32.mrf.mxu0
        %2204 = vmatprep.mubr.bf16.mxu0 %v726
        %2205 = vmatmul.mubr.bf16.gmra.mxu0 %v674
        %v2206 = vpop.f32.mrf.mxu0
        %v2207 = vadd.f32 %v2030, %v2206
        %v2208 = vpop.f32.mrf.mxu0
        %v2209 = vpop.f32.mrf.mxu0
        %v2210 = vadd.f32 %v2033, %v2209
        %v2211 = vpop.f32.mrf.mxu0
        %2212 = vmatprep.mubr.bf16.mxu0 %v734
        %2213 = vmatmul.mubr.bf16.gmra.mxu0 %v682
        %v2214 = vpop.f32.mrf.mxu0
        %v2215 = vadd.f32 %v2038, %v2214
        %v2216 = vpop.f32.mrf.mxu0
        %v2217 = vpop.f32.mrf.mxu0
        %v2218 = vadd.f32 %v2041, %v2217
        %v2219 = vpop.f32.mrf.mxu0
        %2220 = vmatprep.mubr.bf16.mxu0 %v971
        %2221 = vmatmul.mubr.bf16.gmra.mxu0 %v967
        %v2222 = vpop.f32.mrf.mxu0
        %v2223 = vadd.f32 %v2046, %v2222
        %v2224 = vpop.f32.mrf.mxu0
        %v2225 = vpop.f32.mrf.mxu0
        %v2226 = vadd.f32 %v2049, %v2225
        %v2227 = vpop.f32.mrf.mxu0
        %2228 = vmatprep.mubr.bf16.mxu0 %v895
        %2229 = vmatmul.mubr.bf16.gmra.mxu0 %v893
        %v2230 = vpop.f32.mrf.mxu0
        %v2231 = vadd.f32 %v2054, %v2230
        %v2232 = vpop.f32.mrf.mxu0
        %v2233 = vpop.f32.mrf.mxu0
        %v2234 = vadd.f32 %v2057, %v2233
        %v2235 = vpop.f32.mrf.mxu0
        %2236 = vmatprep.mubr.bf16.mxu0 %v901
        %2237 = vmatmul.mubr.bf16.gmra.mxu0 %v899
        %v2238 = vpop.f32.mrf.mxu0
        %v2239 = vadd.f32 %v2062, %v2238
        %v2240 = vpop.f32.mrf.mxu0
        %v2241 = vpop.f32.mrf.mxu0
        %v2242 = vadd.f32 %v2065, %v2241
        %v2243 = vpop.f32.mrf.mxu0
        %2244 = vmatprep.mubr.bf16.mxu0 %v907
        %2245 = vmatmul.mubr.bf16.gmra.mxu0 %v905
        %v2246 = vpop.f32.mrf.mxu0
        %v2247 = vadd.f32 %v2070, %v2246
        %v2248 = vpop.f32.mrf.mxu0
        %v2249 = vpop.f32.mrf.mxu0
        %v2250 = vadd.f32 %v2073, %v2249
        %v2251 = vpop.f32.mrf.mxu0
        %2252 = vmatprep.mubr.bf16.mxu0 %v913
        %2253 = vmatmul.mubr.bf16.gmra.mxu0 %v911
        %v2254 = vpop.f32.mrf.mxu0
        %v2255 = vadd.f32 %v2078, %v2254
        %v2256 = vpop.f32.mrf.mxu0
        %v2257 = vpop.f32.mrf.mxu0
        %v2258 = vadd.f32 %v2081, %v2257
        %v2259 = vpop.f32.mrf.mxu0
        %2260 = vdwg.mxu0
        %2261 = vmatprep.subr.bf16.mxu0 0
        %2262 = vmatpush1.bf16.msra.mxu0 %v1480
        %2263 = vmatprep.subr.bf16.mxu0 0
        %2264 = vmatpush1.bf16.msra.mxu0 %v1479
        %2265 = vmatprep.subr.bf16.mxu0 0
        %2266 = vmatpush1.bf16.msra.mxu0 %v1478
        %2267 = vmatprep.subr.bf16.mxu0 0
        %2268 = vmatpush1.bf16.msra.mxu0 %v1477
        %2269 = vmatprep.subr.bf16.mxu0 0
        %2270 = vmatpush1.bf16.msra.mxu0 %v1476
        %2271 = vmatprep.subr.bf16.mxu0 0
        %2272 = vmatpush1.bf16.msra.mxu0 %v1475
        %2273 = vmatprep.subr.bf16.mxu0 0
        %2274 = vmatpush1.bf16.msra.mxu0 %v1474
        %2275 = vmatprep.subr.bf16.mxu0 0
        %2276 = vmatpush1.bf16.msra.mxu0 %v1473
        %2277 = vmatprep.subr.bf16.mxu0 0
        %2278 = vmatpush2.bf16.msra.mxu0 0
        %2279 = vmatprep.subr.bf16.mxu0 0
        %2280 = vmatpush2.bf16.msra.mxu0 0
        %2281 = vmatprep.subr.bf16.mxu0 0
        %2282 = vmatpush2.bf16.msra.mxu0 0
        %2283 = vmatprep.subr.bf16.mxu0 0
        %2284 = vmatpush2.bf16.msra.mxu0 0
        %2285 = vmatprep.subr.bf16.mxu0 0
        %2286 = vmatpush2.bf16.msra.mxu0 0
        %2287 = vmatprep.subr.bf16.mxu0 0
        %2288 = vmatpush2.bf16.msra.mxu0 0
        %2289 = vmatprep.subr.bf16.mxu0 0
        %2290 = vmatpush2.bf16.msra.mxu0 0
        %2291 = vmatprep.subr.bf16.mxu0 0
        %2292 = vmatpush2.bf16.msra.mxu0 0
        %2293 = vmatprep.mubr.bf16.mxu0 0
        %2294 = vmatmul.mubr.bf16.gmra.mxu0 %v523
        %v2295 = vpop.f32.mrf.mxu0
        %v2296 = vadd.f32 %v2119, %v2295
        %v2297 = vpop.f32.mrf.mxu0
        %v2298 = vpop.f32.mrf.mxu0
        %v2299 = vadd.f32 %v2122, %v2298
        %v2300 = vpop.f32.mrf.mxu0
        %2301 = vmatprep.mubr.bf16.mxu0 0
        %2302 = vmatmul.mubr.bf16.gmra.mxu0 %v525
        %v2303 = vpop.f32.mrf.mxu0
        %v2304 = vadd.f32 %v2127, %v2303
        %v2305 = vpop.f32.mrf.mxu0
        %v2306 = vpop.f32.mrf.mxu0
        %v2307 = vadd.f32 %v2130, %v2306
        %v2308 = vpop.f32.mrf.mxu0
        %2309 = vmatprep.mubr.bf16.mxu0 0
        %2310 = vmatmul.mubr.bf16.gmra.mxu0 %v527
        %v2311 = vpop.f32.mrf.mxu0
        %v2312 = vadd.f32 %v2135, %v2311
        %v2313 = vpop.f32.mrf.mxu0
        %v2314 = vpop.f32.mrf.mxu0
        %v2315 = vadd.f32 %v2138, %v2314
        %v2316 = vpop.f32.mrf.mxu0
        %2317 = vmatprep.mubr.bf16.mxu0 0
        %2318 = vmatmul.mubr.bf16.gmra.mxu0 %v529
        %v2319 = vpop.f32.mrf.mxu0
        %v2320 = vadd.f32 %v2143, %v2319
        %v2321 = vpop.f32.mrf.mxu0
        %v2322 = vpop.f32.mrf.mxu0
        %v2323 = vadd.f32 %v2146, %v2322
        %v2324 = vpop.f32.mrf.mxu0
        %2325 = vmatprep.mubr.bf16.mxu0 0
        %2326 = vmatmul.mubr.bf16.gmra.mxu0 %v963
        %v2327 = vpop.f32.mrf.mxu0
        %v2328 = vadd.f32 %v2151, %v2327
        %v2329 = vpop.f32.mrf.mxu0
        %v2330 = vpop.f32.mrf.mxu0
        %v2331 = vadd.f32 %v2154, %v2330
        %v2332 = vpop.f32.mrf.mxu0
        %2333 = vmatprep.mubr.bf16.mxu0 0
        %2334 = vmatmul.mubr.bf16.gmra.mxu0 %v798
        %v2335 = vpop.f32.mrf.mxu0
        %v2336 = vadd.f32 %v2159, %v2335
        %v2337 = vpop.f32.mrf.mxu0
        %v2338 = vpop.f32.mrf.mxu0
        %v2339 = vadd.f32 %v2162, %v2338
        %v2340 = vpop.f32.mrf.mxu0
        %2341 = vmatprep.mubr.bf16.mxu0 0
        %2342 = vmatmul.mubr.bf16.gmra.mxu0 %v816
        %v2343 = vpop.f32.mrf.mxu0
        %v2344 = vadd.f32 %v2167, %v2343
        %v2345 = vpop.f32.mrf.mxu0
        %v2346 = vpop.f32.mrf.mxu0
        %v2347 = vadd.f32 %v2170, %v2346
        %v2348 = vpop.f32.mrf.mxu0
        %2349 = vmatprep.mubr.bf16.mxu0 0
        %2350 = vmatmul.mubr.bf16.gmra.mxu0 %v834
        %v2351 = vpop.f32.mrf.mxu0
        %v2352 = vadd.f32 %v2175, %v2351
        %v2353 = vpop.f32.mrf.mxu0
        %v2354 = vpop.f32.mrf.mxu0
        %v2355 = vadd.f32 %v2178, %v2354
        %v2356 = vpop.f32.mrf.mxu0
        %2357 = vmatprep.mubr.bf16.mxu0 0
        %2358 = vmatmul.mubr.bf16.gmra.mxu0 %v852
        %v2359 = vpop.f32.mrf.mxu0
        %v2360 = vadd.f32 %v2183, %v2359
        %v2361 = vpop.f32.mrf.mxu0
        %v2362 = vpop.f32.mrf.mxu0
        %v2363 = vadd.f32 %v2186, %v2362
        %v2364 = vpop.f32.mrf.mxu0
        %2365 = vmatprep.mubr.bf16.mxu0 0
        %2366 = vmatmul.mubr.bf16.gmra.mxu0 %v747
        %v2367 = vpop.f32.mrf.mxu0
        %v2368 = vadd.f32 %v2191, %v2367
        %v2369 = vpop.f32.mrf.mxu0
        %v2370 = vpop.f32.mrf.mxu0
        %v2371 = vadd.f32 %v2194, %v2370
        %v2372 = vpop.f32.mrf.mxu0
        %2373 = vmatprep.mubr.bf16.mxu0 0
        %2374 = vmatmul.mubr.bf16.gmra.mxu0 %v749
        %v2375 = vpop.f32.mrf.mxu0
        %v2376 = vadd.f32 %v2199, %v2375
        %v2377 = vpop.f32.mrf.mxu0
        %v2378 = vpop.f32.mrf.mxu0
        %v2379 = vadd.f32 %v2202, %v2378
        %v2380 = vpop.f32.mrf.mxu0
        %2381 = vmatprep.mubr.bf16.mxu0 0
        %2382 = vmatmul.mubr.bf16.gmra.mxu0 %v751
        %v2383 = vpop.f32.mrf.mxu0
        %v2384 = vadd.f32 %v2207, %v2383
        %v2385 = vpop.f32.mrf.mxu0
        %v2386 = vpop.f32.mrf.mxu0
        %v2387 = vadd.f32 %v2210, %v2386
        %v2388 = vpop.f32.mrf.mxu0
        %2389 = vmatprep.mubr.bf16.mxu0 0
        %2390 = vmatmul.mubr.bf16.gmra.mxu0 %v753
        %v2391 = vpop.f32.mrf.mxu0
        %v2392 = vadd.f32 %v2215, %v2391
        %v2393 = vpop.f32.mrf.mxu0
        %v2394 = vpop.f32.mrf.mxu0
        %v2395 = vadd.f32 %v2218, %v2394
        %v2396 = vpop.f32.mrf.mxu0
        %2397 = vmatprep.mubr.bf16.mxu0 0
        %2398 = vmatmul.mubr.bf16.gmra.mxu0 %v975
        %v2399 = vpop.f32.mrf.mxu0
        %v2400 = vadd.f32 %v2223, %v2399
        %v2401 = vpop.f32.mrf.mxu0
        %v2402 = vpop.f32.mrf.mxu0
        %v2403 = vadd.f32 %v2226, %v2402
        %v2404 = vpop.f32.mrf.mxu0
        %2405 = vmatprep.mubr.bf16.mxu0 0
        %2406 = vmatmul.mubr.bf16.gmra.mxu0 %v897
        %v2407 = vpop.f32.mrf.mxu0
        %v2408 = vadd.f32 %v2231, %v2407
        %v2409 = vpop.f32.mrf.mxu0
        %v2410 = vpop.f32.mrf.mxu0
        %v2411 = vadd.f32 %v2234, %v2410
        %v2412 = vpop.f32.mrf.mxu0
        %2413 = vmatprep.mubr.bf16.mxu0 0
        %2414 = vmatmul.mubr.bf16.gmra.mxu0 %v903
        %v2415 = vpop.f32.mrf.mxu0
        %v2416 = vadd.f32 %v2239, %v2415
        %v2417 = vpop.f32.mrf.mxu0
        %v2418 = vpop.f32.mrf.mxu0
        %v2419 = vadd.f32 %v2242, %v2418
        %v2420 = vpop.f32.mrf.mxu0
        %2421 = vmatprep.mubr.bf16.mxu0 0
        %2422 = vmatmul.mubr.bf16.gmra.mxu0 %v909
        %v2423 = vpop.f32.mrf.mxu0
        %v2424 = vadd.f32 %v2247, %v2423
        %v2425 = vpop.f32.mrf.mxu0
        %v2426 = vpop.f32.mrf.mxu0
        %v2427 = vadd.f32 %v2250, %v2426
        %v2428 = vpop.f32.mrf.mxu0
        %2429 = vmatprep.mubr.bf16.mxu0 0
        %2430 = vmatmul.mubr.bf16.gmra.mxu0 %v915
        %v2431 = vpop.f32.mrf.mxu0
        %v2432 = vadd.f32 %v2255, %v2431
        %v2433 = vpop.f32.mrf.mxu0
        %v2434 = vpop.f32.mrf.mxu0
        %v2435 = vadd.f32 %v2258, %v2434
        %v2436 = vpop.f32.mrf.mxu0
        %2437 = vdwg.mxu0
        %v2438 = vlaneseq
        %v2439 = vshrl.u32 %v2438, 7
        %v2440 = vadd.s32 %v2439, 8
        %v2441 = vadd.s32 %v2439, 16
        %v2442 = vadd.s32 %v2439, 24
        %v2443 = vadd.s32 %v2439, 32
        %v2444 = vadd.s32 %v2439, 40
        %v2445 = vadd.s32 %v2439, 48
        %v2446 = vadd.s32 %v2439, 56
        %v2447 = vadd.s32 %v2439, 64
        %v2448 = vadd.s32 %v2439, 72
        %v2449 = vadd.s32 %v2439, 80
        %v2450 = vadd.s32 %v2439, 88
        %v2451 = vadd.s32 %v2439, 96
        %v2452 = vadd.s32 %v2439, 104
        %v2453 = vadd.s32 %v2439, 112
        %v2454 = vadd.s32 %v2439, 120
        %v2455 = vadd.s32 %v2439, 128
        %v2456 = vadd.s32 %v2439, 136
        %v2457 = vadd.s32 %v2439, 144
        %v2458 = vadd.s32 %v2439, 152
        %v2459 = vadd.s32 %v2439, 160
        %v2460 = vadd.s32 %v2439, 168
        %v2461 = vadd.s32 %v2439, 176
        %v2462 = vadd.s32 %v2439, 184
        %v2463 = vadd.s32 %v2439, 192
        %v2464 = vadd.s32 %v2439, 200
        %v2465 = vadd.s32 %v2439, 208
        %v2466 = vadd.s32 %v2439, 216
        %v2467 = vadd.s32 %v2439, 224
        %v2468 = vadd.s32 %v2439, 232
        %v2469 = vadd.s32 %v2439, 240
        %v2470 = vadd.s32 %v2439, 248
        %v2471 = vadd.s32 %v2439, 256
        %v2472 = vadd.s32 %v2439, 264
        %v2473 = vadd.s32 %v2439, 272
        %v2474 = vadd.s32 %v2439, 280
        %vm2475 = vcmp.lt.s32.totalorder %v2439, 0
        %v2476 = vsub.s32 0, %v2439
        %v2477 = vsel %vm2475, %v2476, %v2439
        %v2478 = vmul.u32.u64.compose %v2477, 3817748708
        %v2479 = vextract.low.u32 %v2478
        %v2480 = vextract.high.u32 %v2478
        %v2481 = vshrl.u32 %v2480, 3
        %v2482 = vmul.u32 %v2481, 9
        %v2483 = vsub.s32 %v2477, %v2482
        %v2484 = vsub.s32 0, %v2483
        %v2485 = vsel %vm2475, %v2484, %v2483
        %vm2486 = vcmp.lt.s32.totalorder %v2440, 0
        %v2487 = vsub.s32 0, %v2440
        %v2488 = vsel %vm2486, %v2487, %v2440
        %v2489 = vmul.u32.u64.compose %v2488, 3817748708
        %v2490 = vextract.low.u32 %v2489
        %v2491 = vextract.high.u32 %v2489
        %v2492 = vshrl.u32 %v2491, 3
        %v2493 = vmul.u32 %v2492, 9
        %v2494 = vsub.s32 %v2488, %v2493
        %v2495 = vsub.s32 0, %v2494
        %v2496 = vsel %vm2486, %v2495, %v2494
        %vm2497 = vcmp.lt.s32.totalorder %v2441, 0
        %v2498 = vsub.s32 0, %v2441
        %v2499 = vsel %vm2497, %v2498, %v2441
        %v2500 = vmul.u32.u64.compose %v2499, 3817748708
        %v2501 = vextract.low.u32 %v2500
        %v2502 = vextract.high.u32 %v2500
        %v2503 = vshrl.u32 %v2502, 3
        %v2504 = vmul.u32 %v2503, 9
        %v2505 = vsub.s32 %v2499, %v2504
        %v2506 = vsub.s32 0, %v2505
        %v2507 = vsel %vm2497, %v2506, %v2505
        %vm2508 = vcmp.lt.s32.totalorder %v2442, 0
        %v2509 = vsub.s32 0, %v2442
        %v2510 = vsel %vm2508, %v2509, %v2442
        %v2511 = vmul.u32.u64.compose %v2510, 3817748708
        %v2512 = vextract.low.u32 %v2511
        %v2513 = vextract.high.u32 %v2511
        %v2514 = vshrl.u32 %v2513, 3
        %v2515 = vmul.u32 %v2514, 9
        %v2516 = vsub.s32 %v2510, %v2515
        %v2517 = vsub.s32 0, %v2516
        %v2518 = vsel %vm2508, %v2517, %v2516
        %vm2519 = vcmp.lt.s32.totalorder %v2443, 0
        %v2520 = vsub.s32 0, %v2443
        %v2521 = vsel %vm2519, %v2520, %v2443
        %v2522 = vmul.u32.u64.compose %v2521, 3817748708
        %v2523 = vextract.low.u32 %v2522
        %v2524 = vextract.high.u32 %v2522
        %v2525 = vshrl.u32 %v2524, 3
        %v2526 = vmul.u32 %v2525, 9
        %v2527 = vsub.s32 %v2521, %v2526
        %v2528 = vsub.s32 0, %v2527
        %v2529 = vsel %vm2519, %v2528, %v2527
        %vm2530 = vcmp.lt.s32.totalorder %v2444, 0
        %v2531 = vsub.s32 0, %v2444
        %v2532 = vsel %vm2530, %v2531, %v2444
        %v2533 = vmul.u32.u64.compose %v2532, 3817748708
        %v2534 = vextract.low.u32 %v2533
        %v2535 = vextract.high.u32 %v2533
        %v2536 = vshrl.u32 %v2535, 3
        %v2537 = vmul.u32 %v2536, 9
        %v2538 = vsub.s32 %v2532, %v2537
        %v2539 = vsub.s32 0, %v2538
        %v2540 = vsel %vm2530, %v2539, %v2538
        %vm2541 = vcmp.lt.s32.totalorder %v2445, 0
        %v2542 = vsub.s32 0, %v2445
        %v2543 = vsel %vm2541, %v2542, %v2445
        %v2544 = vmul.u32.u64.compose %v2543, 3817748708
        %v2545 = vextract.low.u32 %v2544
        %v2546 = vextract.high.u32 %v2544
        %v2547 = vshrl.u32 %v2546, 3
        %v2548 = vmul.u32 %v2547, 9
        %v2549 = vsub.s32 %v2543, %v2548
        %v2550 = vsub.s32 0, %v2549
        %v2551 = vsel %vm2541, %v2550, %v2549
        %vm2552 = vcmp.lt.s32.totalorder %v2446, 0
        %v2553 = vsub.s32 0, %v2446
        %v2554 = vsel %vm2552, %v2553, %v2446
        %v2555 = vmul.u32.u64.compose %v2554, 3817748708
        %v2556 = vextract.low.u32 %v2555
        %v2557 = vextract.high.u32 %v2555
        %v2558 = vshrl.u32 %v2557, 3
        %v2559 = vmul.u32 %v2558, 9
        %v2560 = vsub.s32 %v2554, %v2559
        %v2561 = vsub.s32 0, %v2560
        %v2562 = vsel %vm2552, %v2561, %v2560
        %vm2563 = vcmp.lt.s32.totalorder %v2447, 0
        %v2564 = vsub.s32 0, %v2447
        %v2565 = vsel %vm2563, %v2564, %v2447
        %v2566 = vmul.u32.u64.compose %v2565, 3817748708
        %v2567 = vextract.low.u32 %v2566
        %v2568 = vextract.high.u32 %v2566
        %v2569 = vshrl.u32 %v2568, 3
        %v2570 = vmul.u32 %v2569, 9
        %v2571 = vsub.s32 %v2565, %v2570
        %v2572 = vsub.s32 0, %v2571
        %v2573 = vsel %vm2563, %v2572, %v2571
        %vm2574 = vcmp.lt.s32.totalorder %v2448, 0
        %v2575 = vsub.s32 0, %v2448
        %v2576 = vsel %vm2574, %v2575, %v2448
        %v2577 = vmul.u32.u64.compose %v2576, 3817748708
        %v2578 = vextract.low.u32 %v2577
        %v2579 = vextract.high.u32 %v2577
        %v2580 = vshrl.u32 %v2579, 3
        %v2581 = vmul.u32 %v2580, 9
        %v2582 = vsub.s32 %v2576, %v2581
        %v2583 = vsub.s32 0, %v2582
        %v2584 = vsel %vm2574, %v2583, %v2582
        %vm2585 = vcmp.lt.s32.totalorder %v2449, 0
        %v2586 = vsub.s32 0, %v2449
        %v2587 = vsel %vm2585, %v2586, %v2449
        %v2588 = vmul.u32.u64.compose %v2587, 3817748708
        %v2589 = vextract.low.u32 %v2588
        %v2590 = vextract.high.u32 %v2588
        %v2591 = vshrl.u32 %v2590, 3
        %v2592 = vmul.u32 %v2591, 9
        %v2593 = vsub.s32 %v2587, %v2592
        %v2594 = vsub.s32 0, %v2593
        %v2595 = vsel %vm2585, %v2594, %v2593
        %vm2596 = vcmp.lt.s32.totalorder %v2450, 0
        %v2597 = vsub.s32 0, %v2450
        %v2598 = vsel %vm2596, %v2597, %v2450
        %v2599 = vmul.u32.u64.compose %v2598, 3817748708
        %v2600 = vextract.low.u32 %v2599
        %v2601 = vextract.high.u32 %v2599
        %v2602 = vshrl.u32 %v2601, 3
        %v2603 = vmul.u32 %v2602, 9
        %v2604 = vsub.s32 %v2598, %v2603
        %v2605 = vsub.s32 0, %v2604
        %v2606 = vsel %vm2596, %v2605, %v2604
        %vm2607 = vcmp.lt.s32.totalorder %v2451, 0
        %v2608 = vsub.s32 0, %v2451
        %v2609 = vsel %vm2607, %v2608, %v2451
        %v2610 = vmul.u32.u64.compose %v2609, 3817748708
        %v2611 = vextract.low.u32 %v2610
        %v2612 = vextract.high.u32 %v2610
        %v2613 = vshrl.u32 %v2612, 3
        %v2614 = vmul.u32 %v2613, 9
        %v2615 = vsub.s32 %v2609, %v2614
        %v2616 = vsub.s32 0, %v2615
        %v2617 = vsel %vm2607, %v2616, %v2615
        %vm2618 = vcmp.lt.s32.totalorder %v2452, 0
        %v2619 = vsub.s32 0, %v2452
        %v2620 = vsel %vm2618, %v2619, %v2452
        %v2621 = vmul.u32.u64.compose %v2620, 3817748708
        %v2622 = vextract.low.u32 %v2621
        %v2623 = vextract.high.u32 %v2621
        %v2624 = vshrl.u32 %v2623, 3
        %v2625 = vmul.u32 %v2624, 9
        %v2626 = vsub.s32 %v2620, %v2625
        %v2627 = vsub.s32 0, %v2626
        %v2628 = vsel %vm2618, %v2627, %v2626
        %vm2629 = vcmp.lt.s32.totalorder %v2453, 0
        %v2630 = vsub.s32 0, %v2453
        %v2631 = vsel %vm2629, %v2630, %v2453
        %v2632 = vmul.u32.u64.compose %v2631, 3817748708
        %v2633 = vextract.low.u32 %v2632
        %v2634 = vextract.high.u32 %v2632
        %v2635 = vshrl.u32 %v2634, 3
        %v2636 = vmul.u32 %v2635, 9
        %v2637 = vsub.s32 %v2631, %v2636
        %v2638 = vsub.s32 0, %v2637
        %v2639 = vsel %vm2629, %v2638, %v2637
        %vm2640 = vcmp.lt.s32.totalorder %v2454, 0
        %v2641 = vsub.s32 0, %v2454
        %v2642 = vsel %vm2640, %v2641, %v2454
        %v2643 = vmul.u32.u64.compose %v2642, 3817748708
        %v2644 = vextract.low.u32 %v2643
        %v2645 = vextract.high.u32 %v2643
        %v2646 = vshrl.u32 %v2645, 3
        %v2647 = vmul.u32 %v2646, 9
        %v2648 = vsub.s32 %v2642, %v2647
        %v2649 = vsub.s32 0, %v2648
        %v2650 = vsel %vm2640, %v2649, %v2648
        %vm2651 = vcmp.lt.s32.totalorder %v2455, 0
        %v2652 = vsub.s32 0, %v2455
        %v2653 = vsel %vm2651, %v2652, %v2455
        %v2654 = vmul.u32.u64.compose %v2653, 3817748708
        %v2655 = vextract.low.u32 %v2654
        %v2656 = vextract.high.u32 %v2654
        %v2657 = vshrl.u32 %v2656, 3
        %v2658 = vmul.u32 %v2657, 9
        %v2659 = vsub.s32 %v2653, %v2658
        %v2660 = vsub.s32 0, %v2659
        %v2661 = vsel %vm2651, %v2660, %v2659
        %vm2662 = vcmp.lt.s32.totalorder %v2456, 0
        %v2663 = vsub.s32 0, %v2456
        %v2664 = vsel %vm2662, %v2663, %v2456
        %v2665 = vmul.u32.u64.compose %v2664, 3817748708
        %v2666 = vextract.low.u32 %v2665
        %v2667 = vextract.high.u32 %v2665
        %v2668 = vshrl.u32 %v2667, 3
        %v2669 = vmul.u32 %v2668, 9
        %v2670 = vsub.s32 %v2664, %v2669
        %v2671 = vsub.s32 0, %v2670
        %v2672 = vsel %vm2662, %v2671, %v2670
        %vm2673 = vcmp.lt.s32.totalorder %v2457, 0
        %v2674 = vsub.s32 0, %v2457
        %v2675 = vsel %vm2673, %v2674, %v2457
        %v2676 = vmul.u32.u64.compose %v2675, 3817748708
        %v2677 = vextract.low.u32 %v2676
        %v2678 = vextract.high.u32 %v2676
        %v2679 = vshrl.u32 %v2678, 3
        %v2680 = vmul.u32 %v2679, 9
        %v2681 = vsub.s32 %v2675, %v2680
        %v2682 = vsub.s32 0, %v2681
        %v2683 = vsel %vm2673, %v2682, %v2681
        %vm2684 = vcmp.lt.s32.totalorder %v2458, 0
        %v2685 = vsub.s32 0, %v2458
        %v2686 = vsel %vm2684, %v2685, %v2458
        %v2687 = vmul.u32.u64.compose %v2686, 3817748708
        %v2688 = vextract.low.u32 %v2687
        %v2689 = vextract.high.u32 %v2687
        %v2690 = vshrl.u32 %v2689, 3
        %v2691 = vmul.u32 %v2690, 9
        %v2692 = vsub.s32 %v2686, %v2691
        %v2693 = vsub.s32 0, %v2692
        %v2694 = vsel %vm2684, %v2693, %v2692
        %vm2695 = vcmp.lt.s32.totalorder %v2459, 0
        %v2696 = vsub.s32 0, %v2459
        %v2697 = vsel %vm2695, %v2696, %v2459
        %v2698 = vmul.u32.u64.compose %v2697, 3817748708
        %v2699 = vextract.low.u32 %v2698
        %v2700 = vextract.high.u32 %v2698
        %v2701 = vshrl.u32 %v2700, 3
        %v2702 = vmul.u32 %v2701, 9
        %v2703 = vsub.s32 %v2697, %v2702
        %v2704 = vsub.s32 0, %v2703
        %v2705 = vsel %vm2695, %v2704, %v2703
        %vm2706 = vcmp.lt.s32.totalorder %v2460, 0
        %v2707 = vsub.s32 0, %v2460
        %v2708 = vsel %vm2706, %v2707, %v2460
        %v2709 = vmul.u32.u64.compose %v2708, 3817748708
        %v2710 = vextract.low.u32 %v2709
        %v2711 = vextract.high.u32 %v2709
        %v2712 = vshrl.u32 %v2711, 3
        %v2713 = vmul.u32 %v2712, 9
        %v2714 = vsub.s32 %v2708, %v2713
        %v2715 = vsub.s32 0, %v2714
        %v2716 = vsel %vm2706, %v2715, %v2714
        %vm2717 = vcmp.lt.s32.totalorder %v2461, 0
        %v2718 = vsub.s32 0, %v2461
        %v2719 = vsel %vm2717, %v2718, %v2461
        %v2720 = vmul.u32.u64.compose %v2719, 3817748708
        %v2721 = vextract.low.u32 %v2720
        %v2722 = vextract.high.u32 %v2720
        %v2723 = vshrl.u32 %v2722, 3
        %v2724 = vmul.u32 %v2723, 9
        %v2725 = vsub.s32 %v2719, %v2724
        %v2726 = vsub.s32 0, %v2725
        %v2727 = vsel %vm2717, %v2726, %v2725
        %vm2728 = vcmp.lt.s32.totalorder %v2462, 0
        %v2729 = vsub.s32 0, %v2462
        %v2730 = vsel %vm2728, %v2729, %v2462
        %v2731 = vmul.u32.u64.compose %v2730, 3817748708
        %v2732 = vextract.low.u32 %v2731
        %v2733 = vextract.high.u32 %v2731
        %v2734 = vshrl.u32 %v2733, 3
        %v2735 = vmul.u32 %v2734, 9
        %v2736 = vsub.s32 %v2730, %v2735
        %v2737 = vsub.s32 0, %v2736
        %v2738 = vsel %vm2728, %v2737, %v2736
        %vm2739 = vcmp.lt.s32.totalorder %v2463, 0
        %v2740 = vsub.s32 0, %v2463
        %v2741 = vsel %vm2739, %v2740, %v2463
        %v2742 = vmul.u32.u64.compose %v2741, 3817748708
        %v2743 = vextract.low.u32 %v2742
        %v2744 = vextract.high.u32 %v2742
        %v2745 = vshrl.u32 %v2744, 3
        %v2746 = vmul.u32 %v2745, 9
        %v2747 = vsub.s32 %v2741, %v2746
        %v2748 = vsub.s32 0, %v2747
        %v2749 = vsel %vm2739, %v2748, %v2747
        %vm2750 = vcmp.lt.s32.totalorder %v2464, 0
        %v2751 = vsub.s32 0, %v2464
        %v2752 = vsel %vm2750, %v2751, %v2464
        %v2753 = vmul.u32.u64.compose %v2752, 3817748708
        %v2754 = vextract.low.u32 %v2753
        %v2755 = vextract.high.u32 %v2753
        %v2756 = vshrl.u32 %v2755, 3
        %v2757 = vmul.u32 %v2756, 9
        %v2758 = vsub.s32 %v2752, %v2757
        %v2759 = vsub.s32 0, %v2758
        %v2760 = vsel %vm2750, %v2759, %v2758
        %vm2761 = vcmp.lt.s32.totalorder %v2465, 0
        %v2762 = vsub.s32 0, %v2465
        %v2763 = vsel %vm2761, %v2762, %v2465
        %v2764 = vmul.u32.u64.compose %v2763, 3817748708
        %v2765 = vextract.low.u32 %v2764
        %v2766 = vextract.high.u32 %v2764
        %v2767 = vshrl.u32 %v2766, 3
        %v2768 = vmul.u32 %v2767, 9
        %v2769 = vsub.s32 %v2763, %v2768
        %v2770 = vsub.s32 0, %v2769
        %v2771 = vsel %vm2761, %v2770, %v2769
        %vm2772 = vcmp.lt.s32.totalorder %v2466, 0
        %v2773 = vsub.s32 0, %v2466
        %v2774 = vsel %vm2772, %v2773, %v2466
        %v2775 = vmul.u32.u64.compose %v2774, 3817748708
        %v2776 = vextract.low.u32 %v2775
        %v2777 = vextract.high.u32 %v2775
        %v2778 = vshrl.u32 %v2777, 3
        %v2779 = vmul.u32 %v2778, 9
        %v2780 = vsub.s32 %v2774, %v2779
        %v2781 = vsub.s32 0, %v2780
        %v2782 = vsel %vm2772, %v2781, %v2780
        %vm2783 = vcmp.lt.s32.totalorder %v2467, 0
        %v2784 = vsub.s32 0, %v2467
        %v2785 = vsel %vm2783, %v2784, %v2467
        %v2786 = vmul.u32.u64.compose %v2785, 3817748708
        %v2787 = vextract.low.u32 %v2786
        %v2788 = vextract.high.u32 %v2786
        %v2789 = vshrl.u32 %v2788, 3
        %v2790 = vmul.u32 %v2789, 9
        %v2791 = vsub.s32 %v2785, %v2790
        %v2792 = vsub.s32 0, %v2791
        %v2793 = vsel %vm2783, %v2792, %v2791
        %vm2794 = vcmp.lt.s32.totalorder %v2468, 0
        %v2795 = vsub.s32 0, %v2468
        %v2796 = vsel %vm2794, %v2795, %v2468
        %v2797 = vmul.u32.u64.compose %v2796, 3817748708
        %v2798 = vextract.low.u32 %v2797
        %v2799 = vextract.high.u32 %v2797
        %v2800 = vshrl.u32 %v2799, 3
        %v2801 = vmul.u32 %v2800, 9
        %v2802 = vsub.s32 %v2796, %v2801
        %v2803 = vsub.s32 0, %v2802
        %v2804 = vsel %vm2794, %v2803, %v2802
        %vm2805 = vcmp.lt.s32.totalorder %v2469, 0
        %v2806 = vsub.s32 0, %v2469
        %v2807 = vsel %vm2805, %v2806, %v2469
        %v2808 = vmul.u32.u64.compose %v2807, 3817748708
        %v2809 = vextract.low.u32 %v2808
        %v2810 = vextract.high.u32 %v2808
        %v2811 = vshrl.u32 %v2810, 3
        %v2812 = vmul.u32 %v2811, 9
        %v2813 = vsub.s32 %v2807, %v2812
        %v2814 = vsub.s32 0, %v2813
        %v2815 = vsel %vm2805, %v2814, %v2813
        %vm2816 = vcmp.lt.s32.totalorder %v2470, 0
        %v2817 = vsub.s32 0, %v2470
        %v2818 = vsel %vm2816, %v2817, %v2470
        %v2819 = vmul.u32.u64.compose %v2818, 3817748708
        %v2820 = vextract.low.u32 %v2819
        %v2821 = vextract.high.u32 %v2819
        %v2822 = vshrl.u32 %v2821, 3
        %v2823 = vmul.u32 %v2822, 9
        %v2824 = vsub.s32 %v2818, %v2823
        %v2825 = vsub.s32 0, %v2824
        %v2826 = vsel %vm2816, %v2825, %v2824
        %vm2827 = vcmp.lt.s32.totalorder %v2471, 0
        %v2828 = vsub.s32 0, %v2471
        %v2829 = vsel %vm2827, %v2828, %v2471
        %v2830 = vmul.u32.u64.compose %v2829, 3817748708
        %v2831 = vextract.low.u32 %v2830
        %v2832 = vextract.high.u32 %v2830
        %v2833 = vshrl.u32 %v2832, 3
        %v2834 = vmul.u32 %v2833, 9
        %v2835 = vsub.s32 %v2829, %v2834
        %v2836 = vsub.s32 0, %v2835
        %v2837 = vsel %vm2827, %v2836, %v2835
        %vm2838 = vcmp.lt.s32.totalorder %v2472, 0
        %v2839 = vsub.s32 0, %v2472
        %v2840 = vsel %vm2838, %v2839, %v2472
        %v2841 = vmul.u32.u64.compose %v2840, 3817748708
        %v2842 = vextract.low.u32 %v2841
        %v2843 = vextract.high.u32 %v2841
        %v2844 = vshrl.u32 %v2843, 3
        %v2845 = vmul.u32 %v2844, 9
        %v2846 = vsub.s32 %v2840, %v2845
        %v2847 = vsub.s32 0, %v2846
        %v2848 = vsel %vm2838, %v2847, %v2846
        %vm2849 = vcmp.lt.s32.totalorder %v2473, 0
        %v2850 = vsub.s32 0, %v2473
        %v2851 = vsel %vm2849, %v2850, %v2473
        %v2852 = vmul.u32.u64.compose %v2851, 3817748708
        %v2853 = vextract.low.u32 %v2852
        %v2854 = vextract.high.u32 %v2852
        %v2855 = vshrl.u32 %v2854, 3
        %v2856 = vmul.u32 %v2855, 9
        %v2857 = vsub.s32 %v2851, %v2856
        %v2858 = vsub.s32 0, %v2857
        %v2859 = vsel %vm2849, %v2858, %v2857
        %vm2860 = vcmp.lt.s32.totalorder %v2474, 0
        %v2861 = vsub.s32 0, %v2474
        %v2862 = vsel %vm2860, %v2861, %v2474
        %v2863 = vmul.u32.u64.compose %v2862, 3817748708
        %v2864 = vextract.low.u32 %v2863
        %v2865 = vextract.high.u32 %v2863
        %v2866 = vshrl.u32 %v2865, 3
        %v2867 = vmul.u32 %v2866, 9
        %v2868 = vsub.s32 %v2862, %v2867
        %v2869 = vsub.s32 0, %v2868
        %v2870 = vsel %vm2860, %v2869, %v2868
        %vm2871 = vcmp.ne.s32.totalorder %v2485, 0
        %vm2872 = vcmp.ne.s32.totalorder %v2496, 0
        %vm2873 = vcmp.ne.s32.totalorder %v2507, 0
        %vm2874 = vcmp.ne.s32.totalorder %v2518, 0
        %vm2875 = vcmp.ne.s32.totalorder %v2529, 0
        %vm2876 = vcmp.ne.s32.totalorder %v2540, 0
        %vm2877 = vcmp.ne.s32.totalorder %v2551, 0
        %vm2878 = vcmp.ne.s32.totalorder %v2562, 0
        %vm2879 = vcmp.ne.s32.totalorder %v2573, 0
        %vm2880 = vcmp.ne.s32.totalorder %v2584, 0
        %vm2881 = vcmp.ne.s32.totalorder %v2595, 0
        %vm2882 = vcmp.ne.s32.totalorder %v2606, 0
        %vm2883 = vcmp.ne.s32.totalorder %v2617, 0
        %vm2884 = vcmp.ne.s32.totalorder %v2628, 0
        %vm2885 = vcmp.ne.s32.totalorder %v2639, 0
        %vm2886 = vcmp.ne.s32.totalorder %v2650, 0
        %vm2887 = vcmp.ne.s32.totalorder %v2661, 0
        %vm2888 = vcmp.ne.s32.totalorder %v2672, 0
        %vm2889 = vcmp.ne.s32.totalorder %v2683, 0
        %vm2890 = vcmp.ne.s32.totalorder %v2694, 0
        %vm2891 = vcmp.ne.s32.totalorder %v2705, 0
        %vm2892 = vcmp.ne.s32.totalorder %v2716, 0
        %vm2893 = vcmp.ne.s32.totalorder %v2727, 0
        %vm2894 = vcmp.ne.s32.totalorder %v2738, 0
        %vm2895 = vcmp.ne.s32.totalorder %v2749, 0
        %vm2896 = vcmp.ne.s32.totalorder %v2760, 0
        %vm2897 = vcmp.ne.s32.totalorder %v2771, 0
        %vm2898 = vcmp.ne.s32.totalorder %v2782, 0
        %vm2899 = vcmp.ne.s32.totalorder %v2793, 0
        %vm2900 = vcmp.ne.s32.totalorder %v2804, 0
        %vm2901 = vcmp.ne.s32.totalorder %v2815, 0
        %vm2902 = vcmp.ne.s32.totalorder %v2826, 0
        %vm2903 = vcmp.ne.s32.totalorder %v2837, 0
        %vm2904 = vcmp.ne.s32.totalorder %v2848, 0
        %vm2905 = vcmp.ne.s32.totalorder %v2859, 0
        %vm2906 = vcmp.ne.s32.totalorder %v2870, 0
        %vm2907 = vcmp.lt.s32.totalorder %v2485, 0
        %vm2908 = vcmp.lt.s32.totalorder %v2496, 0
        %vm2909 = vcmp.lt.s32.totalorder %v2507, 0
        %vm2910 = vcmp.lt.s32.totalorder %v2518, 0
        %vm2911 = vcmp.lt.s32.totalorder %v2529, 0
        %vm2912 = vcmp.lt.s32.totalorder %v2540, 0
        %vm2913 = vcmp.lt.s32.totalorder %v2551, 0
        %vm2914 = vcmp.lt.s32.totalorder %v2562, 0
        %vm2915 = vcmp.lt.s32.totalorder %v2573, 0
        %vm2916 = vcmp.lt.s32.totalorder %v2584, 0
        %vm2917 = vcmp.lt.s32.totalorder %v2595, 0
        %vm2918 = vcmp.lt.s32.totalorder %v2606, 0
        %vm2919 = vcmp.lt.s32.totalorder %v2617, 0
        %vm2920 = vcmp.lt.s32.totalorder %v2628, 0
        %vm2921 = vcmp.lt.s32.totalorder %v2639, 0
        %vm2922 = vcmp.lt.s32.totalorder %v2650, 0
        %vm2923 = vcmp.lt.s32.totalorder %v2661, 0
        %vm2924 = vcmp.lt.s32.totalorder %v2672, 0
        %vm2925 = vcmp.lt.s32.totalorder %v2683, 0
        %vm2926 = vcmp.lt.s32.totalorder %v2694, 0
        %vm2927 = vcmp.lt.s32.totalorder %v2705, 0
        %vm2928 = vcmp.lt.s32.totalorder %v2716, 0
        %vm2929 = vcmp.lt.s32.totalorder %v2727, 0
        %vm2930 = vcmp.lt.s32.totalorder %v2738, 0
        %vm2931 = vcmp.lt.s32.totalorder %v2749, 0
        %vm2932 = vcmp.lt.s32.totalorder %v2760, 0
        %vm2933 = vcmp.lt.s32.totalorder %v2771, 0
        %vm2934 = vcmp.lt.s32.totalorder %v2782, 0
        %vm2935 = vcmp.lt.s32.totalorder %v2793, 0
        %vm2936 = vcmp.lt.s32.totalorder %v2804, 0
        %vm2937 = vcmp.lt.s32.totalorder %v2815, 0
        %vm2938 = vcmp.lt.s32.totalorder %v2826, 0
        %vm2939 = vcmp.lt.s32.totalorder %v2837, 0
        %vm2940 = vcmp.lt.s32.totalorder %v2848, 0
        %vm2941 = vcmp.lt.s32.totalorder %v2859, 0
        %vm2942 = vcmp.lt.s32.totalorder %v2870, 0
        %vm2943 = vmand %vm2907, %vm2871
        %vm2944 = vmand %vm2908, %vm2872
        %vm2945 = vmand %vm2909, %vm2873
        %vm2946 = vmand %vm2910, %vm2874
        %vm2947 = vmand %vm2911, %vm2875
        %vm2948 = vmand %vm2912, %vm2876
        %vm2949 = vmand %vm2913, %vm2877
        %vm2950 = vmand %vm2914, %vm2878
        %vm2951 = vmand %vm2915, %vm2879
        %vm2952 = vmand %vm2916, %vm2880
        %vm2953 = vmand %vm2917, %vm2881
        %vm2954 = vmand %vm2918, %vm2882
        %vm2955 = vmand %vm2919, %vm2883
        %vm2956 = vmand %vm2920, %vm2884
        %vm2957 = vmand %vm2921, %vm2885
        %vm2958 = vmand %vm2922, %vm2886
        %vm2959 = vmand %vm2923, %vm2887
        %vm2960 = vmand %vm2924, %vm2888
        %vm2961 = vmand %vm2925, %vm2889
        %vm2962 = vmand %vm2926, %vm2890
        %vm2963 = vmand %vm2927, %vm2891
        %vm2964 = vmand %vm2928, %vm2892
        %vm2965 = vmand %vm2929, %vm2893
        %vm2966 = vmand %vm2930, %vm2894
        %vm2967 = vmand %vm2931, %vm2895
        %vm2968 = vmand %vm2932, %vm2896
        %vm2969 = vmand %vm2933, %vm2897
        %vm2970 = vmand %vm2934, %vm2898
        %vm2971 = vmand %vm2935, %vm2899
        %vm2972 = vmand %vm2936, %vm2900
        %vm2973 = vmand %vm2937, %vm2901
        %vm2974 = vmand %vm2938, %vm2902
        %vm2975 = vmand %vm2939, %vm2903
        %vm2976 = vmand %vm2940, %vm2904
        %vm2977 = vmand %vm2941, %vm2905
        %vm2978 = vmand %vm2942, %vm2906
        %v2979 = vadd.s32 %v2485, 9
        %v2980 = vadd.s32 %v2496, 9
        %v2981 = vadd.s32 %v2507, 9
        %v2982 = vadd.s32 %v2518, 9
        %v2983 = vadd.s32 %v2529, 9
        %v2984 = vadd.s32 %v2540, 9
        %v2985 = vadd.s32 %v2551, 9
        %v2986 = vadd.s32 %v2562, 9
        %v2987 = vadd.s32 %v2573, 9
        %v2988 = vadd.s32 %v2584, 9
        %v2989 = vadd.s32 %v2595, 9
        %v2990 = vadd.s32 %v2606, 9
        %v2991 = vadd.s32 %v2617, 9
        %v2992 = vadd.s32 %v2628, 9
        %v2993 = vadd.s32 %v2639, 9
        %v2994 = vadd.s32 %v2650, 9
        %v2995 = vadd.s32 %v2661, 9
        %v2996 = vadd.s32 %v2672, 9
        %v2997 = vadd.s32 %v2683, 9
        %v2998 = vadd.s32 %v2694, 9
        %v2999 = vadd.s32 %v2705, 9
        %v3000 = vadd.s32 %v2716, 9
        %v3001 = vadd.s32 %v2727, 9
        %v3002 = vadd.s32 %v2738, 9
        %v3003 = vadd.s32 %v2749, 9
        %v3004 = vadd.s32 %v2760, 9
        %v3005 = vadd.s32 %v2771, 9
        %v3006 = vadd.s32 %v2782, 9
        %v3007 = vadd.s32 %v2793, 9
        %v3008 = vadd.s32 %v2804, 9
        %v3009 = vadd.s32 %v2815, 9
        %v3010 = vadd.s32 %v2826, 9
        %v3011 = vadd.s32 %v2837, 9
        %v3012 = vadd.s32 %v2848, 9
        %v3013 = vadd.s32 %v2859, 9
        %v3014 = vadd.s32 %v2870, 9
        %v3015 = vsel %vm2943, %v2979, %v2485
        %v3016 = vsel %vm2944, %v2980, %v2496
        %v3017 = vsel %vm2945, %v2981, %v2507
        %v3018 = vsel %vm2946, %v2982, %v2518
        %v3019 = vsel %vm2947, %v2983, %v2529
        %v3020 = vsel %vm2948, %v2984, %v2540
        %v3021 = vsel %vm2949, %v2985, %v2551
        %v3022 = vsel %vm2950, %v2986, %v2562
        %v3023 = vsel %vm2951, %v2987, %v2573
        %v3024 = vsel %vm2952, %v2988, %v2584
        %v3025 = vsel %vm2953, %v2989, %v2595
        %v3026 = vsel %vm2954, %v2990, %v2606
        %v3027 = vsel %vm2955, %v2991, %v2617
        %v3028 = vsel %vm2956, %v2992, %v2628
        %v3029 = vsel %vm2957, %v2993, %v2639
        %v3030 = vsel %vm2958, %v2994, %v2650
        %v3031 = vsel %vm2959, %v2995, %v2661
        %v3032 = vsel %vm2960, %v2996, %v2672
        %v3033 = vsel %vm2961, %v2997, %v2683
        %v3034 = vsel %vm2962, %v2998, %v2694
        %v3035 = vsel %vm2963, %v2999, %v2705
        %v3036 = vsel %vm2964, %v3000, %v2716
        %v3037 = vsel %vm2965, %v3001, %v2727
        %v3038 = vsel %vm2966, %v3002, %v2738
        %v3039 = vsel %vm2967, %v3003, %v2749
        %v3040 = vsel %vm2968, %v3004, %v2760
        %v3041 = vsel %vm2969, %v3005, %v2771
        %v3042 = vsel %vm2970, %v3006, %v2782
        %v3043 = vsel %vm2971, %v3007, %v2793
        %v3044 = vsel %vm2972, %v3008, %v2804
        %v3045 = vsel %vm2973, %v3009, %v2815
        %v3046 = vsel %vm2974, %v3010, %v2826
        %v3047 = vsel %vm2975, %v3011, %v2837
        %v3048 = vsel %vm2976, %v3012, %v2848
        %v3049 = vsel %vm2977, %v3013, %v2859
        %v3050 = vsel %vm2978, %v3014, %v2870
        %vm3051 = vcmp.lt.s32.totalorder %v3015, 8
        %vm3052 = vcmp.lt.s32.totalorder %v3016, 8
        %vm3053 = vcmp.lt.s32.totalorder %v3017, 8
        %vm3054 = vcmp.lt.s32.totalorder %v3018, 8
        %vm3055 = vcmp.lt.s32.totalorder %v3019, 8
        %vm3056 = vcmp.lt.s32.totalorder %v3020, 8
        %vm3057 = vcmp.lt.s32.totalorder %v3021, 8
        %vm3058 = vcmp.lt.s32.totalorder %v3022, 8
        %vm3059 = vcmp.lt.s32.totalorder %v3023, 8
        %vm3060 = vcmp.lt.s32.totalorder %v3024, 8
        %vm3061 = vcmp.lt.s32.totalorder %v3025, 8
        %vm3062 = vcmp.lt.s32.totalorder %v3026, 8
        %vm3063 = vcmp.lt.s32.totalorder %v3027, 8
        %vm3064 = vcmp.lt.s32.totalorder %v3028, 8
        %vm3065 = vcmp.lt.s32.totalorder %v3029, 8
        %vm3066 = vcmp.lt.s32.totalorder %v3030, 8
        %vm3067 = vcmp.lt.s32.totalorder %v3031, 8
        %vm3068 = vcmp.lt.s32.totalorder %v3032, 8
        %vm3069 = vcmp.lt.s32.totalorder %v3033, 8
        %vm3070 = vcmp.lt.s32.totalorder %v3034, 8
        %vm3071 = vcmp.lt.s32.totalorder %v3035, 8
        %vm3072 = vcmp.lt.s32.totalorder %v3036, 8
        %vm3073 = vcmp.lt.s32.totalorder %v3037, 8
        %vm3074 = vcmp.lt.s32.totalorder %v3038, 8
        %vm3075 = vcmp.lt.s32.totalorder %v3039, 8
        %vm3076 = vcmp.lt.s32.totalorder %v3040, 8
        %vm3077 = vcmp.lt.s32.totalorder %v3041, 8
        %vm3078 = vcmp.lt.s32.totalorder %v3042, 8
        %vm3079 = vcmp.lt.s32.totalorder %v3043, 8
        %vm3080 = vcmp.lt.s32.totalorder %v3044, 8
        %vm3081 = vcmp.lt.s32.totalorder %v3045, 8
        %vm3082 = vcmp.lt.s32.totalorder %v3046, 8
        %vm3083 = vcmp.lt.s32.totalorder %v3047, 8
        %vm3084 = vcmp.lt.s32.totalorder %v3048, 8
        %vm3085 = vcmp.lt.s32.totalorder %v3049, 8
        %vm3086 = vcmp.lt.s32.totalorder %v3050, 8
        %v3087 = vsel %vm3051, 1, 0
        %v3088 = vsel %vm3052, 1, 0
        %v3089 = vsel %vm3053, 1, 0
        %v3090 = vsel %vm3054, 1, 0
        %v3091 = vsel %vm3055, 1, 0
        %v3092 = vsel %vm3056, 1, 0
        %v3093 = vsel %vm3057, 1, 0
        %v3094 = vsel %vm3058, 1, 0
        %v3095 = vsel %vm3059, 1, 0
        %v3096 = vsel %vm3060, 1, 0
        %v3097 = vsel %vm3061, 1, 0
        %v3098 = vsel %vm3062, 1, 0
        %v3099 = vsel %vm3063, 1, 0
        %v3100 = vsel %vm3064, 1, 0
        %v3101 = vsel %vm3065, 1, 0
        %v3102 = vsel %vm3066, 1, 0
        %v3103 = vsel %vm3067, 1, 0
        %v3104 = vsel %vm3068, 1, 0
        %v3105 = vsel %vm3069, 1, 0
        %v3106 = vsel %vm3070, 1, 0
        %v3107 = vsel %vm3071, 1, 0
        %v3108 = vsel %vm3072, 1, 0
        %v3109 = vsel %vm3073, 1, 0
        %v3110 = vsel %vm3074, 1, 0
        %v3111 = vsel %vm3075, 1, 0
        %v3112 = vsel %vm3076, 1, 0
        %v3113 = vsel %vm3077, 1, 0
        %v3114 = vsel %vm3078, 1, 0
        %v3115 = vsel %vm3079, 1, 0
        %v3116 = vsel %vm3080, 1, 0
        %v3117 = vsel %vm3081, 1, 0
        %v3118 = vsel %vm3082, 1, 0
        %v3119 = vsel %vm3083, 1, 0
        %v3120 = vsel %vm3084, 1, 0
        %v3121 = vsel %vm3085, 1, 0
        %v3122 = vsel %vm3086, 1, 0
        %vm3123 = vcmp.eq.s32.totalorder %v3087, 1
        %vm3124 = vcmp.eq.s32.totalorder %v3088, 1
        %vm3125 = vcmp.eq.s32.totalorder %v3089, 1
        %vm3126 = vcmp.eq.s32.totalorder %v3090, 1
        %vm3127 = vcmp.eq.s32.totalorder %v3091, 1
        %vm3128 = vcmp.eq.s32.totalorder %v3092, 1
        %vm3129 = vcmp.eq.s32.totalorder %v3093, 1
        %vm3130 = vcmp.eq.s32.totalorder %v3094, 1
        %vm3131 = vcmp.eq.s32.totalorder %v3095, 1
        %vm3132 = vcmp.eq.s32.totalorder %v3096, 1
        %vm3133 = vcmp.eq.s32.totalorder %v3097, 1
        %vm3134 = vcmp.eq.s32.totalorder %v3098, 1
        %vm3135 = vcmp.eq.s32.totalorder %v3099, 1
        %vm3136 = vcmp.eq.s32.totalorder %v3100, 1
        %vm3137 = vcmp.eq.s32.totalorder %v3101, 1
        %vm3138 = vcmp.eq.s32.totalorder %v3102, 1
        %vm3139 = vcmp.eq.s32.totalorder %v3103, 1
        %vm3140 = vcmp.eq.s32.totalorder %v3104, 1
        %vm3141 = vcmp.eq.s32.totalorder %v3105, 1
        %vm3142 = vcmp.eq.s32.totalorder %v3106, 1
        %vm3143 = vcmp.eq.s32.totalorder %v3107, 1
        %vm3144 = vcmp.eq.s32.totalorder %v3108, 1
        %vm3145 = vcmp.eq.s32.totalorder %v3109, 1
        %vm3146 = vcmp.eq.s32.totalorder %v3110, 1
        %vm3147 = vcmp.eq.s32.totalorder %v3111, 1
        %vm3148 = vcmp.eq.s32.totalorder %v3112, 1
        %vm3149 = vcmp.eq.s32.totalorder %v3113, 1
        %vm3150 = vcmp.eq.s32.totalorder %v3114, 1
        %vm3151 = vcmp.eq.s32.totalorder %v3115, 1
        %vm3152 = vcmp.eq.s32.totalorder %v3116, 1
        %vm3153 = vcmp.eq.s32.totalorder %v3117, 1
        %vm3154 = vcmp.eq.s32.totalorder %v3118, 1
        %vm3155 = vcmp.eq.s32.totalorder %v3119, 1
        %vm3156 = vcmp.eq.s32.totalorder %v3120, 1
        %vm3157 = vcmp.eq.s32.totalorder %v3121, 1
        %vm3158 = vcmp.eq.s32.totalorder %v3122, 1
        %v3159 = vsel %vm3123, %v2296, 0.0
        %v3160 = vsel %vm3124, %v2299, 0.0
        %v3161 = vsel %vm3125, %v2304, 0.0
        %v3162 = vsel %vm3126, %v2307, 0.0
        %v3163 = vsel %vm3127, %v2312, 0.0
        %v3164 = vsel %vm3128, %v2315, 0.0
        %v3165 = vsel %vm3129, %v2320, 0.0
        %v3166 = vsel %vm3130, %v2323, 0.0
        %v3167 = vsel %vm3131, %v2328, 0.0
        %v3168 = vsel %vm3132, %v2331, 0.0
        %v3169 = vsel %vm3133, %v2336, 0.0
        %v3170 = vsel %vm3134, %v2339, 0.0
        %v3171 = vsel %vm3135, %v2344, 0.0
        %v3172 = vsel %vm3136, %v2347, 0.0
        %v3173 = vsel %vm3137, %v2352, 0.0
        %v3174 = vsel %vm3138, %v2355, 0.0
        %v3175 = vsel %vm3139, %v2360, 0.0
        %v3176 = vsel %vm3140, %v2363, 0.0
        %v3177 = vsel %vm3141, %v2368, 0.0
        %v3178 = vsel %vm3142, %v2371, 0.0
        %v3179 = vsel %vm3143, %v2376, 0.0
        %v3180 = vsel %vm3144, %v2379, 0.0
        %v3181 = vsel %vm3145, %v2384, 0.0
        %v3182 = vsel %vm3146, %v2387, 0.0
        %v3183 = vsel %vm3147, %v2392, 0.0
        %v3184 = vsel %vm3148, %v2395, 0.0
        %v3185 = vsel %vm3149, %v2400, 0.0
        %v3186 = vsel %vm3150, %v2403, 0.0
        %v3187 = vsel %vm3151, %v2408, 0.0
        %v3188 = vsel %vm3152, %v2411, 0.0
        %v3189 = vsel %vm3153, %v2416, 0.0
        %v3190 = vsel %vm3154, %v2419, 0.0
        %v3191 = vsel %vm3155, %v2424, 0.0
        %v3192 = vsel %vm3156, %v2427, 0.0
        %v3193 = vsel %vm3157, %v2432, 0.0
        %v3194 = vsel %vm3158, %v2435, 0.0
        %v3195 = vadd.f32 %v3159, %v3160
        %v3196 = vadd.f32 %v3195, %v3161
        %v3197 = vadd.f32 %v3196, %v3162
        %v3198 = vadd.f32 %v3197, %v3163
        %v3199 = vadd.f32 %v3198, %v3164
        %v3200 = vadd.f32 %v3199, %v3165
        %v3201 = vadd.f32 %v3200, %v3166
        %v3202 = vadd.f32 %v3201, %v3167
        %v3203 = vadd.f32 %v3202, %v3168
        %v3204 = vadd.f32 %v3203, %v3169
        %v3205 = vadd.f32 %v3204, %v3170
        %v3206 = vadd.f32 %v3205, %v3171
        %v3207 = vadd.f32 %v3206, %v3172
        %v3208 = vadd.f32 %v3207, %v3173
        %v3209 = vadd.f32 %v3208, %v3174
        %v3210 = vadd.f32 %v3209, %v3175
        %v3211 = vadd.f32 %v3210, %v3176
        %v3212 = vadd.f32 %v3211, %v3177
        %v3213 = vadd.f32 %v3212, %v3178
        %v3214 = vadd.f32 %v3213, %v3179
        %v3215 = vadd.f32 %v3214, %v3180
        %v3216 = vadd.f32 %v3215, %v3181
        %v3217 = vadd.f32 %v3216, %v3182
        %v3218 = vadd.f32 %v3217, %v3183
        %v3219 = vadd.f32 %v3218, %v3184
        %v3220 = vadd.f32 %v3219, %v3185
        %v3221 = vadd.f32 %v3220, %v3186
        %v3222 = vadd.f32 %v3221, %v3187
        %v3223 = vadd.f32 %v3222, %v3188
        %v3224 = vadd.f32 %v3223, %v3189
        %v3225 = vadd.f32 %v3224, %v3190
        %v3226 = vadd.f32 %v3225, %v3191
        %v3227 = vadd.f32 %v3226, %v3192
        %v3228 = vadd.f32 %v3227, %v3193
        %v3229 = vadd.f32 %v3228, %v3194
        %v3230 = vrot.slane %v3229, 4
        %v3231 = vadd.f32 %v3229, %v3230
        %v3232 = vrot.slane %v3231, 2
        %v3233 = vadd.f32 %v3231, %v3232
        %v3234 = vrot.slane %v3233, 1
        %v3235 = vadd.f32 %v3233, %v3234
        %v3236 = vmul.f32 %v3159, %v3159
        %v3237 = vmul.f32 %v3160, %v3160
        %v3238 = vmul.f32 %v3161, %v3161
        %v3239 = vmul.f32 %v3162, %v3162
        %v3240 = vmul.f32 %v3163, %v3163
        %v3241 = vmul.f32 %v3164, %v3164
        %v3242 = vmul.f32 %v3165, %v3165
        %v3243 = vmul.f32 %v3166, %v3166
        %v3244 = vmul.f32 %v3167, %v3167
        %v3245 = vmul.f32 %v3168, %v3168
        %v3246 = vmul.f32 %v3169, %v3169
        %v3247 = vmul.f32 %v3170, %v3170
        %v3248 = vmul.f32 %v3171, %v3171
        %v3249 = vmul.f32 %v3172, %v3172
        %v3250 = vmul.f32 %v3173, %v3173
        %v3251 = vmul.f32 %v3174, %v3174
        %v3252 = vmul.f32 %v3175, %v3175
        %v3253 = vmul.f32 %v3176, %v3176
        %v3254 = vmul.f32 %v3177, %v3177
        %v3255 = vmul.f32 %v3178, %v3178
        %v3256 = vmul.f32 %v3179, %v3179
        %v3257 = vmul.f32 %v3180, %v3180
        %v3258 = vmul.f32 %v3181, %v3181
        %v3259 = vmul.f32 %v3182, %v3182
        %v3260 = vmul.f32 %v3183, %v3183
        %v3261 = vmul.f32 %v3184, %v3184
        %v3262 = vmul.f32 %v3185, %v3185
        %v3263 = vmul.f32 %v3186, %v3186
        %v3264 = vmul.f32 %v3187, %v3187
        %v3265 = vmul.f32 %v3188, %v3188
        %v3266 = vmul.f32 %v3189, %v3189
        %v3267 = vmul.f32 %v3190, %v3190
        %v3268 = vmul.f32 %v3191, %v3191
        %v3269 = vmul.f32 %v3192, %v3192
        %v3270 = vmul.f32 %v3193, %v3193
        %v3271 = vmul.f32 %v3194, %v3194
        %v3272 = vadd.f32 %v3236, %v3237
        %v3273 = vadd.f32 %v3272, %v3238
        %v3274 = vadd.f32 %v3273, %v3239
        %v3275 = vadd.f32 %v3274, %v3240
        %v3276 = vadd.f32 %v3275, %v3241
        %v3277 = vadd.f32 %v3276, %v3242
        %v3278 = vadd.f32 %v3277, %v3243
        %v3279 = vadd.f32 %v3278, %v3244
        %v3280 = vadd.f32 %v3279, %v3245
        %v3281 = vadd.f32 %v3280, %v3246
        %v3282 = vadd.f32 %v3281, %v3247
        %v3283 = vadd.f32 %v3282, %v3248
        %v3284 = vadd.f32 %v3283, %v3249
        %v3285 = vadd.f32 %v3284, %v3250
        %v3286 = vadd.f32 %v3285, %v3251
        %v3287 = vadd.f32 %v3286, %v3252
        %v3288 = vadd.f32 %v3287, %v3253
        %v3289 = vadd.f32 %v3288, %v3254
        %v3290 = vadd.f32 %v3289, %v3255
        %v3291 = vadd.f32 %v3290, %v3256
        %v3292 = vadd.f32 %v3291, %v3257
        %v3293 = vadd.f32 %v3292, %v3258
        %v3294 = vadd.f32 %v3293, %v3259
        %v3295 = vadd.f32 %v3294, %v3260
        %v3296 = vadd.f32 %v3295, %v3261
        %v3297 = vadd.f32 %v3296, %v3262
        %v3298 = vadd.f32 %v3297, %v3263
        %v3299 = vadd.f32 %v3298, %v3264
        %v3300 = vadd.f32 %v3299, %v3265
        %v3301 = vadd.f32 %v3300, %v3266
        %v3302 = vadd.f32 %v3301, %v3267
        %v3303 = vadd.f32 %v3302, %v3268
        %v3304 = vadd.f32 %v3303, %v3269
        %v3305 = vadd.f32 %v3304, %v3270
        %v3306 = vadd.f32 %v3305, %v3271
        %v3307 = vrot.slane %v3306, 4
        %v3308 = vadd.f32 %v3306, %v3307
        %v3309 = vrot.slane %v3308, 2
        %v3310 = vadd.f32 %v3308, %v3309
        %v3311 = vrot.slane %v3310, 1
        %v3312 = vadd.f32 %v3310, %v3311
        %vm3313 = vcmask 1040384
        %v3314 = vsel %vm3313, %v3235, %v3312
        %p3315 = scmp.eq.s32.totalorder %s18, 0
        // Predicated region
        $region37: #{tpu_custom_call.1} parent=27 // pred_check
          %p3316 = pneg %p3315
        $region38: #{tpu_custom_call.1} parent=27 // pred_check_branch
          %3318 = sbr.rel (%p3316) target = $region40
        $region39: #{tpu_custom_call.1} parent=27 // pred_region
          %3319 = vst [vmem:[#allocation7] sm:$0x3] 0.0
        $region40: #{tpu_custom_call.1} parent=27 // pred_fallthru
          _
        %v3320 = vld [vmem:[#allocation7] sm:$0x3]
        %v3321 = vadd.f32 %v3320, %v3314
        %3322 = vst [vmem:[#allocation7] sm:$0x3] %v3321
        // Predicated region
        $region41: #{tpu_custom_call.1} parent=27 // pred_check
          %p3323 = pneg %p78
        $region42: #{tpu_custom_call.1} parent=27 // pred_check_branch
          %3325 = sbr.rel (%p3323) target = $region44
        $region43: #{tpu_custom_call.1} parent=27 // pred_region
          %s3327 = ssub.s32 32, 32
          %3328 = vsyncadd [#allocation4], %s3327
          %s3330 = sshll.u32 [#allocation7], 4
          %s3331 = int_to_ptr.vmem [resolvable:$true] %s3330
          %3333 = dma.vmem_to_hbm [thread:$0]  %s3331, 32, %s2, [#allocation4]
        $region44: #{tpu_custom_call.1} parent=27 // pred_fallthru
          _
        // Predicated region
        $region45: #{tpu_custom_call.1} parent=27 // pred_check
          %p3334 = pneg %p78
        $region46: #{tpu_custom_call.1} parent=27 // pred_check_branch
          %3336 = sbr.rel (%p3334) target = $region48
        $region47: #{tpu_custom_call.1} parent=27 // pred_region
          %3337 = dma.done [#allocation4], 32
        $region48: #{tpu_custom_call.1} parent=27 // pred_fallthru
          _
      $region28: #{tpu_custom_call.1} parent=5 // pred_fallthru
        _
      %p3338 = scmp.le.s32.totalorder 2, %s13
      // Predicated region
      $region49: #{tpu_custom_call.1} parent=5 // pred_check
        %p3339 = pneg %p3338
      $region50: #{tpu_custom_call.1} parent=5 // pred_check_branch
        %3341 = sbr.rel (%p3339) target = $region52
      $region51: #{tpu_custom_call.1} parent=5 // pred_region
        %s3342 = ssub.s32 %s13, 2
      $region52: #{tpu_custom_call.1} parent=5 // pred_fallthru
        _
    $region6: #{tpu_custom_call.1} parent=1 // loop_footer
      %s17 = sadd.s32 1, %s13
    $region7: #{tpu_custom_call.1} parent=1 // loop_footer_branch
      %12 = sbr.rel target = $region3
    $region8: #{tpu_custom_call.1} parent=1 // loop_exit
      _
    %3343 = vsyncpa [#allocation3], 1
    %s3344 = scalar_lea.sflag [#allocation3], 1
    %3345 = vsyncpa %s3344, 1
    %3346 = vsyncpa [#allocation6], 1
    %3347 = vsyncpa [#allocation4], 1
    %s3348 = scalar_lea.sflag [#allocation4], 1
    %3349 = vsyncpa %s3348, 1

</llo_original>
